<compile_context>
chip_gen: v5e
topology: v5e:2x2
jax: 0.10.0
libtpu: 0.0.40
codegen_flags: <defaults>
</compile_context>

<pallas_src>
import math

import jax
import jax.numpy as jnp
from jax.experimental import pallas as pl
from jax.experimental.pallas import tpu as pltpu


# ----------------------------------------------------------------------------
# Fused CDResBlock Pallas kernel
# ----------------------------------------------------------------------------
def _make_cdres_kernel(H, W, Cin, eps):
    HW = H * W

    def im2col3x3(a):
        # a: (H+2, W+2, Cin) padded map (bf16) -> (H*W, 9*Cin), tap-major along K.
        # 9 static slices + reshapes and ONE lane concat, feeding ONE MXU matmul.
        parts = [a[kh:kh + H, kw:kw + W, :].reshape(HW, Cin)
                 for kh in range(3) for kw in range(3)]
        return jnp.concatenate(parts, axis=-1)

    def kernel(xpad_ref, tb1_ref, g1_ref, b1_ref, w1_ref,
               tb2_ref, g2_ref, b2_ref,
               wcmp_ref, bcmp_ref, wsc_ref, pool_ref, pcolsx_ref, o_ref):
        f32 = jnp.float32
        bf16 = jnp.bfloat16
        xpad = xpad_ref[0].astype(f32)               # (H+2, W+2, Cin), reflect-padded

        # ---- cnorm1 (CBINorm2d) + ReLU -------------------------------------
        # Instance-norm statistics over the interior (= original HxW pixels);
        # applying the pixel-wise norm/affine/ReLU to the padded map equals
        # padding the normalized map (reflection only replicates pixels).
        x_in = xpad[1:H + 1, 1:W + 1, :]
        mean1 = jnp.mean(x_in, axis=(0, 1), keepdims=True)
        var1 = jnp.mean((x_in - mean1) ** 2, axis=(0, 1), keepdims=True)
        xn = (xpad - mean1) * jax.lax.rsqrt(var1 + eps)
        h1p = (xn + tb1_ref[0, 0]) * g1_ref[0] + b1_ref[0]
        h1p = jnp.maximum(h1p, 0.0).astype(bf16)     # cast BEFORE im2col (feedback #1)

        # ---- conv1: 3x3, bias=False (bf16 im2col slab + single MXU matmul) --
        cols1 = im2col3x3(h1p)                                        # (HW, 9*Cin) bf16
        c1 = jnp.dot(cols1, w1_ref[...], preferred_element_type=f32)  # (HW, Cin) f32

        # ---- cnorm2 + ReLU on the flattened (HW, Cin) map -------------------
        mean2 = jnp.mean(c1, axis=0, keepdims=True)
        var2 = jnp.mean((c1 - mean2) ** 2, axis=0, keepdims=True)
        cn = (c1 - mean2) * jax.lax.rsqrt(var2 + eps)
        h3 = jnp.maximum((cn + tb2_ref[0, 0]) * g2_ref[0] + b2_ref[0], 0.0)

        # ---- cmp: AvgPool2d(2) as a bf16 pooling matmul, then 1x1 conv + bias
        pooled = jnp.dot(pool_ref[...], h3.astype(bf16),
                         preferred_element_type=f32)                  # (H2*W2, Cin)
        out_main = jnp.dot(pooled.astype(bf16), wcmp_ref[...],
                           preferred_element_type=f32) + bcmp_ref[0]  # (H2*W2, Coutp)

        # ---- shortcut: pooled im2col (built + pooled in wrapper) @ wsc ------
        # pool @ (im2col(x) @ Wsc) == (pool @ im2col(x)) @ Wsc, so the whole
        # shortcut path collapses to one small bf16 matmul here.
        out_sc = jnp.dot(pcolsx_ref[0], wsc_ref[...],
                         preferred_element_type=f32)                  # (H2*W2, Coutp)

        o_ref[0] = (out_main + out_sc).astype(o_ref.dtype)

    return kernel


def _pool_matrix(H, W):
    """Constant (H/2*W/2, H*W) bf16 matrix implementing AvgPool2d(k=2, s=2)."""
    H2, W2 = H // 2, W // 2
    p = jnp.arange(H2 * W2)
    m = jnp.arange(H * W)
    ph, pw = p // W2, p % W2
    h, w = m // W, m % W
    mask = (h[None, :] // 2 == ph[:, None]) & (w[None, :] // 2 == pw[:, None])
    # 0.0 and 0.25 are exact in bf16 -> bf16 pool matmul is lossless.
    return jnp.where(mask, 0.25, 0.0).astype(jnp.bfloat16)


# ----------------------------------------------------------------------------
# Wrapper (NCHW in / NCHW out, like the PyTorch module)
# ----------------------------------------------------------------------------
def cdres_block_forward(params, x_nchw, d):
    """CDResBlock.forward([x, d]) -> [out, d]."""
    N, Cin, H, W = x_nchw.shape
    Cout = params["cmp_b"].shape[0]
    H2, W2 = H // 2, W // 2
    Coutp = ((Cout + 127) // 128) * 128          # lane-dense padded output channels
    pad_c = Coutp - Cout

    x = jnp.transpose(x_nchw, (0, 2, 3, 1)).astype(jnp.float32)        # NHWC
    # one reflect pad of the raw input, shared by conv1's normalized map and by
    # the shortcut path.
    xpad = jnp.pad(x, ((0, 0), (1, 1), (1, 1), (0, 0)), mode="reflect")

    # shortcut im2col built once in the wrapper, with the AvgPool folded in
    # (it only depends on the raw input): (N, H2*W2, 9*Cin), bf16.
    cols = jnp.concatenate(
        [xpad[:, kh:kh + H, kw:kw + W, :] for kh in range(3) for kw in range(3)],
        axis=-1)                                                       # (N, H, W, 9*Cin)
    pcolsx = cols.reshape(N, H2, 2, W2, 2, 9 * Cin).mean(axis=(2, 4))
    pcolsx = pcolsx.reshape(N, H2 * W2, 9 * Cin).astype(jnp.bfloat16)

    # CBINorm conditional biases: tanh(Linear(d)), tiny -> glue
    tb1 = jnp.tanh(d @ params["n1"]["w"] + params["n1"]["b"])[:, None, :]  # (N,1,Cin)
    tb2 = jnp.tanh(d @ params["n2"]["w"] + params["n2"]["b"])[:, None, :]

    # weights pre-flattened to im2col layout, pre-cast to bf16, output channels
    # zero-padded to a multiple of 128 so the output stores are lane-dense.
    w1 = params["conv1_w"].reshape(9 * Cin, Cin).astype(jnp.bfloat16)
    wsc = jnp.pad(params["sc_w"].reshape(9 * Cin, Cout),
                  ((0, 0), (0, pad_c))).astype(jnp.bfloat16)
    wcmp = jnp.pad(params["cmp_w"].reshape(Cin, Cout),
                   ((0, 0), (0, pad_c))).astype(jnp.bfloat16)
    bcmp = jnp.pad(params["cmp_b"], (0, pad_c)).reshape(1, Coutp).astype(jnp.float32)
    g1 = params["n1"]["gamma"].reshape(1, Cin).astype(jnp.float32)
    b1 = params["n1"]["beta"].reshape(1, Cin).astype(jnp.float32)
    g2 = params["n2"]["gamma"].reshape(1, Cin).astype(jnp.float32)
    b2 = params["n2"]["beta"].reshape(1, Cin).astype(jnp.float32)
    pool = _pool_matrix(H, W)
    xpad_bf = xpad.astype(jnp.bfloat16)          # halves the per-sample activation DMA

    kernel = _make_cdres_kernel(H, W, Cin, eps=1e-5)
    out2d = pl.pallas_call(
        kernel,
        out_shape=jax.ShapeDtypeStruct((N, H2 * W2, Coutp), jnp.float32),
        grid=(N,),
        in_specs=[
            pl.BlockSpec((1, H + 2, W + 2, Cin), lambda n: (n, 0, 0, 0)),   # xpad (bf16)
            pl.BlockSpec((1, 1, Cin), lambda n: (n, 0, 0)),                 # tb1
            pl.BlockSpec((1, Cin), lambda n: (0, 0)),                       # gamma1
            pl.BlockSpec((1, Cin), lambda n: (0, 0)),                       # beta1
            pl.BlockSpec((9 * Cin, Cin), lambda n: (0, 0)),                 # w1
            pl.BlockSpec((1, 1, Cin), lambda n: (n, 0, 0)),                 # tb2
            pl.BlockSpec((1, Cin), lambda n: (0, 0)),                       # gamma2
            pl.BlockSpec((1, Cin), lambda n: (0, 0)),                       # beta2
            pl.BlockSpec((Cin, Coutp), lambda n: (0, 0)),                   # wcmp (padded)
            pl.BlockSpec((1, Coutp), lambda n: (0, 0)),                     # bcmp (padded)
            pl.BlockSpec((9 * Cin, Coutp), lambda n: (0, 0)),               # wsc (padded)
            pl.BlockSpec((H2 * W2, H * W), lambda n: (0, 0)),               # pool (bf16)
            pl.BlockSpec((1, H2 * W2, 9 * Cin), lambda n: (n, 0, 0)),       # pooled im2col(x)
        ],
        out_specs=pl.BlockSpec((1, H2 * W2, Coutp), lambda n: (n, 0, 0)),
        compiler_params=pltpu.CompilerParams(
            dimension_semantics=("parallel",),
            vmem_limit_bytes=16 * 1024 * 1024,
        ),
    )(xpad_bf, tb1, g1, b1, w1, tb2, g2, b2, wcmp, bcmp, wsc, pool, pcolsx)

    out = out2d[:, :, :Cout].reshape(N, H2, W2, Cout)
    out = jnp.transpose(out, (0, 3, 1, 2))                                  # NCHW
    return [out, d]


# ----------------------------------------------------------------------------
# Parameter setup (spectral norm folded into the weights at init)
# ----------------------------------------------------------------------------
def spectral_normalize(w, out_axis, n_iter=30):
    mat = jnp.moveaxis(w, out_axis, 0).reshape(w.shape[out_axis], -1)
    u = jnp.ones((mat.shape[0],), jnp.float32) / math.sqrt(mat.shape[0])
    v = jnp.ones((mat.shape[1],), jnp.float32) / math.sqrt(mat.shape[1])
    for _ in range(n_iter):
        v = mat.T @ u
        v = v / (jnp.linalg.norm(v) + 1e-12)
        u = mat @ v
        u = u / (jnp.linalg.norm(u) + 1e-12)
    sigma = u @ (mat @ v)
    return w / sigma


def init_params(key, inplanes, outplanes, nc):
    ks = iter(jax.random.split(key, 16))

    def conv_w(cin, cout, k):
        w = jax.random.normal(next(ks), (k, k, cin, cout), jnp.float32)
        w = w / math.sqrt(cin * k * k)
        return spectral_normalize(w, out_axis=3)

    def cbin(c):
        return dict(
            gamma=jnp.ones((c,), jnp.float32),
            beta=jnp.zeros((c,), jnp.float32),
            w=jax.random.normal(next(ks), (nc, c), jnp.float32) / math.sqrt(nc),
            b=jax.random.normal(next(ks), (c,), jnp.float32) * 0.1,
        )

    return dict(
        n1=cbin(inplanes),
        conv1_w=conv_w(inplanes, inplanes, 3),        # conv3x3, bias=False
        n2=cbin(inplanes),
        cmp_w=conv_w(inplanes, outplanes, 1),         # meanpoolConv 1x1, bias=True
        cmp_b=jax.random.normal(next(ks), (outplanes,), jnp.float32) * 0.05,
        sc_w=conv_w(inplanes, outplanes, 3),          # convMeanpool 3x3, bias=False
    )


# ----------------------------------------------------------------------------
# Pure-JAX f32 reference (validation only; bf16 matmuls in kernel -> loose tol)
# ----------------------------------------------------------------------------
def cdres_block_reference(params, x_nchw, d):
    x = jnp.transpose(x_nchw, (0, 2, 3, 1)).astype(jnp.float32)
    hi = jax.lax.Precision.HIGHEST

    def cbin_relu(h, p, tb):
        mean = jnp.mean(h, axis=(1, 2), keepdims=True)
        var = jnp.mean((h - mean) ** 2, axis=(1, 2), keepdims=True)
        hn = (h - mean) * jax.lax.rsqrt(var + 1e-5)
        return jnp.maximum((hn + tb[:, None, None, :]) * p["gamma"] + p["beta"], 0.0)

    def conv(h, w, pad):
        if pad:
            h = jnp.pad(h, ((0, 0), (pad, pad), (pad, pad), (0, 0)), mode="reflect")
        return jax.lax.conv_general_dilated(
            h, w, (1, 1), "VALID",
            dimension_numbers=("NHWC", "HWIO", "NHWC"), precision=hi)

    def avgpool(h):
        n, hh, ww, c = h.shape
        return h.reshape(n, hh // 2, 2, ww // 2, 2, c).mean(axis=(2, 4))

    tb1 = jnp.tanh(d @ params["n1"]["w"] + params["n1"]["b"])
    tb2 = jnp.tanh(d @ params["n2"]["w"] + params["n2"]["b"])

    h = cbin_relu(x, params["n1"], tb1)
    h = conv(h, params["conv1_w"], 1)
    h = cbin_relu(h, params["n2"], tb2)
    out = conv(avgpool(h), params["cmp_w"], 0) + params["cmp_b"]
    out = out + avgpool(conv(x, params["sc_w"], 1))
    return jnp.transpose(out, (0, 3, 1, 2))


# ----------------------------------------------------------------------------
if __name__ == "__main__":
    N, IN_PLANES, OUT_PLANES, H, W, NC = 2, 32, 64, 16, 16, 8

    key = jax.random.PRNGKey(0)
    kx, kd, kp = jax.random.split(key, 3)
    x = jax.random.normal(kx, (N, IN_PLANES, H, W), jnp.float32)   # NCHW like PyTorch
    d = jax.random.normal(kd, (N, NC), jnp.float32)                # condition code
    params = init_params(kp, IN_PLANES, OUT_PLANES, NC)

    out, d_out = cdres_block_forward(params, x, d)
    out = jax.block_until_ready(out)

    assert out.shape == (N, OUT_PLANES, H // 2, W // 2), out.shape
    assert d_out.shape == d.shape
    assert bool(jnp.all(jnp.isfinite(out)))

    ref = cdres_block_reference(params, x, d)
    err = float(jnp.max(jnp.abs(out - ref)))
    scale = float(jnp.max(jnp.abs(ref))) + 1e-6
    assert err <= 0.1 * scale + 0.05, ("mismatch vs reference", err, scale)

    print("KERNEL_OK")
</pallas_src>

<mosaic_0001>
module attributes {stable_mosaic.version = 11 : i64} {
  func.func @kernel(%arg0: i32, %arg1: memref<1x18x18x32xbf16, #tpu.memory_space<vmem>>, %arg2: memref<1x1x32xf32, #tpu.memory_space<vmem>>, %arg3: memref<1x32xf32, #tpu.memory_space<vmem>>, %arg4: memref<1x32xf32, #tpu.memory_space<vmem>>, %arg5: memref<288x32xbf16, #tpu.memory_space<vmem>>, %arg6: memref<1x1x32xf32, #tpu.memory_space<vmem>>, %arg7: memref<1x32xf32, #tpu.memory_space<vmem>>, %arg8: memref<1x32xf32, #tpu.memory_space<vmem>>, %arg9: memref<32x128xbf16, #tpu.memory_space<vmem>>, %arg10: memref<1x128xf32, #tpu.memory_space<vmem>>, %arg11: memref<288x128xbf16, #tpu.memory_space<vmem>>, %arg12: memref<64x256xbf16, #tpu.memory_space<vmem>>, %arg13: memref<1x64x288xbf16, #tpu.memory_space<vmem>>, %arg14: memref<1x64x128xf32, #tpu.memory_space<vmem>>) attributes {dimension_semantics = [#tpu.dimension_semantics<parallel>], iteration_bounds = array<i64: 2>, scalar_prefetch = 0 : i64, scratch_operands = 0 : i64, tpu.core_type = #tpu.core_type<tc>, window_params = [{transform_indices = @transform_0, window_bounds = array<i64: 1, 18, 18, 32>}, {transform_indices = @transform_1, window_bounds = array<i64: 1, 1, 32>}, {pipeline_mode = #tpu.pipeline_mode<synchronous>, transform_indices = @transform_2, window_bounds = array<i64: 1, 32>}, {pipeline_mode = #tpu.pipeline_mode<synchronous>, transform_indices = @transform_3, window_bounds = array<i64: 1, 32>}, {pipeline_mode = #tpu.pipeline_mode<synchronous>, transform_indices = @transform_4, window_bounds = array<i64: 288, 32>}, {transform_indices = @transform_5, window_bounds = array<i64: 1, 1, 32>}, {pipeline_mode = #tpu.pipeline_mode<synchronous>, transform_indices = @transform_6, window_bounds = array<i64: 1, 32>}, {pipeline_mode = #tpu.pipeline_mode<synchronous>, transform_indices = @transform_7, window_bounds = array<i64: 1, 32>}, {pipeline_mode = #tpu.pipeline_mode<synchronous>, transform_indices = @transform_8, window_bounds = array<i64: 32, 128>}, {pipeline_mode = #tpu.pipeline_mode<synchronous>, transform_indices = @transform_9, window_bounds = array<i64: 1, 128>}, {pipeline_mode = #tpu.pipeline_mode<synchronous>, transform_indices = @transform_10, window_bounds = array<i64: 288, 128>}, {pipeline_mode = #tpu.pipeline_mode<synchronous>, transform_indices = @transform_11, window_bounds = array<i64: 64, 256>}, {transform_indices = @transform_12, window_bounds = array<i64: 1, 64, 288>}, {transform_indices = @transform_13, window_bounds = array<i64: 1, 64, 128>}]} {
    %c0 = arith.constant 0 : index
    %c0_0 = arith.constant 0 : index
    %c0_1 = arith.constant 0 : index
    %c0_2 = arith.constant 0 : index
    %0 = vector.load %arg1[%c0, %c0_0, %c0_1, %c0_2] : memref<1x18x18x32xbf16, #tpu.memory_space<vmem>>, vector<1x18x18x32xbf16>
    %1 = vector.shape_cast %0 : vector<1x18x18x32xbf16> to vector<18x18x32xbf16>
    %2 = arith.extf %1 : vector<18x18x32xbf16> to vector<18x18x32xf32>
    %3 = vector.extract_strided_slice %2 {offsets = [1, 1, 0], sizes = [16, 16, 32], strides = [1, 1, 1]} : vector<18x18x32xf32> to vector<16x16x32xf32>
    %cst = arith.constant dense<0.000000e+00> : vector<32xf32>
    %4 = vector.multi_reduction <add>, %3, %cst [0, 1] : vector<16x16x32xf32> to vector<32xf32>
    %5 = vector.shape_cast %4 : vector<32xf32> to vector<1x1x32xf32>
    %cst_3 = arith.constant 2.560000e+02 : f32
    %6 = vector.broadcast %cst_3 : f32 to vector<1x1x32xf32>
    %7 = arith.divf %5, %6 : vector<1x1x32xf32>
    %8 = vector.broadcast %7 : vector<1x1x32xf32> to vector<16x16x32xf32>
    %9 = arith.subf %3, %8 : vector<16x16x32xf32>
    %10 = arith.mulf %9, %9 : vector<16x16x32xf32>
    %cst_4 = arith.constant dense<0.000000e+00> : vector<32xf32>
    %11 = vector.multi_reduction <add>, %10, %cst_4 [0, 1] : vector<16x16x32xf32> to vector<32xf32>
    %12 = vector.shape_cast %11 : vector<32xf32> to vector<1x1x32xf32>
    %cst_5 = arith.constant 2.560000e+02 : f32
    %13 = vector.broadcast %cst_5 : f32 to vector<1x1x32xf32>
    %14 = arith.divf %12, %13 : vector<1x1x32xf32>
    %15 = vector.broadcast %7 : vector<1x1x32xf32> to vector<18x18x32xf32>
    %16 = arith.subf %2, %15 : vector<18x18x32xf32>
    %cst_6 = arith.constant 9.99999974E-6 : f32
    %17 = vector.broadcast %cst_6 : f32 to vector<1x1x32xf32>
    %18 = arith.addf %14, %17 : vector<1x1x32xf32>
    %19 = math.rsqrt %18 : vector<1x1x32xf32>
    %20 = vector.broadcast %19 : vector<1x1x32xf32> to vector<18x18x32xf32>
    %21 = arith.mulf %16, %20 : vector<18x18x32xf32>
    %c0_7 = arith.constant 0 : index
    %c0_8 = arith.constant 0 : index
    %c0_9 = arith.constant 0 : index
    %22 = vector.load %arg2[%c0_7, %c0_8, %c0_9] : memref<1x1x32xf32, #tpu.memory_space<vmem>>, vector<1x1x32xf32>
    %23 = vector.shape_cast %22 : vector<1x1x32xf32> to vector<32xf32>
    %24 = vector.shape_cast %23 : vector<32xf32> to vector<1x1x32xf32>
    %25 = vector.broadcast %24 : vector<1x1x32xf32> to vector<18x18x32xf32>
    %26 = arith.addf %21, %25 : vector<18x18x32xf32>
    %c0_10 = arith.constant 0 : index
    %c0_11 = arith.constant 0 : index
    %27 = vector.load %arg3[%c0_10, %c0_11] : memref<1x32xf32, #tpu.memory_space<vmem>>, vector<1x32xf32>
    %28 = vector.shape_cast %27 : vector<1x32xf32> to vector<32xf32>
    %29 = vector.shape_cast %28 : vector<32xf32> to vector<1x1x32xf32>
    %30 = vector.broadcast %29 : vector<1x1x32xf32> to vector<18x18x32xf32>
    %31 = arith.mulf %26, %30 : vector<18x18x32xf32>
    %c0_12 = arith.constant 0 : index
    %c0_13 = arith.constant 0 : index
    %32 = vector.load %arg4[%c0_12, %c0_13] : memref<1x32xf32, #tpu.memory_space<vmem>>, vector<1x32xf32>
    %33 = vector.shape_cast %32 : vector<1x32xf32> to vector<32xf32>
    %34 = vector.shape_cast %33 : vector<32xf32> to vector<1x1x32xf32>
    %35 = vector.broadcast %34 : vector<1x1x32xf32> to vector<18x18x32xf32>
    %36 = arith.addf %31, %35 : vector<18x18x32xf32>
    %cst_14 = arith.constant 0.000000e+00 : f32
    %37 = vector.broadcast %cst_14 : f32 to vector<18x18x32xf32>
    %38 = arith.maximumf %36, %37 : vector<18x18x32xf32>
    %39 = arith.truncf %38 : vector<18x18x32xf32> to vector<18x18x32xbf16>
    %40 = vector.extract_strided_slice %39 {offsets = [0, 0, 0], sizes = [16, 16, 32], strides = [1, 1, 1]} : vector<18x18x32xbf16> to vector<16x16x32xbf16>
    %41 = vector.shape_cast %40 : vector<16x16x32xbf16> to vector<256x32xbf16>
    %42 = vector.extract_strided_slice %39 {offsets = [0, 1, 0], sizes = [16, 16, 32], strides = [1, 1, 1]} : vector<18x18x32xbf16> to vector<16x16x32xbf16>
    %43 = vector.shape_cast %42 : vector<16x16x32xbf16> to vector<256x32xbf16>
    %44 = vector.extract_strided_slice %39 {offsets = [0, 2, 0], sizes = [16, 16, 32], strides = [1, 1, 1]} : vector<18x18x32xbf16> to vector<16x16x32xbf16>
    %45 = vector.shape_cast %44 : vector<16x16x32xbf16> to vector<256x32xbf16>
    %46 = vector.extract_strided_slice %39 {offsets = [1, 0, 0], sizes = [16, 16, 32], strides = [1, 1, 1]} : vector<18x18x32xbf16> to vector<16x16x32xbf16>
    %47 = vector.shape_cast %46 : vector<16x16x32xbf16> to vector<256x32xbf16>
    %48 = vector.extract_strided_slice %39 {offsets = [1, 1, 0], sizes = [16, 16, 32], strides = [1, 1, 1]} : vector<18x18x32xbf16> to vector<16x16x32xbf16>
    %49 = vector.shape_cast %48 : vector<16x16x32xbf16> to vector<256x32xbf16>
    %50 = vector.extract_strided_slice %39 {offsets = [1, 2, 0], sizes = [16, 16, 32], strides = [1, 1, 1]} : vector<18x18x32xbf16> to vector<16x16x32xbf16>
    %51 = vector.shape_cast %50 : vector<16x16x32xbf16> to vector<256x32xbf16>
    %52 = vector.extract_strided_slice %39 {offsets = [2, 0, 0], sizes = [16, 16, 32], strides = [1, 1, 1]} : vector<18x18x32xbf16> to vector<16x16x32xbf16>
    %53 = vector.shape_cast %52 : vector<16x16x32xbf16> to vector<256x32xbf16>
    %54 = vector.extract_strided_slice %39 {offsets = [2, 1, 0], sizes = [16, 16, 32], strides = [1, 1, 1]} : vector<18x18x32xbf16> to vector<16x16x32xbf16>
    %55 = vector.shape_cast %54 : vector<16x16x32xbf16> to vector<256x32xbf16>
    %56 = vector.extract_strided_slice %39 {offsets = [2, 2, 0], sizes = [16, 16, 32], strides = [1, 1, 1]} : vector<18x18x32xbf16> to vector<16x16x32xbf16>
    %57 = vector.shape_cast %56 : vector<16x16x32xbf16> to vector<256x32xbf16>
    %58 = tpu.concatenate %41, %43, %45, %47, %49, %51, %53, %55, %57 in 1 : vector<256x32xbf16>, vector<256x32xbf16>, vector<256x32xbf16>, vector<256x32xbf16>, vector<256x32xbf16>, vector<256x32xbf16>, vector<256x32xbf16>, vector<256x32xbf16>, vector<256x32xbf16> -> vector<256x288xbf16>
    %c0_15 = arith.constant 0 : index
    %c0_16 = arith.constant 0 : index
    %59 = vector.load %arg5[%c0_15, %c0_16] : memref<288x32xbf16, #tpu.memory_space<vmem>>, vector<288x32xbf16>
    %cst_17 = arith.constant dense<0.000000e+00> : vector<256x32xf32>
    %60 = tpu.matmul %58, %59, %cst_17 {dimension_numbers = #tpu.dot_dimension_numbers<[1], [0], [0], [1], [0, 0, 1, 1], [], []>} : vector<256x288xbf16>, vector<288x32xbf16>, vector<256x32xf32> -> vector<256x32xf32>
    %cst_18 = arith.constant dense<0.000000e+00> : vector<32xf32>
    %61 = vector.multi_reduction <add>, %60, %cst_18 [0] : vector<256x32xf32> to vector<32xf32>
    %62 = vector.shape_cast %61 : vector<32xf32> to vector<1x32xf32>
    %cst_19 = arith.constant 2.560000e+02 : f32
    %63 = vector.broadcast %cst_19 : f32 to vector<1x32xf32>
    %64 = arith.divf %62, %63 : vector<1x32xf32>
    %65 = vector.broadcast %64 : vector<1x32xf32> to vector<256x32xf32>
    %66 = arith.subf %60, %65 : vector<256x32xf32>
    %67 = arith.mulf %66, %66 : vector<256x32xf32>
    %cst_20 = arith.constant dense<0.000000e+00> : vector<32xf32>
    %68 = vector.multi_reduction <add>, %67, %cst_20 [0] : vector<256x32xf32> to vector<32xf32>
    %69 = vector.shape_cast %68 : vector<32xf32> to vector<1x32xf32>
    %cst_21 = arith.constant 2.560000e+02 : f32
    %70 = vector.broadcast %cst_21 : f32 to vector<1x32xf32>
    %71 = arith.divf %69, %70 : vector<1x32xf32>
    %72 = vector.broadcast %64 : vector<1x32xf32> to vector<256x32xf32>
    %73 = arith.subf %60, %72 : vector<256x32xf32>
    %cst_22 = arith.constant 9.99999974E-6 : f32
    %74 = vector.broadcast %cst_22 : f32 to vector<1x32xf32>
    %75 = arith.addf %71, %74 : vector<1x32xf32>
    %76 = math.rsqrt %75 : vector<1x32xf32>
    %77 = vector.broadcast %76 : vector<1x32xf32> to vector<256x32xf32>
    %78 = arith.mulf %73, %77 : vector<256x32xf32>
    %c0_23 = arith.constant 0 : index
    %c0_24 = arith.constant 0 : index
    %c0_25 = arith.constant 0 : index
    %79 = vector.load %arg6[%c0_23, %c0_24, %c0_25] : memref<1x1x32xf32, #tpu.memory_space<vmem>>, vector<1x1x32xf32>
    %80 = vector.shape_cast %79 : vector<1x1x32xf32> to vector<32xf32>
    %81 = vector.shape_cast %80 : vector<32xf32> to vector<1x32xf32>
    %82 = vector.broadcast %81 : vector<1x32xf32> to vector<256x32xf32>
    %83 = arith.addf %78, %82 : vector<256x32xf32>
    %c0_26 = arith.constant 0 : index
    %c0_27 = arith.constant 0 : index
    %84 = vector.load %arg7[%c0_26, %c0_27] : memref<1x32xf32, #tpu.memory_space<vmem>>, vector<1x32xf32>
    %85 = vector.shape_cast %84 : vector<1x32xf32> to vector<32xf32>
    %86 = vector.shape_cast %85 : vector<32xf32> to vector<1x32xf32>
    %87 = vector.broadcast %86 : vector<1x32xf32> to vector<256x32xf32>
    %88 = arith.mulf %83, %87 : vector<256x32xf32>
    %c0_28 = arith.constant 0 : index
    %c0_29 = arith.constant 0 : index
    %89 = vector.load %arg8[%c0_28, %c0_29] : memref<1x32xf32, #tpu.memory_space<vmem>>, vector<1x32xf32>
    %90 = vector.shape_cast %89 : vector<1x32xf32> to vector<32xf32>
    %91 = vector.shape_cast %90 : vector<32xf32> to vector<1x32xf32>
    %92 = vector.broadcast %91 : vector<1x32xf32> to vector<256x32xf32>
    %93 = arith.addf %88, %92 : vector<256x32xf32>
    %cst_30 = arith.constant 0.000000e+00 : f32
    %94 = vector.broadcast %cst_30 : f32 to vector<256x32xf32>
    %95 = arith.maximumf %93, %94 : vector<256x32xf32>
    %c0_31 = arith.constant 0 : index
    %c0_32 = arith.constant 0 : index
    %96 = vector.load %arg12[%c0_31, %c0_32] : memref<64x256xbf16, #tpu.memory_space<vmem>>, vector<64x256xbf16>
    %97 = arith.truncf %95 : vector<256x32xf32> to vector<256x32xbf16>
    %cst_33 = arith.constant dense<0.000000e+00> : vector<64x32xf32>
    %98 = tpu.matmul %96, %97, %cst_33 {dimension_numbers = #tpu.dot_dimension_numbers<[1], [0], [0], [1], [0, 0, 1, 1], [], []>} : vector<64x256xbf16>, vector<256x32xbf16>, vector<64x32xf32> -> vector<64x32xf32>
    %99 = arith.truncf %98 : vector<64x32xf32> to vector<64x32xbf16>
    %c0_34 = arith.constant 0 : index
    %c0_35 = arith.constant 0 : index
    %100 = vector.load %arg9[%c0_34, %c0_35] : memref<32x128xbf16, #tpu.memory_space<vmem>>, vector<32x128xbf16>
    %cst_36 = arith.constant dense<0.000000e+00> : vector<64x128xf32>
    %101 = tpu.matmul %99, %100, %cst_36 {dimension_numbers = #tpu.dot_dimension_numbers<[1], [0], [0], [1], [0, 0, 1, 1], [], []>} : vector<64x32xbf16>, vector<32x128xbf16>, vector<64x128xf32> -> vector<64x128xf32>
    %c0_37 = arith.constant 0 : index
    %c0_38 = arith.constant 0 : index
    %102 = vector.load %arg10[%c0_37, %c0_38] : memref<1x128xf32, #tpu.memory_space<vmem>>, vector<1x128xf32>
    %103 = vector.shape_cast %102 : vector<1x128xf32> to vector<128xf32>
    %104 = vector.shape_cast %103 : vector<128xf32> to vector<1x128xf32>
    %105 = vector.broadcast %104 : vector<1x128xf32> to vector<64x128xf32>
    %106 = arith.addf %101, %105 : vector<64x128xf32>
    %c0_39 = arith.constant 0 : index
    %c0_40 = arith.constant 0 : index
    %c0_41 = arith.constant 0 : index
    %107 = vector.load %arg13[%c0_39, %c0_40, %c0_41] : memref<1x64x288xbf16, #tpu.memory_space<vmem>>, vector<1x64x288xbf16>
    %108 = vector.shape_cast %107 : vector<1x64x288xbf16> to vector<64x288xbf16>
    %c0_42 = arith.constant 0 : index
    %c0_43 = arith.constant 0 : index
    %109 = vector.load %arg11[%c0_42, %c0_43] : memref<288x128xbf16, #tpu.memory_space<vmem>>, vector<288x128xbf16>
    %cst_44 = arith.constant dense<0.000000e+00> : vector<64x128xf32>
    %110 = tpu.matmul %108, %109, %cst_44 {dimension_numbers = #tpu.dot_dimension_numbers<[1], [0], [0], [1], [0, 0, 1, 1], [], []>} : vector<64x288xbf16>, vector<288x128xbf16>, vector<64x128xf32> -> vector<64x128xf32>
    %111 = arith.addf %106, %110 : vector<64x128xf32>
    %c0_45 = arith.constant 0 : index
    %c0_46 = arith.constant 0 : index
    %c0_47 = arith.constant 0 : index
    %112 = vector.load %arg14[%c0_45, %c0_46, %c0_47] : memref<1x64x128xf32, #tpu.memory_space<vmem>>, vector<1x64x128xf32>
    %113 = vector.shape_cast %112 : vector<1x64x128xf32> to vector<64x128xf32>
    %114 = vector.shape_cast %111 : vector<64x128xf32> to vector<1x64x128xf32>
    tpu.vector_store %arg14[%c0_45, %c0_46, %c0_47], %114 {strides = array<i32>} : memref<1x64x128xf32, #tpu.memory_space<vmem>>, vector<1x64x128xf32>,
    return
  }
  func.func @transform_0(%arg0: i32) -> (i32, i32, i32, i32) {
    %c0_i32 = arith.constant 0 : i32
    %c0_i32_0 = arith.constant 0 : i32
    %c0_i32_1 = arith.constant 0 : i32
    %c0_i32_2 = arith.constant 0 : i32
    return %arg0, %c0_i32, %c0_i32_0, %c0_i32_1 : i32, i32, i32, i32
  }
  func.func @transform_1(%arg0: i32) -> (i32, i32, i32) {
    %c0_i32 = arith.constant 0 : i32
    %c0_i32_0 = arith.constant 0 : i32
    %c0_i32_1 = arith.constant 0 : i32
    return %arg0, %c0_i32, %c0_i32_0 : i32, i32, i32
  }
  func.func @transform_2(%arg0: i32) -> (i32, i32) {
    %c0_i32 = arith.constant 0 : i32
    %c0_i32_0 = arith.constant 0 : i32
    %c0_i32_1 = arith.constant 0 : i32
    return %c0_i32, %c0_i32_0 : i32, i32
  }
  func.func @transform_3(%arg0: i32) -> (i32, i32) {
    %c0_i32 = arith.constant 0 : i32
    %c0_i32_0 = arith.constant 0 : i32
    %c0_i32_1 = arith.constant 0 : i32
    return %c0_i32, %c0_i32_0 : i32, i32
  }
  func.func @transform_4(%arg0: i32) -> (i32, i32) {
    %c0_i32 = arith.constant 0 : i32
    %c0_i32_0 = arith.constant 0 : i32
    %c0_i32_1 = arith.constant 0 : i32
    return %c0_i32, %c0_i32_0 : i32, i32
  }
  func.func @transform_5(%arg0: i32) -> (i32, i32, i32) {
    %c0_i32 = arith.constant 0 : i32
    %c0_i32_0 = arith.constant 0 : i32
    %c0_i32_1 = arith.constant 0 : i32
    return %arg0, %c0_i32, %c0_i32_0 : i32, i32, i32
  }
  func.func @transform_6(%arg0: i32) -> (i32, i32) {
    %c0_i32 = arith.constant 0 : i32
    %c0_i32_0 = arith.constant 0 : i32
    %c0_i32_1 = arith.constant 0 : i32
    return %c0_i32, %c0_i32_0 : i32, i32
  }
  func.func @transform_7(%arg0: i32) -> (i32, i32) {
    %c0_i32 = arith.constant 0 : i32
    %c0_i32_0 = arith.constant 0 : i32
    %c0_i32_1 = arith.constant 0 : i32
    return %c0_i32, %c0_i32_0 : i32, i32
  }
  func.func @transform_8(%arg0: i32) -> (i32, i32) {
    %c0_i32 = arith.constant 0 : i32
    %c0_i32_0 = arith.constant 0 : i32
    %c0_i32_1 = arith.constant 0 : i32
    return %c0_i32, %c0_i32_0 : i32, i32
  }
  func.func @transform_9(%arg0: i32) -> (i32, i32) {
    %c0_i32 = arith.constant 0 : i32
    %c0_i32_0 = arith.constant 0 : i32
    %c0_i32_1 = arith.constant 0 : i32
    return %c0_i32, %c0_i32_0 : i32, i32
  }
  func.func @transform_10(%arg0: i32) -> (i32, i32) {
    %c0_i32 = arith.constant 0 : i32
    %c0_i32_0 = arith.constant 0 : i32
    %c0_i32_1 = arith.constant 0 : i32
    return %c0_i32, %c0_i32_0 : i32, i32
  }
  func.func @transform_11(%arg0: i32) -> (i32, i32) {
    %c0_i32 = arith.constant 0 : i32
    %c0_i32_0 = arith.constant 0 : i32
    %c0_i32_1 = arith.constant 0 : i32
    return %c0_i32, %c0_i32_0 : i32, i32
  }
  func.func @transform_12(%arg0: i32) -> (i32, i32, i32) {
    %c0_i32 = arith.constant 0 : i32
    %c0_i32_0 = arith.constant 0 : i32
    %c0_i32_1 = arith.constant 0 : i32
    return %arg0, %c0_i32, %c0_i32_0 : i32, i32, i32
  }
  func.func @transform_13(%arg0: i32) -> (i32, i32, i32) {
    %c0_i32 = arith.constant 0 : i32
    %c0_i32_0 = arith.constant 0 : i32
    %c0_i32_1 = arith.constant 0 : i32
    return %arg0, %c0_i32, %c0_i32_0 : i32, i32, i32
  }
}

</mosaic_0001>

<llo_original>
// kernel: tpu_custom_call.1
$region0: #{tpu_custom_call.1}
  #allocation0 [shape = 'u32[]', space=smem, size = 0x4, offset = 0x4, fixed_abs, tag = 'smem constant byte address 0x4 - core index']
  #allocation1 [shape = 'u32[72,128]{1,0:T(1,128)}', space=vmem, size = 0x9000, scoped, tag = 'internal scratch']
  %s0 = inlined_call_operand.vmem [shape: bf16[2,18,18,32], index: 0, kind: input, shape index: {}]
  %s1 = inlined_call_operand.vmem [shape: f32[2,1,32], index: 1, kind: input, shape index: {}]
  %s2 = inlined_call_operand.vmem [shape: f32[1,32], index: 2, kind: input, shape index: {}]
  %s3 = inlined_call_operand.vmem [shape: f32[1,32], index: 3, kind: input, shape index: {}]
  %s4 = inlined_call_operand.vmem [shape: bf16[288,32], index: 4, kind: input, shape index: {}]
  %s5 = inlined_call_operand.vmem [shape: f32[2,1,32], index: 5, kind: input, shape index: {}]
  %s6 = inlined_call_operand.vmem [shape: f32[1,32], index: 6, kind: input, shape index: {}]
  %s7 = inlined_call_operand.vmem [shape: f32[1,32], index: 7, kind: input, shape index: {}]
  %s8 = inlined_call_operand.vmem [shape: bf16[32,128], index: 8, kind: input, shape index: {}]
  %s9 = inlined_call_operand.vmem [shape: f32[1,128], index: 9, kind: input, shape index: {}]
  %s10 = inlined_call_operand.vmem [shape: bf16[288,128], index: 10, kind: input, shape index: {}]
  %s11 = inlined_call_operand.vmem [shape: bf16[64,256], index: 11, kind: input, shape index: {}]
  %s12 = inlined_call_operand.vmem [shape: bf16[2,64,288], index: 12, kind: input, shape index: {}]
  %s13 = inlined_call_operand.hbm [shape: f32[2,64,128], index: 13, kind: output, shape index: {}]
  %s14 = sld [smem:[#allocation0]]
  $region85: #{tpu_custom_call.1} parent=0
    _
  %s16 = ssub.s32 1, %s14
  %s17 = scalar_select 0, %s16, %s14
  $region1: #{tpu_custom_call.1} parent=0
    #allocation2 [shape = 'u8[65536]{0}', space=vmem, size = 0x10000, scoped, tag = 'output window, operand 0']
    #allocation3 [shape = 's32[2]{0}', space=sflag, size = 0x8, scoped, tag = 'scoped memory for tpu_custom_call.1']
    %18 = vsyncpa [#allocation3], 0
    %s19 = scalar_lea.sflag [#allocation3], 1
    %20 = vsyncpa %s19, 0
    loop: start=0, step=1, limit=4
    $region2: #{tpu_custom_call.1} parent=1 // loop_pre_header
      _
    $region3: #{tpu_custom_call.1} parent=1 // loop_header
      %s22 = sphi 0, %s26
      %p23 = scmp.ge.s32.totalorder %s22, 4
      %s32 = sphi 0, %s34
      %s35 = sphi 0, %s32
      %s36 = sphi 0, %s35
      %s52 = sphi 0, %s36
      %s58 = sphi 0, %s60
      %s61 = sphi 0, %s58
      %s62 = sphi 0, %s61
      %s78 = sphi 0, %s62
      %s82 = sphi 0, %s82
      %s84 = sphi 0, %s82
      %s85 = sphi 0, %s84
      %s99 = sphi 0, %s85
      %s103 = sphi 0, %s103
      %s105 = sphi 0, %s103
      %s106 = sphi 0, %s105
      %s120 = sphi 0, %s106
      %s124 = sphi 0, %s124
      %s126 = sphi 0, %s124
      %s127 = sphi 0, %s126
      %s141 = sphi 0, %s127
      %s147 = sphi 0, %s149
      %s150 = sphi 0, %s147
      %s151 = sphi 0, %s150
      %s167 = sphi 0, %s151
      %s171 = sphi 0, %s171
      %s173 = sphi 0, %s171
      %s174 = sphi 0, %s173
      %s188 = sphi 0, %s174
      %s192 = sphi 0, %s192
      %s194 = sphi 0, %s192
      %s195 = sphi 0, %s194
      %s209 = sphi 0, %s195
      %s213 = sphi 0, %s213
      %s215 = sphi 0, %s213
      %s216 = sphi 0, %s215
      %s230 = sphi 0, %s216
      %s234 = sphi 0, %s234
      %s236 = sphi 0, %s234
      %s237 = sphi 0, %s236
      %s251 = sphi 0, %s237
      %s255 = sphi 0, %s255
      %s257 = sphi 0, %s255
      %s258 = sphi 0, %s257
      %s272 = sphi 0, %s258
      %s276 = sphi 0, %s276
      %s278 = sphi 0, %s276
      %s279 = sphi 0, %s278
      %s293 = sphi 0, %s279
      %s299 = sphi 0, %s301
      %s302 = sphi 0, %s299
      %s303 = sphi 0, %s302
      %s319 = sphi 0, %s303
      %s325 = sphi 0, %s327
      %s328 = sphi 0, %s325
      %s329 = sphi 0, %s328
      %s345 = sphi 0, %s329
    $region4: #{tpu_custom_call.1} parent=1 // loop_header_branch
      %25 = sbr.rel (%p23) target = $region8
    $region5: #{tpu_custom_call.1} parent=1 // loop_body
      %s27 = ssub.s32 %s22, 1
      %s28 = ssub.s32 %s22, 2
      %s29 = sadd.s32 %s22, 1
      %s30 = ssub.s32 %s22, %s29
      %p31 = scmp.eq.s32.totalorder %s30, 0
      %s33 = sadd.s32 %s32, 1
      %s34 = scalar_select %p31, %s32, %s33
      %p37 = pneg %p31
      %p38 = scmp.eq.s32.totalorder %s22, 1
      %p39 = por %p37, %p38
      %p40 = scmp.ne.s32.totalorder %s32, %s35
      %p41 = scmp.eq.s32.totalorder %s22, 0
      %p42 = por %p40, %p41
      %p43 = scmp.ne.s32.totalorder %s32, %s35
      %p44 = scmp.eq.s32.totalorder %s27, 1
      %p45 = por %p43, %p44
      %p46 = scmp.ne.s32.totalorder %s35, %s36
      %p47 = scmp.eq.s32.totalorder %s27, 0
      %p48 = por %p46, %p47
      %p49 = scmp.ne.s32.totalorder %s35, %s36
      %p50 = scmp.eq.s32.totalorder %s28, 1
      %p51 = por %p49, %p50
      %p53 = scmp.ne.s32.totalorder %s36, %s52
      %p54 = scmp.eq.s32.totalorder %s28, 0
      %p55 = por %p53, %p54
      %s56 = ssub.s32 %s22, %s29
      %p57 = scmp.eq.s32.totalorder %s56, 0
      %s59 = sadd.s32 %s58, 1
      %s60 = scalar_select %p57, %s58, %s59
      %p63 = pneg %p57
      %p64 = scmp.eq.s32.totalorder %s22, 1
      %p65 = por %p63, %p64
      %p66 = scmp.ne.s32.totalorder %s58, %s61
      %p67 = scmp.eq.s32.totalorder %s22, 0
      %p68 = por %p66, %p67
      %p69 = scmp.ne.s32.totalorder %s58, %s61
      %p70 = scmp.eq.s32.totalorder %s27, 1
      %p71 = por %p69, %p70
      %p72 = scmp.ne.s32.totalorder %s61, %s62
      %p73 = scmp.eq.s32.totalorder %s27, 0
      %p74 = por %p72, %p73
      %p75 = scmp.ne.s32.totalorder %s61, %s62
      %p76 = scmp.eq.s32.totalorder %s28, 1
      %p77 = por %p75, %p76
      %p79 = scmp.ne.s32.totalorder %s62, %s78
      %p80 = scmp.eq.s32.totalorder %s28, 0
      %p81 = por %p79, %p80
      %s83 = sadd.s32 %s82, 1
      %p86 = scmp.eq.s32.totalorder %s22, 1
      %p87 = scmp.ne.s32.totalorder %s82, %s84
      %p88 = scmp.eq.s32.totalorder %s22, 0
      %p89 = por %p87, %p88
      %p90 = scmp.ne.s32.totalorder %s82, %s84
      %p91 = scmp.eq.s32.totalorder %s27, 1
      %p92 = por %p90, %p91
      %p93 = scmp.ne.s32.totalorder %s84, %s85
      %p94 = scmp.eq.s32.totalorder %s27, 0
      %p95 = por %p93, %p94
      %p96 = scmp.ne.s32.totalorder %s84, %s85
      %p97 = scmp.eq.s32.totalorder %s28, 1
      %p98 = por %p96, %p97
      %p100 = scmp.ne.s32.totalorder %s85, %s99
      %p101 = scmp.eq.s32.totalorder %s28, 0
      %p102 = por %p100, %p101
      %s104 = sadd.s32 %s103, 1
      %p107 = scmp.eq.s32.totalorder %s22, 1
      %p108 = scmp.ne.s32.totalorder %s103, %s105
      %p109 = scmp.eq.s32.totalorder %s22, 0
      %p110 = por %p108, %p109
      %p111 = scmp.ne.s32.totalorder %s103, %s105
      %p112 = scmp.eq.s32.totalorder %s27, 1
      %p113 = por %p111, %p112
      %p114 = scmp.ne.s32.totalorder %s105, %s106
      %p115 = scmp.eq.s32.totalorder %s27, 0
      %p116 = por %p114, %p115
      %p117 = scmp.ne.s32.totalorder %s105, %s106
      %p118 = scmp.eq.s32.totalorder %s28, 1
      %p119 = por %p117, %p118
      %p121 = scmp.ne.s32.totalorder %s106, %s120
      %p122 = scmp.eq.s32.totalorder %s28, 0
      %p123 = por %p121, %p122
      %s125 = sadd.s32 %s124, 1
      %p128 = scmp.eq.s32.totalorder %s22, 1
      %p129 = scmp.ne.s32.totalorder %s124, %s126
      %p130 = scmp.eq.s32.totalorder %s22, 0
      %p131 = por %p129, %p130
      %p132 = scmp.ne.s32.totalorder %s124, %s126
      %p133 = scmp.eq.s32.totalorder %s27, 1
      %p134 = por %p132, %p133
      %p135 = scmp.ne.s32.totalorder %s126, %s127
      %p136 = scmp.eq.s32.totalorder %s27, 0
      %p137 = por %p135, %p136
      %p138 = scmp.ne.s32.totalorder %s126, %s127
      %p139 = scmp.eq.s32.totalorder %s28, 1
      %p140 = por %p138, %p139
      %p142 = scmp.ne.s32.totalorder %s127, %s141
      %p143 = scmp.eq.s32.totalorder %s28, 0
      %p144 = por %p142, %p143
      %s145 = ssub.s32 %s22, %s29
      %p146 = scmp.eq.s32.totalorder %s145, 0
      %s148 = sadd.s32 %s147, 1
      %s149 = scalar_select %p146, %s147, %s148
      %p152 = pneg %p146
      %p153 = scmp.eq.s32.totalorder %s22, 1
      %p154 = por %p152, %p153
      %p155 = scmp.ne.s32.totalorder %s147, %s150
      %p156 = scmp.eq.s32.totalorder %s22, 0
      %p157 = por %p155, %p156
      %p158 = scmp.ne.s32.totalorder %s147, %s150
      %p159 = scmp.eq.s32.totalorder %s27, 1
      %p160 = por %p158, %p159
      %p161 = scmp.ne.s32.totalorder %s150, %s151
      %p162 = scmp.eq.s32.totalorder %s27, 0
      %p163 = por %p161, %p162
      %p164 = scmp.ne.s32.totalorder %s150, %s151
      %p165 = scmp.eq.s32.totalorder %s28, 1
      %p166 = por %p164, %p165
      %p168 = scmp.ne.s32.totalorder %s151, %s167
      %p169 = scmp.eq.s32.totalorder %s28, 0
      %p170 = por %p168, %p169
      %s172 = sadd.s32 %s171, 1
      %p175 = scmp.eq.s32.totalorder %s22, 1
      %p176 = scmp.ne.s32.totalorder %s171, %s173
      %p177 = scmp.eq.s32.totalorder %s22, 0
      %p178 = por %p176, %p177
      %p179 = scmp.ne.s32.totalorder %s171, %s173
      %p180 = scmp.eq.s32.totalorder %s27, 1
      %p181 = por %p179, %p180
      %p182 = scmp.ne.s32.totalorder %s173, %s174
      %p183 = scmp.eq.s32.totalorder %s27, 0
      %p184 = por %p182, %p183
      %p185 = scmp.ne.s32.totalorder %s173, %s174
      %p186 = scmp.eq.s32.totalorder %s28, 1
      %p187 = por %p185, %p186
      %p189 = scmp.ne.s32.totalorder %s174, %s188
      %p190 = scmp.eq.s32.totalorder %s28, 0
      %p191 = por %p189, %p190
      %s193 = sadd.s32 %s192, 1
      %p196 = scmp.eq.s32.totalorder %s22, 1
      %p197 = scmp.ne.s32.totalorder %s192, %s194
      %p198 = scmp.eq.s32.totalorder %s22, 0
      %p199 = por %p197, %p198
      %p200 = scmp.ne.s32.totalorder %s192, %s194
      %p201 = scmp.eq.s32.totalorder %s27, 1
      %p202 = por %p200, %p201
      %p203 = scmp.ne.s32.totalorder %s194, %s195
      %p204 = scmp.eq.s32.totalorder %s27, 0
      %p205 = por %p203, %p204
      %p206 = scmp.ne.s32.totalorder %s194, %s195
      %p207 = scmp.eq.s32.totalorder %s28, 1
      %p208 = por %p206, %p207
      %p210 = scmp.ne.s32.totalorder %s195, %s209
      %p211 = scmp.eq.s32.totalorder %s28, 0
      %p212 = por %p210, %p211
      %s214 = sadd.s32 %s213, 1
      %p217 = scmp.eq.s32.totalorder %s22, 1
      %p218 = scmp.ne.s32.totalorder %s213, %s215
      %p219 = scmp.eq.s32.totalorder %s22, 0
      %p220 = por %p218, %p219
      %p221 = scmp.ne.s32.totalorder %s213, %s215
      %p222 = scmp.eq.s32.totalorder %s27, 1
      %p223 = por %p221, %p222
      %p224 = scmp.ne.s32.totalorder %s215, %s216
      %p225 = scmp.eq.s32.totalorder %s27, 0
      %p226 = por %p224, %p225
      %p227 = scmp.ne.s32.totalorder %s215, %s216
      %p228 = scmp.eq.s32.totalorder %s28, 1
      %p229 = por %p227, %p228
      %p231 = scmp.ne.s32.totalorder %s216, %s230
      %p232 = scmp.eq.s32.totalorder %s28, 0
      %p233 = por %p231, %p232
      %s235 = sadd.s32 %s234, 1
      %p238 = scmp.eq.s32.totalorder %s22, 1
      %p239 = scmp.ne.s32.totalorder %s234, %s236
      %p240 = scmp.eq.s32.totalorder %s22, 0
      %p241 = por %p239, %p240
      %p242 = scmp.ne.s32.totalorder %s234, %s236
      %p243 = scmp.eq.s32.totalorder %s27, 1
      %p244 = por %p242, %p243
      %p245 = scmp.ne.s32.totalorder %s236, %s237
      %p246 = scmp.eq.s32.totalorder %s27, 0
      %p247 = por %p245, %p246
      %p248 = scmp.ne.s32.totalorder %s236, %s237
      %p249 = scmp.eq.s32.totalorder %s28, 1
      %p250 = por %p248, %p249
      %p252 = scmp.ne.s32.totalorder %s237, %s251
      %p253 = scmp.eq.s32.totalorder %s28, 0
      %p254 = por %p252, %p253
      %s256 = sadd.s32 %s255, 1
      %p259 = scmp.eq.s32.totalorder %s22, 1
      %p260 = scmp.ne.s32.totalorder %s255, %s257
      %p261 = scmp.eq.s32.totalorder %s22, 0
      %p262 = por %p260, %p261
      %p263 = scmp.ne.s32.totalorder %s255, %s257
      %p264 = scmp.eq.s32.totalorder %s27, 1
      %p265 = por %p263, %p264
      %p266 = scmp.ne.s32.totalorder %s257, %s258
      %p267 = scmp.eq.s32.totalorder %s27, 0
      %p268 = por %p266, %p267
      %p269 = scmp.ne.s32.totalorder %s257, %s258
      %p270 = scmp.eq.s32.totalorder %s28, 1
      %p271 = por %p269, %p270
      %p273 = scmp.ne.s32.totalorder %s258, %s272
      %p274 = scmp.eq.s32.totalorder %s28, 0
      %p275 = por %p273, %p274
      %s277 = sadd.s32 %s276, 1
      %p280 = scmp.eq.s32.totalorder %s22, 1
      %p281 = scmp.ne.s32.totalorder %s276, %s278
      %p282 = scmp.eq.s32.totalorder %s22, 0
      %p283 = por %p281, %p282
      %p284 = scmp.ne.s32.totalorder %s276, %s278
      %p285 = scmp.eq.s32.totalorder %s27, 1
      %p286 = por %p284, %p285
      %p287 = scmp.ne.s32.totalorder %s278, %s279
      %p288 = scmp.eq.s32.totalorder %s27, 0
      %p289 = por %p287, %p288
      %p290 = scmp.ne.s32.totalorder %s278, %s279
      %p291 = scmp.eq.s32.totalorder %s28, 1
      %p292 = por %p290, %p291
      %p294 = scmp.ne.s32.totalorder %s279, %s293
      %p295 = scmp.eq.s32.totalorder %s28, 0
      %p296 = por %p294, %p295
      %s297 = ssub.s32 %s22, %s29
      %p298 = scmp.eq.s32.totalorder %s297, 0
      %s300 = sadd.s32 %s299, 1
      %s301 = scalar_select %p298, %s299, %s300
      %p304 = pneg %p298
      %p305 = scmp.eq.s32.totalorder %s22, 1
      %p306 = por %p304, %p305
      %p307 = scmp.ne.s32.totalorder %s299, %s302
      %p308 = scmp.eq.s32.totalorder %s22, 0
      %p309 = por %p307, %p308
      %p310 = scmp.ne.s32.totalorder %s299, %s302
      %p311 = scmp.eq.s32.totalorder %s27, 1
      %p312 = por %p310, %p311
      %p313 = scmp.ne.s32.totalorder %s302, %s303
      %p314 = scmp.eq.s32.totalorder %s27, 0
      %p315 = por %p313, %p314
      %p316 = scmp.ne.s32.totalorder %s302, %s303
      %p317 = scmp.eq.s32.totalorder %s28, 1
      %p318 = por %p316, %p317
      %p320 = scmp.ne.s32.totalorder %s303, %s319
      %p321 = scmp.eq.s32.totalorder %s28, 0
      %p322 = por %p320, %p321
      %s323 = ssub.s32 %s22, %s29
      %p324 = scmp.eq.s32.totalorder %s323, 0
      %s326 = sadd.s32 %s325, 1
      %s327 = scalar_select %p324, %s325, %s326
      %p330 = pneg %p324
      %p331 = scmp.eq.s32.totalorder %s22, 1
      %p332 = por %p330, %p331
      %p333 = scmp.ne.s32.totalorder %s325, %s328
      %p334 = scmp.eq.s32.totalorder %s22, 0
      %p335 = por %p333, %p334
      %p336 = scmp.ne.s32.totalorder %s325, %s328
      %p337 = scmp.eq.s32.totalorder %s27, 1
      %p338 = por %p336, %p337
      %p339 = scmp.ne.s32.totalorder %s328, %s329
      %p340 = scmp.eq.s32.totalorder %s27, 0
      %p341 = por %p339, %p340
      %p342 = scmp.ne.s32.totalorder %s328, %s329
      %p343 = scmp.eq.s32.totalorder %s28, 1
      %p344 = por %p342, %p343
      %p346 = scmp.ne.s32.totalorder %s329, %s345
      %p347 = scmp.eq.s32.totalorder %s28, 0
      %p348 = por %p346, %p347
      %p349 = scmp.le.s32.totalorder 1, %s22
      %p350 = scmp.lt.s32.totalorder %s22, 3
      %p351 = pnand %p349, %p350
      %p352 = pneg %p351
      // Predicated region
      $region9: #{tpu_custom_call.1} parent=5 // pred_check
        _
      $region10: #{tpu_custom_call.1} parent=5 // pred_check_branch
        %354 = sbr.rel (%p351) target = $region12
      $region11: #{tpu_custom_call.1} parent=5 // pred_region
        %s355 = ssub.s32 %s22, 1
        // Predicated region
        $region13: #{tpu_custom_call.1} parent=11 // pred_check
          %p356 = pneg %p95
        $region14: #{tpu_custom_call.1} parent=11 // pred_check_branch
          %358 = sbr.rel (%p356) target = $region16
        $region15: #{tpu_custom_call.1} parent=11 // pred_region
          _
        $region16: #{tpu_custom_call.1} parent=11 // pred_fallthru
          _
        // Predicated region
        $region17: #{tpu_custom_call.1} parent=11 // pred_check
          %p359 = pneg %p116
        $region18: #{tpu_custom_call.1} parent=11 // pred_check_branch
          %361 = sbr.rel (%p359) target = $region20
        $region19: #{tpu_custom_call.1} parent=11 // pred_region
          _
        $region20: #{tpu_custom_call.1} parent=11 // pred_fallthru
          _
        // Predicated region
        $region21: #{tpu_custom_call.1} parent=11 // pred_check
          %p362 = pneg %p137
        $region22: #{tpu_custom_call.1} parent=11 // pred_check_branch
          %364 = sbr.rel (%p362) target = $region24
        $region23: #{tpu_custom_call.1} parent=11 // pred_region
          _
        $region24: #{tpu_custom_call.1} parent=11 // pred_fallthru
          _
        // Predicated region
        $region25: #{tpu_custom_call.1} parent=11 // pred_check
          %p365 = pneg %p184
        $region26: #{tpu_custom_call.1} parent=11 // pred_check_branch
          %367 = sbr.rel (%p365) target = $region28
        $region27: #{tpu_custom_call.1} parent=11 // pred_region
          _
        $region28: #{tpu_custom_call.1} parent=11 // pred_fallthru
          _
        // Predicated region
        $region29: #{tpu_custom_call.1} parent=11 // pred_check
          %p368 = pneg %p205
        $region30: #{tpu_custom_call.1} parent=11 // pred_check_branch
          %370 = sbr.rel (%p368) target = $region32
        $region31: #{tpu_custom_call.1} parent=11 // pred_region
          _
        $region32: #{tpu_custom_call.1} parent=11 // pred_fallthru
          _
        // Predicated region
        $region33: #{tpu_custom_call.1} parent=11 // pred_check
          %p371 = pneg %p226
        $region34: #{tpu_custom_call.1} parent=11 // pred_check_branch
          %373 = sbr.rel (%p371) target = $region36
        $region35: #{tpu_custom_call.1} parent=11 // pred_region
          _
        $region36: #{tpu_custom_call.1} parent=11 // pred_fallthru
          _
        // Predicated region
        $region37: #{tpu_custom_call.1} parent=11 // pred_check
          %p374 = pneg %p247
        $region38: #{tpu_custom_call.1} parent=11 // pred_check_branch
          %376 = sbr.rel (%p374) target = $region40
        $region39: #{tpu_custom_call.1} parent=11 // pred_region
          _
        $region40: #{tpu_custom_call.1} parent=11 // pred_fallthru
          _
        // Predicated region
        $region41: #{tpu_custom_call.1} parent=11 // pred_check
          %p377 = pneg %p268
        $region42: #{tpu_custom_call.1} parent=11 // pred_check_branch
          %379 = sbr.rel (%p377) target = $region44
        $region43: #{tpu_custom_call.1} parent=11 // pred_region
          _
        $region44: #{tpu_custom_call.1} parent=11 // pred_fallthru
          _
        // Predicated region
        $region45: #{tpu_custom_call.1} parent=11 // pred_check
          %p380 = pneg %p289
        $region46: #{tpu_custom_call.1} parent=11 // pred_check_branch
          %382 = sbr.rel (%p380) target = $region48
        $region47: #{tpu_custom_call.1} parent=11 // pred_region
          _
        $region48: #{tpu_custom_call.1} parent=11 // pred_fallthru
          _
      $region12: #{tpu_custom_call.1} parent=5 // pred_fallthru
        _
      %p383 = scmp.lt.s32.totalorder %s22, 2
      // Predicated region
      $region49: #{tpu_custom_call.1} parent=5 // pred_check
        %p384 = pneg %p383
      $region50: #{tpu_custom_call.1} parent=5 // pred_check_branch
        %386 = sbr.rel (%p384) target = $region52
      $region51: #{tpu_custom_call.1} parent=5 // pred_region
        // Predicated region
        $region53: #{tpu_custom_call.1} parent=51 // pred_check
          %p387 = pneg %p42
        $region54: #{tpu_custom_call.1} parent=51 // pred_check_branch
          %389 = sbr.rel (%p387) target = $region56
        $region55: #{tpu_custom_call.1} parent=51 // pred_region
          %p390 = scmp.lt.s32.totalorder %s22, 1
          %s391 = scalar_select %p390, %s22, 1
          %s392 = smul.addr %s391, 54
          %s393 = smul.addr %s392, 4
          %s394 = scalar_lea.vmem %s0, %s393
        $region56: #{tpu_custom_call.1} parent=51 // pred_fallthru
          _
        // Predicated region
        $region57: #{tpu_custom_call.1} parent=51 // pred_check
          %p395 = pneg %p68
        $region58: #{tpu_custom_call.1} parent=51 // pred_check_branch
          %397 = sbr.rel (%p395) target = $region60
        $region59: #{tpu_custom_call.1} parent=51 // pred_region
          %p398 = scmp.lt.s32.totalorder %s22, 1
          %s399 = scalar_select %p398, %s22, 1
          %s400 = scalar_lea.vmem %s1, %s399
        $region60: #{tpu_custom_call.1} parent=51 // pred_fallthru
          _
        // Predicated region
        $region61: #{tpu_custom_call.1} parent=51 // pred_check
          %p401 = pneg %p157
        $region62: #{tpu_custom_call.1} parent=51 // pred_check_branch
          %403 = sbr.rel (%p401) target = $region64
        $region63: #{tpu_custom_call.1} parent=51 // pred_region
          %p404 = scmp.lt.s32.totalorder %s22, 1
          %s405 = scalar_select %p404, %s22, 1
          %s406 = scalar_lea.vmem %s5, %s405
        $region64: #{tpu_custom_call.1} parent=51 // pred_fallthru
          _
        // Predicated region
        $region65: #{tpu_custom_call.1} parent=51 // pred_check
          %p407 = pneg %p309
        $region66: #{tpu_custom_call.1} parent=51 // pred_check_branch
          %409 = sbr.rel (%p407) target = $region68
        $region67: #{tpu_custom_call.1} parent=51 // pred_region
          %p410 = scmp.lt.s32.totalorder %s22, 1
          %s411 = scalar_select %p410, %s22, 1
          %s412 = smul.addr %s411, 24
          %s413 = smul.addr %s412, 4
          %s414 = scalar_lea.vmem %s12, %s413
        $region68: #{tpu_custom_call.1} parent=51 // pred_fallthru
          _
      $region52: #{tpu_custom_call.1} parent=5 // pred_fallthru
        _
      %p415 = scmp.le.s32.totalorder 1, %s22
      %p416 = scmp.lt.s32.totalorder %s22, 3
      %p417 = pnand %p415, %p416
      %p418 = pneg %p417
      // Predicated region
      $region69: #{tpu_custom_call.1} parent=5 // pred_check
        _
      $region70: #{tpu_custom_call.1} parent=5 // pred_check_branch
        %420 = sbr.rel (%p417) target = $region72
      $region71: #{tpu_custom_call.1} parent=5 // pred_region
        %s421 = ssub.s32 %s22, 1
        %p422 = scmp.lt.s32.totalorder %s27, 1
        %s423 = scalar_select %p422, %s27, 1
        %s424 = smul.addr %s423, 54
        %s425 = smul.addr %s424, 4
        %s426 = scalar_lea.vmem %s0, %s425
        %p427 = pneg %p48
        %p428 = pneg %p45
        %p429 = scmp.lt.s32.totalorder %s27, 1
        %s430 = scalar_select %p429, %s27, 1
        %s431 = scalar_lea.vmem %s1, %s430
        %p432 = pneg %p74
        %p433 = pneg %p71
        %p434 = pneg %p95
        %p435 = pneg %p92
        %p436 = pneg %p116
        %p437 = pneg %p113
        %p438 = pneg %p137
        %p439 = pneg %p134
        %p440 = scmp.lt.s32.totalorder %s27, 1
        %s441 = scalar_select %p440, %s27, 1
        %s442 = scalar_lea.vmem %s5, %s441
        %p443 = pneg %p163
        %p444 = pneg %p160
        %p445 = pneg %p184
        %p446 = pneg %p181
        %p447 = pneg %p205
        %p448 = pneg %p202
        %p449 = pneg %p226
        %p450 = pneg %p223
        %p451 = pneg %p247
        %p452 = pneg %p244
        %p453 = pneg %p268
        %p454 = pneg %p265
        %p455 = pneg %p289
        %p456 = pneg %p286
        %p457 = scmp.lt.s32.totalorder %s27, 1
        %s458 = scalar_select %p457, %s27, 1
        %s459 = smul.addr %s458, 24
        %s460 = smul.addr %s459, 4
        %s461 = scalar_lea.vmem %s12, %s460
        %p462 = pneg %p315
        %p463 = pneg %p312
        %p464 = pneg %p341
        %p465 = pneg %p338
        %s466 = sand.u32 %s328, 1
        %s467 = scalar_lea.sflag [#allocation3], %s466
        %s468 = sand.u32 %s328, 1
        %s469 = smul.addr %s468, 64
        %s470 = scalar_lea.vmem [#allocation2], %s469
        %p471 = scmp.lt.s32.totalorder %s27, 1
        %s472 = scalar_select %p471, %s27, 1
        %s473 = smul.addr %s472, 54
        %s474 = smul.addr %s473, 4
        %s475 = scalar_lea.vmem %s0, %s474
        %p476 = scmp.lt.s32.totalorder %s27, 1
        %s477 = scalar_select %p476, %s27, 1
        %s478 = scalar_lea.vmem %s1, %s477
        %p479 = scmp.lt.s32.totalorder %s27, 1
        %s480 = scalar_select %p479, %s27, 1
        %s481 = scalar_lea.vmem %s5, %s480
        %p482 = scmp.lt.s32.totalorder %s27, 1
        %s483 = scalar_select %p482, %s27, 1
        %s484 = smul.addr %s483, 24
        %s485 = smul.addr %s484, 4
        %s486 = scalar_lea.vmem %s12, %s485
        %v488 = vld [vmem:[%s475] sm:$0xf]
        %v489 = vld [vmem:[%s475 + $0x4] sm:$0xf]
        %v490 = vld [vmem:[%s475 + $0x8] sm:$0x1]
        %v491 = vld [vmem:[%s475 + $0xc] sm:$0xf]
        %v492 = vld [vmem:[%s475 + $0x10] sm:$0xf]
        %v493 = vld [vmem:[%s475 + $0x14] sm:$0x1]
        %v494 = vld [vmem:[%s475 + $0x18] sm:$0xf]
        %v495 = vld [vmem:[%s475 + $0x1c] sm:$0xf]
        %v496 = vld [vmem:[%s475 + $0x20] sm:$0x1]
        %v497 = vld [vmem:[%s475 + $0x24] sm:$0xf]
        %v498 = vld [vmem:[%s475 + $0x28] sm:$0xf]
        %v499 = vld [vmem:[%s475 + $0x2c] sm:$0x1]
        %v500 = vld [vmem:[%s475 + $0x30] sm:$0xf]
        %v501 = vld [vmem:[%s475 + $0x34] sm:$0xf]
        %v502 = vld [vmem:[%s475 + $0x38] sm:$0x1]
        %v503 = vld [vmem:[%s475 + $0x3c] sm:$0xf]
        %v504 = vld [vmem:[%s475 + $0x40] sm:$0xf]
        %v505 = vld [vmem:[%s475 + $0x44] sm:$0x1]
        %v506 = vld [vmem:[%s475 + $0x48] sm:$0xf]
        %v507 = vld [vmem:[%s475 + $0x4c] sm:$0xf]
        %v508 = vld [vmem:[%s475 + $0x50] sm:$0x1]
        %v509 = vld [vmem:[%s475 + $0x54] sm:$0xf]
        %v510 = vld [vmem:[%s475 + $0x58] sm:$0xf]
        %v511 = vld [vmem:[%s475 + $0x5c] sm:$0x1]
        %v512 = vld [vmem:[%s475 + $0x60] sm:$0xf]
        %v513 = vld [vmem:[%s475 + $0x64] sm:$0xf]
        %v514 = vld [vmem:[%s475 + $0x68] sm:$0x1]
        %v515 = vld [vmem:[%s475 + $0x6c] sm:$0xf]
        %v516 = vld [vmem:[%s475 + $0x70] sm:$0xf]
        %v517 = vld [vmem:[%s475 + $0x74] sm:$0x1]
        %v518 = vld [vmem:[%s475 + $0x78] sm:$0xf]
        %v519 = vld [vmem:[%s475 + $0x7c] sm:$0xf]
        %v520 = vld [vmem:[%s475 + $0x80] sm:$0x1]
        %v521 = vld [vmem:[%s475 + $0x84] sm:$0xf]
        %v522 = vld [vmem:[%s475 + $0x88] sm:$0xf]
        %v523 = vld [vmem:[%s475 + $0x8c] sm:$0x1]
        %v524 = vld [vmem:[%s475 + $0x90] sm:$0xf]
        %v525 = vld [vmem:[%s475 + $0x94] sm:$0xf]
        %v526 = vld [vmem:[%s475 + $0x98] sm:$0x1]
        %v527 = vld [vmem:[%s475 + $0x9c] sm:$0xf]
        %v528 = vld [vmem:[%s475 + $0xa0] sm:$0xf]
        %v529 = vld [vmem:[%s475 + $0xa4] sm:$0x1]
        %v530 = vld [vmem:[%s475 + $0xa8] sm:$0xf]
        %v531 = vld [vmem:[%s475 + $0xac] sm:$0xf]
        %v532 = vld [vmem:[%s475 + $0xb0] sm:$0x1]
        %v533 = vld [vmem:[%s475 + $0xb4] sm:$0xf]
        %v534 = vld [vmem:[%s475 + $0xb8] sm:$0xf]
        %v535 = vld [vmem:[%s475 + $0xbc] sm:$0x1]
        %v536 = vld [vmem:[%s475 + $0xc0] sm:$0xf]
        %v537 = vld [vmem:[%s475 + $0xc4] sm:$0xf]
        %v538 = vld [vmem:[%s475 + $0xc8] sm:$0x1]
        %v539 = vld [vmem:[%s475 + $0xcc] sm:$0xf]
        %v540 = vld [vmem:[%s475 + $0xd0] sm:$0xf]
        %v541 = vld [vmem:[%s475 + $0xd4] sm:$0x1]
        %v542 = vunpack.c.l.bf16 %v488
        %v543 = vunpack.c.l.bf16 %v489
        %v544 = vunpack.c.l.bf16 %v490
        %v545 = vunpack.c.l.bf16 %v491
        %v546 = vunpack.c.l.bf16 %v492
        %v547 = vunpack.c.l.bf16 %v493
        %v548 = vunpack.c.l.bf16 %v494
        %v549 = vunpack.c.l.bf16 %v495
        %v550 = vunpack.c.l.bf16 %v496
        %v551 = vunpack.c.l.bf16 %v497
        %v552 = vunpack.c.l.bf16 %v498
        %v553 = vunpack.c.l.bf16 %v499
        %v554 = vunpack.c.l.bf16 %v500
        %v555 = vunpack.c.l.bf16 %v501
        %v556 = vunpack.c.l.bf16 %v502
        %v557 = vunpack.c.l.bf16 %v503
        %v558 = vunpack.c.l.bf16 %v504
        %v559 = vunpack.c.l.bf16 %v505
        %v560 = vunpack.c.l.bf16 %v506
        %v561 = vunpack.c.l.bf16 %v507
        %v562 = vunpack.c.l.bf16 %v508
        %v563 = vunpack.c.l.bf16 %v509
        %v564 = vunpack.c.l.bf16 %v510
        %v565 = vunpack.c.l.bf16 %v511
        %v566 = vunpack.c.l.bf16 %v512
        %v567 = vunpack.c.l.bf16 %v513
        %v568 = vunpack.c.l.bf16 %v514
        %v569 = vunpack.c.l.bf16 %v515
        %v570 = vunpack.c.l.bf16 %v516
        %v571 = vunpack.c.l.bf16 %v517
        %v572 = vunpack.c.l.bf16 %v518
        %v573 = vunpack.c.l.bf16 %v519
        %v574 = vunpack.c.l.bf16 %v520
        %v575 = vunpack.c.l.bf16 %v521
        %v576 = vunpack.c.l.bf16 %v522
        %v577 = vunpack.c.l.bf16 %v523
        %v578 = vunpack.c.l.bf16 %v524
        %v579 = vunpack.c.l.bf16 %v525
        %v580 = vunpack.c.l.bf16 %v526
        %v581 = vunpack.c.l.bf16 %v527
        %v582 = vunpack.c.l.bf16 %v528
        %v583 = vunpack.c.l.bf16 %v529
        %v584 = vunpack.c.l.bf16 %v530
        %v585 = vunpack.c.l.bf16 %v531
        %v586 = vunpack.c.l.bf16 %v532
        %v587 = vunpack.c.l.bf16 %v533
        %v588 = vunpack.c.l.bf16 %v534
        %v589 = vunpack.c.l.bf16 %v535
        %v590 = vunpack.c.l.bf16 %v536
        %v591 = vunpack.c.l.bf16 %v537
        %v592 = vunpack.c.l.bf16 %v538
        %v593 = vunpack.c.l.bf16 %v539
        %v594 = vunpack.c.l.bf16 %v540
        %v595 = vunpack.c.l.bf16 %v541
        %vm644 = vcmask 1046528
        %v645 = vrot.slane %v545, 1
        %v646 = vrot.slane %v546, 1
        %v647 = vsel %vm644, %v645, %v646
        %v648 = vrot.slane %v547, 1
        %v649 = vsel %vm644, %v646, %v648
        %v650 = vrot.slane %v548, 1
        %v651 = vrot.slane %v549, 1
        %v652 = vsel %vm644, %v650, %v651
        %v653 = vrot.slane %v550, 1
        %v654 = vsel %vm644, %v651, %v653
        %v655 = vrot.slane %v551, 1
        %v656 = vrot.slane %v552, 1
        %v657 = vsel %vm644, %v655, %v656
        %v658 = vrot.slane %v553, 1
        %v659 = vsel %vm644, %v656, %v658
        %v660 = vrot.slane %v554, 1
        %v661 = vrot.slane %v555, 1
        %v662 = vsel %vm644, %v660, %v661
        %v663 = vrot.slane %v556, 1
        %v664 = vsel %vm644, %v661, %v663
        %v665 = vrot.slane %v557, 1
        %v666 = vrot.slane %v558, 1
        %v667 = vsel %vm644, %v665, %v666
        %v668 = vrot.slane %v559, 1
        %v669 = vsel %vm644, %v666, %v668
        %v670 = vrot.slane %v560, 1
        %v671 = vrot.slane %v561, 1
        %v672 = vsel %vm644, %v670, %v671
        %v673 = vrot.slane %v562, 1
        %v674 = vsel %vm644, %v671, %v673
        %v675 = vrot.slane %v563, 1
        %v676 = vrot.slane %v564, 1
        %v677 = vsel %vm644, %v675, %v676
        %v678 = vrot.slane %v565, 1
        %v679 = vsel %vm644, %v676, %v678
        %v680 = vrot.slane %v566, 1
        %v681 = vrot.slane %v567, 1
        %v682 = vsel %vm644, %v680, %v681
        %v683 = vrot.slane %v568, 1
        %v684 = vsel %vm644, %v681, %v683
        %v685 = vrot.slane %v569, 1
        %v686 = vrot.slane %v570, 1
        %v687 = vsel %vm644, %v685, %v686
        %v688 = vrot.slane %v571, 1
        %v689 = vsel %vm644, %v686, %v688
        %v690 = vrot.slane %v572, 1
        %v691 = vrot.slane %v573, 1
        %v692 = vsel %vm644, %v690, %v691
        %v693 = vrot.slane %v574, 1
        %v694 = vsel %vm644, %v691, %v693
        %v695 = vrot.slane %v575, 1
        %v696 = vrot.slane %v576, 1
        %v697 = vsel %vm644, %v695, %v696
        %v698 = vrot.slane %v577, 1
        %v699 = vsel %vm644, %v696, %v698
        %v700 = vrot.slane %v578, 1
        %v701 = vrot.slane %v579, 1
        %v702 = vsel %vm644, %v700, %v701
        %v703 = vrot.slane %v580, 1
        %v704 = vsel %vm644, %v701, %v703
        %v705 = vrot.slane %v581, 1
        %v706 = vrot.slane %v582, 1
        %v707 = vsel %vm644, %v705, %v706
        %v708 = vrot.slane %v583, 1
        %v709 = vsel %vm644, %v706, %v708
        %v710 = vrot.slane %v584, 1
        %v711 = vrot.slane %v585, 1
        %v712 = vsel %vm644, %v710, %v711
        %v713 = vrot.slane %v586, 1
        %v714 = vsel %vm644, %v711, %v713
        %v715 = vrot.slane %v587, 1
        %v716 = vrot.slane %v588, 1
        %v717 = vsel %vm644, %v715, %v716
        %v718 = vrot.slane %v589, 1
        %v719 = vsel %vm644, %v716, %v718
        %v720 = vrot.slane %v590, 1
        %v721 = vrot.slane %v591, 1
        %v722 = vsel %vm644, %v720, %v721
        %v723 = vrot.slane %v592, 1
        %v724 = vsel %vm644, %v721, %v723
        %vm757 = vcmask 261120
        %v758 = vsel %vm757, %v647, 0.0
        %v759 = vsel %vm757, %v649, 0.0
        %v760 = vadd.f32 %v758, %v759
        %v761 = vsel %vm757, %v652, 0.0
        %v762 = vadd.f32 %v760, %v761
        %v763 = vsel %vm757, %v654, 0.0
        %v764 = vadd.f32 %v762, %v763
        %v765 = vsel %vm757, %v657, 0.0
        %v766 = vadd.f32 %v764, %v765
        %v767 = vsel %vm757, %v659, 0.0
        %v768 = vadd.f32 %v766, %v767
        %v769 = vsel %vm757, %v662, 0.0
        %v770 = vadd.f32 %v768, %v769
        %v771 = vsel %vm757, %v664, 0.0
        %v772 = vadd.f32 %v770, %v771
        %v773 = vsel %vm757, %v667, 0.0
        %v774 = vadd.f32 %v772, %v773
        %v775 = vsel %vm757, %v669, 0.0
        %v776 = vadd.f32 %v774, %v775
        %v777 = vsel %vm757, %v672, 0.0
        %v778 = vadd.f32 %v776, %v777
        %v779 = vsel %vm757, %v674, 0.0
        %v780 = vadd.f32 %v778, %v779
        %v781 = vsel %vm757, %v677, 0.0
        %v782 = vadd.f32 %v780, %v781
        %v783 = vsel %vm757, %v679, 0.0
        %v784 = vadd.f32 %v782, %v783
        %v785 = vsel %vm757, %v682, 0.0
        %v786 = vadd.f32 %v784, %v785
        %v787 = vsel %vm757, %v684, 0.0
        %v788 = vadd.f32 %v786, %v787
        %v789 = vsel %vm757, %v687, 0.0
        %v790 = vadd.f32 %v788, %v789
        %v791 = vsel %vm757, %v689, 0.0
        %v792 = vadd.f32 %v790, %v791
        %v793 = vsel %vm757, %v692, 0.0
        %v794 = vadd.f32 %v792, %v793
        %v795 = vsel %vm757, %v694, 0.0
        %v796 = vadd.f32 %v794, %v795
        %v797 = vsel %vm757, %v697, 0.0
        %v798 = vadd.f32 %v796, %v797
        %v799 = vsel %vm757, %v699, 0.0
        %v800 = vadd.f32 %v798, %v799
        %v801 = vsel %vm757, %v702, 0.0
        %v802 = vadd.f32 %v800, %v801
        %v803 = vsel %vm757, %v704, 0.0
        %v804 = vadd.f32 %v802, %v803
        %v805 = vsel %vm757, %v707, 0.0
        %v806 = vadd.f32 %v804, %v805
        %v807 = vsel %vm757, %v709, 0.0
        %v808 = vadd.f32 %v806, %v807
        %v809 = vsel %vm757, %v712, 0.0
        %v810 = vadd.f32 %v808, %v809
        %v811 = vsel %vm757, %v714, 0.0
        %v812 = vadd.f32 %v810, %v811
        %v813 = vsel %vm757, %v717, 0.0
        %v814 = vadd.f32 %v812, %v813
        %v815 = vsel %vm757, %v719, 0.0
        %v816 = vadd.f32 %v814, %v815
        %v817 = vsel %vm757, %v722, 0.0
        %v818 = vadd.f32 %v816, %v817
        %v819 = vsel %vm757, %v724, 0.0
        %v820 = vadd.f32 %v818, %v819
        %v821 = vrot.slane %v820, 4
        %v822 = vadd.f32 %v820, %v821
        %v823 = vrot.slane %v822, 2
        %v824 = vadd.f32 %v822, %v823
        %v825 = vrot.slane %v824, 1
        %v826 = vadd.f32 %v824, %v825
        %v827 = vrcp.pop 256.0
        %v828 = vmul.f32 256.0, %v827
        %v829 = vsub.f32 1.0, %v828
        %v830 = vmul.f32 %v827, %v829
        %v831 = vadd.f32 %v827, %v830
        %vm832 = vweird.f32 %v827
        %v833 = vsel %vm832, %v827, %v831
        %v834 = vmul.f32 %v826, %v833
        %v835 = vsub.f32 %v545, %v834
        %v836 = vsub.f32 %v546, %v834
        %v837 = vsub.f32 %v547, %v834
        %v838 = vsub.f32 %v548, %v834
        %v839 = vsub.f32 %v549, %v834
        %v840 = vsub.f32 %v550, %v834
        %v841 = vsub.f32 %v551, %v834
        %v842 = vsub.f32 %v552, %v834
        %v843 = vsub.f32 %v553, %v834
        %v844 = vsub.f32 %v554, %v834
        %v845 = vsub.f32 %v555, %v834
        %v846 = vsub.f32 %v556, %v834
        %v847 = vsub.f32 %v557, %v834
        %v848 = vsub.f32 %v558, %v834
        %v849 = vsub.f32 %v559, %v834
        %v850 = vsub.f32 %v560, %v834
        %v851 = vsub.f32 %v561, %v834
        %v852 = vsub.f32 %v562, %v834
        %v853 = vsub.f32 %v563, %v834
        %v854 = vsub.f32 %v564, %v834
        %v855 = vsub.f32 %v565, %v834
        %v856 = vsub.f32 %v566, %v834
        %v857 = vsub.f32 %v567, %v834
        %v858 = vsub.f32 %v568, %v834
        %v859 = vsub.f32 %v569, %v834
        %v860 = vsub.f32 %v570, %v834
        %v861 = vsub.f32 %v571, %v834
        %v862 = vsub.f32 %v572, %v834
        %v863 = vsub.f32 %v573, %v834
        %v864 = vsub.f32 %v574, %v834
        %v865 = vsub.f32 %v575, %v834
        %v866 = vsub.f32 %v576, %v834
        %v867 = vsub.f32 %v577, %v834
        %v868 = vsub.f32 %v578, %v834
        %v869 = vsub.f32 %v579, %v834
        %v870 = vsub.f32 %v580, %v834
        %v871 = vsub.f32 %v581, %v834
        %v872 = vsub.f32 %v582, %v834
        %v873 = vsub.f32 %v583, %v834
        %v874 = vsub.f32 %v584, %v834
        %v875 = vsub.f32 %v585, %v834
        %v876 = vsub.f32 %v586, %v834
        %v877 = vsub.f32 %v587, %v834
        %v878 = vsub.f32 %v588, %v834
        %v879 = vsub.f32 %v589, %v834
        %v880 = vsub.f32 %v590, %v834
        %v881 = vsub.f32 %v591, %v834
        %v882 = vsub.f32 %v592, %v834
        %v883 = vmul.f32 %v835, %v835
        %v884 = vmul.f32 %v836, %v836
        %v885 = vmul.f32 %v837, %v837
        %v886 = vmul.f32 %v838, %v838
        %v887 = vmul.f32 %v839, %v839
        %v888 = vmul.f32 %v840, %v840
        %v889 = vmul.f32 %v841, %v841
        %v890 = vmul.f32 %v842, %v842
        %v891 = vmul.f32 %v843, %v843
        %v892 = vmul.f32 %v844, %v844
        %v893 = vmul.f32 %v845, %v845
        %v894 = vmul.f32 %v846, %v846
        %v895 = vmul.f32 %v847, %v847
        %v896 = vmul.f32 %v848, %v848
        %v897 = vmul.f32 %v849, %v849
        %v898 = vmul.f32 %v850, %v850
        %v899 = vmul.f32 %v851, %v851
        %v900 = vmul.f32 %v852, %v852
        %v901 = vmul.f32 %v853, %v853
        %v902 = vmul.f32 %v854, %v854
        %v903 = vmul.f32 %v855, %v855
        %v904 = vmul.f32 %v856, %v856
        %v905 = vmul.f32 %v857, %v857
        %v906 = vmul.f32 %v858, %v858
        %v907 = vmul.f32 %v859, %v859
        %v908 = vmul.f32 %v860, %v860
        %v909 = vmul.f32 %v861, %v861
        %v910 = vmul.f32 %v862, %v862
        %v911 = vmul.f32 %v863, %v863
        %v912 = vmul.f32 %v864, %v864
        %v913 = vmul.f32 %v865, %v865
        %v914 = vmul.f32 %v866, %v866
        %v915 = vmul.f32 %v867, %v867
        %v916 = vmul.f32 %v868, %v868
        %v917 = vmul.f32 %v869, %v869
        %v918 = vmul.f32 %v870, %v870
        %v919 = vmul.f32 %v871, %v871
        %v920 = vmul.f32 %v872, %v872
        %v921 = vmul.f32 %v873, %v873
        %v922 = vmul.f32 %v874, %v874
        %v923 = vmul.f32 %v875, %v875
        %v924 = vmul.f32 %v876, %v876
        %v925 = vmul.f32 %v877, %v877
        %v926 = vmul.f32 %v878, %v878
        %v927 = vmul.f32 %v879, %v879
        %v928 = vmul.f32 %v880, %v880
        %v929 = vmul.f32 %v881, %v881
        %v930 = vmul.f32 %v882, %v882
        %v979 = vrot.slane %v883, 1
        %v980 = vrot.slane %v884, 1
        %v981 = vsel %vm644, %v979, %v980
        %v982 = vrot.slane %v885, 1
        %v983 = vsel %vm644, %v980, %v982
        %v984 = vrot.slane %v886, 1
        %v985 = vrot.slane %v887, 1
        %v986 = vsel %vm644, %v984, %v985
        %v987 = vrot.slane %v888, 1
        %v988 = vsel %vm644, %v985, %v987
        %v989 = vrot.slane %v889, 1
        %v990 = vrot.slane %v890, 1
        %v991 = vsel %vm644, %v989, %v990
        %v992 = vrot.slane %v891, 1
        %v993 = vsel %vm644, %v990, %v992
        %v994 = vrot.slane %v892, 1
        %v995 = vrot.slane %v893, 1
        %v996 = vsel %vm644, %v994, %v995
        %v997 = vrot.slane %v894, 1
        %v998 = vsel %vm644, %v995, %v997
        %v999 = vrot.slane %v895, 1
        %v1000 = vrot.slane %v896, 1
        %v1001 = vsel %vm644, %v999, %v1000
        %v1002 = vrot.slane %v897, 1
        %v1003 = vsel %vm644, %v1000, %v1002
        %v1004 = vrot.slane %v898, 1
        %v1005 = vrot.slane %v899, 1
        %v1006 = vsel %vm644, %v1004, %v1005
        %v1007 = vrot.slane %v900, 1
        %v1008 = vsel %vm644, %v1005, %v1007
        %v1009 = vrot.slane %v901, 1
        %v1010 = vrot.slane %v902, 1
        %v1011 = vsel %vm644, %v1009, %v1010
        %v1012 = vrot.slane %v903, 1
        %v1013 = vsel %vm644, %v1010, %v1012
        %v1014 = vrot.slane %v904, 1
        %v1015 = vrot.slane %v905, 1
        %v1016 = vsel %vm644, %v1014, %v1015
        %v1017 = vrot.slane %v906, 1
        %v1018 = vsel %vm644, %v1015, %v1017
        %v1019 = vrot.slane %v907, 1
        %v1020 = vrot.slane %v908, 1
        %v1021 = vsel %vm644, %v1019, %v1020
        %v1022 = vrot.slane %v909, 1
        %v1023 = vsel %vm644, %v1020, %v1022
        %v1024 = vrot.slane %v910, 1
        %v1025 = vrot.slane %v911, 1
        %v1026 = vsel %vm644, %v1024, %v1025
        %v1027 = vrot.slane %v912, 1
        %v1028 = vsel %vm644, %v1025, %v1027
        %v1029 = vrot.slane %v913, 1
        %v1030 = vrot.slane %v914, 1
        %v1031 = vsel %vm644, %v1029, %v1030
        %v1032 = vrot.slane %v915, 1
        %v1033 = vsel %vm644, %v1030, %v1032
        %v1034 = vrot.slane %v916, 1
        %v1035 = vrot.slane %v917, 1
        %v1036 = vsel %vm644, %v1034, %v1035
        %v1037 = vrot.slane %v918, 1
        %v1038 = vsel %vm644, %v1035, %v1037
        %v1039 = vrot.slane %v919, 1
        %v1040 = vrot.slane %v920, 1
        %v1041 = vsel %vm644, %v1039, %v1040
        %v1042 = vrot.slane %v921, 1
        %v1043 = vsel %vm644, %v1040, %v1042
        %v1044 = vrot.slane %v922, 1
        %v1045 = vrot.slane %v923, 1
        %v1046 = vsel %vm644, %v1044, %v1045
        %v1047 = vrot.slane %v924, 1
        %v1048 = vsel %vm644, %v1045, %v1047
        %v1049 = vrot.slane %v925, 1
        %v1050 = vrot.slane %v926, 1
        %v1051 = vsel %vm644, %v1049, %v1050
        %v1052 = vrot.slane %v927, 1
        %v1053 = vsel %vm644, %v1050, %v1052
        %v1054 = vrot.slane %v928, 1
        %v1055 = vrot.slane %v929, 1
        %v1056 = vsel %vm644, %v1054, %v1055
        %v1057 = vrot.slane %v930, 1
        %v1058 = vsel %vm644, %v1055, %v1057
        %v1091 = vsel %vm757, %v981, 0.0
        %v1092 = vsel %vm757, %v983, 0.0
        %v1093 = vadd.f32 %v1091, %v1092
        %v1094 = vsel %vm757, %v986, 0.0
        %v1095 = vadd.f32 %v1093, %v1094
        %v1096 = vsel %vm757, %v988, 0.0
        %v1097 = vadd.f32 %v1095, %v1096
        %v1098 = vsel %vm757, %v991, 0.0
        %v1099 = vadd.f32 %v1097, %v1098
        %v1100 = vsel %vm757, %v993, 0.0
        %v1101 = vadd.f32 %v1099, %v1100
        %v1102 = vsel %vm757, %v996, 0.0
        %v1103 = vadd.f32 %v1101, %v1102
        %v1104 = vsel %vm757, %v998, 0.0
        %v1105 = vadd.f32 %v1103, %v1104
        %v1106 = vsel %vm757, %v1001, 0.0
        %v1107 = vadd.f32 %v1105, %v1106
        %v1108 = vsel %vm757, %v1003, 0.0
        %v1109 = vadd.f32 %v1107, %v1108
        %v1110 = vsel %vm757, %v1006, 0.0
        %v1111 = vadd.f32 %v1109, %v1110
        %v1112 = vsel %vm757, %v1008, 0.0
        %v1113 = vadd.f32 %v1111, %v1112
        %v1114 = vsel %vm757, %v1011, 0.0
        %v1115 = vadd.f32 %v1113, %v1114
        %v1116 = vsel %vm757, %v1013, 0.0
        %v1117 = vadd.f32 %v1115, %v1116
        %v1118 = vsel %vm757, %v1016, 0.0
        %v1119 = vadd.f32 %v1117, %v1118
        %v1120 = vsel %vm757, %v1018, 0.0
        %v1121 = vadd.f32 %v1119, %v1120
        %v1122 = vsel %vm757, %v1021, 0.0
        %v1123 = vadd.f32 %v1121, %v1122
        %v1124 = vsel %vm757, %v1023, 0.0
        %v1125 = vadd.f32 %v1123, %v1124
        %v1126 = vsel %vm757, %v1026, 0.0
        %v1127 = vadd.f32 %v1125, %v1126
        %v1128 = vsel %vm757, %v1028, 0.0
        %v1129 = vadd.f32 %v1127, %v1128
        %v1130 = vsel %vm757, %v1031, 0.0
        %v1131 = vadd.f32 %v1129, %v1130
        %v1132 = vsel %vm757, %v1033, 0.0
        %v1133 = vadd.f32 %v1131, %v1132
        %v1134 = vsel %vm757, %v1036, 0.0
        %v1135 = vadd.f32 %v1133, %v1134
        %v1136 = vsel %vm757, %v1038, 0.0
        %v1137 = vadd.f32 %v1135, %v1136
        %v1138 = vsel %vm757, %v1041, 0.0
        %v1139 = vadd.f32 %v1137, %v1138
        %v1140 = vsel %vm757, %v1043, 0.0
        %v1141 = vadd.f32 %v1139, %v1140
        %v1142 = vsel %vm757, %v1046, 0.0
        %v1143 = vadd.f32 %v1141, %v1142
        %v1144 = vsel %vm757, %v1048, 0.0
        %v1145 = vadd.f32 %v1143, %v1144
        %v1146 = vsel %vm757, %v1051, 0.0
        %v1147 = vadd.f32 %v1145, %v1146
        %v1148 = vsel %vm757, %v1053, 0.0
        %v1149 = vadd.f32 %v1147, %v1148
        %v1150 = vsel %vm757, %v1056, 0.0
        %v1151 = vadd.f32 %v1149, %v1150
        %v1152 = vsel %vm757, %v1058, 0.0
        %v1153 = vadd.f32 %v1151, %v1152
        %v1154 = vrot.slane %v1153, 4
        %v1155 = vadd.f32 %v1153, %v1154
        %v1156 = vrot.slane %v1155, 2
        %v1157 = vadd.f32 %v1155, %v1156
        %v1158 = vrot.slane %v1157, 1
        %v1159 = vadd.f32 %v1157, %v1158
        %v1160 = vmul.f32 %v1159, %v833
        %v1161 = vsub.f32 %v542, %v834
        %v1162 = vsub.f32 %v543, %v834
        %v1163 = vsub.f32 %v544, %v834
        %v1164 = vsub.f32 %v593, %v834
        %v1165 = vsub.f32 %v594, %v834
        %v1166 = vsub.f32 %v595, %v834
        %v1167 = vadd.f32 %v1160, 1e-05
        %v1168 = vrsqrt.pop %v1167
        %v1169 = vmul.f32 %v1168, %v1167
        %v1170 = vmul.f32 %v1169, %v1168
        %v1171 = vmul.f32 0.5, %v1170
        %v1172 = vsub.f32 1.5, %v1171
        %v1173 = vmul.f32 %v1168, %v1172
        %vm1174 = vweird.f32 %v1167
        %vm1175 = vweird.f32 %v1168
        %vm1176 = vmor %vm1174, %vm1175
        %v1177 = vsel %vm1176, %v1168, %v1173
        %v1178 = vmul.f32 %v1161, %v1177
        %v1179 = vmul.f32 %v1162, %v1177
        %v1180 = vmul.f32 %v1163, %v1177
        %v1181 = vmul.f32 %v835, %v1177
        %v1182 = vmul.f32 %v836, %v1177
        %v1183 = vmul.f32 %v837, %v1177
        %v1184 = vmul.f32 %v838, %v1177
        %v1185 = vmul.f32 %v839, %v1177
        %v1186 = vmul.f32 %v840, %v1177
        %v1187 = vmul.f32 %v841, %v1177
        %v1188 = vmul.f32 %v842, %v1177
        %v1189 = vmul.f32 %v843, %v1177
        %v1190 = vmul.f32 %v844, %v1177
        %v1191 = vmul.f32 %v845, %v1177
        %v1192 = vmul.f32 %v846, %v1177
        %v1193 = vmul.f32 %v847, %v1177
        %v1194 = vmul.f32 %v848, %v1177
        %v1195 = vmul.f32 %v849, %v1177
        %v1196 = vmul.f32 %v850, %v1177
        %v1197 = vmul.f32 %v851, %v1177
        %v1198 = vmul.f32 %v852, %v1177
        %v1199 = vmul.f32 %v853, %v1177
        %v1200 = vmul.f32 %v854, %v1177
        %v1201 = vmul.f32 %v855, %v1177
        %v1202 = vmul.f32 %v856, %v1177
        %v1203 = vmul.f32 %v857, %v1177
        %v1204 = vmul.f32 %v858, %v1177
        %v1205 = vmul.f32 %v859, %v1177
        %v1206 = vmul.f32 %v860, %v1177
        %v1207 = vmul.f32 %v861, %v1177
        %v1208 = vmul.f32 %v862, %v1177
        %v1209 = vmul.f32 %v863, %v1177
        %v1210 = vmul.f32 %v864, %v1177
        %v1211 = vmul.f32 %v865, %v1177
        %v1212 = vmul.f32 %v866, %v1177
        %v1213 = vmul.f32 %v867, %v1177
        %v1214 = vmul.f32 %v868, %v1177
        %v1215 = vmul.f32 %v869, %v1177
        %v1216 = vmul.f32 %v870, %v1177
        %v1217 = vmul.f32 %v871, %v1177
        %v1218 = vmul.f32 %v872, %v1177
        %v1219 = vmul.f32 %v873, %v1177
        %v1220 = vmul.f32 %v874, %v1177
        %v1221 = vmul.f32 %v875, %v1177
        %v1222 = vmul.f32 %v876, %v1177
        %v1223 = vmul.f32 %v877, %v1177
        %v1224 = vmul.f32 %v878, %v1177
        %v1225 = vmul.f32 %v879, %v1177
        %v1226 = vmul.f32 %v880, %v1177
        %v1227 = vmul.f32 %v881, %v1177
        %v1228 = vmul.f32 %v882, %v1177
        %v1229 = vmul.f32 %v1164, %v1177
        %v1230 = vmul.f32 %v1165, %v1177
        %v1231 = vmul.f32 %v1166, %v1177
        %v1232 = vld [vmem:[%s478] sm:$0x1]
        %v1234 = vperm.slane %v1232, 0
        %v1236 = vadd.f32 %v1178, %v1234
        %v1237 = vadd.f32 %v1179, %v1234
        %v1238 = vadd.f32 %v1180, %v1234
        %v1239 = vadd.f32 %v1181, %v1234
        %v1240 = vadd.f32 %v1182, %v1234
        %v1241 = vadd.f32 %v1183, %v1234
        %v1242 = vadd.f32 %v1184, %v1234
        %v1243 = vadd.f32 %v1185, %v1234
        %v1244 = vadd.f32 %v1186, %v1234
        %v1245 = vadd.f32 %v1187, %v1234
        %v1246 = vadd.f32 %v1188, %v1234
        %v1247 = vadd.f32 %v1189, %v1234
        %v1248 = vadd.f32 %v1190, %v1234
        %v1249 = vadd.f32 %v1191, %v1234
        %v1250 = vadd.f32 %v1192, %v1234
        %v1251 = vadd.f32 %v1193, %v1234
        %v1252 = vadd.f32 %v1194, %v1234
        %v1253 = vadd.f32 %v1195, %v1234
        %v1254 = vadd.f32 %v1196, %v1234
        %v1255 = vadd.f32 %v1197, %v1234
        %v1256 = vadd.f32 %v1198, %v1234
        %v1257 = vadd.f32 %v1199, %v1234
        %v1258 = vadd.f32 %v1200, %v1234
        %v1259 = vadd.f32 %v1201, %v1234
        %v1260 = vadd.f32 %v1202, %v1234
        %v1261 = vadd.f32 %v1203, %v1234
        %v1262 = vadd.f32 %v1204, %v1234
        %v1263 = vadd.f32 %v1205, %v1234
        %v1264 = vadd.f32 %v1206, %v1234
        %v1265 = vadd.f32 %v1207, %v1234
        %v1266 = vadd.f32 %v1208, %v1234
        %v1267 = vadd.f32 %v1209, %v1234
        %v1268 = vadd.f32 %v1210, %v1234
        %v1269 = vadd.f32 %v1211, %v1234
        %v1270 = vadd.f32 %v1212, %v1234
        %v1271 = vadd.f32 %v1213, %v1234
        %v1272 = vadd.f32 %v1214, %v1234
        %v1273 = vadd.f32 %v1215, %v1234
        %v1274 = vadd.f32 %v1216, %v1234
        %v1275 = vadd.f32 %v1217, %v1234
        %v1276 = vadd.f32 %v1218, %v1234
        %v1277 = vadd.f32 %v1219, %v1234
        %v1278 = vadd.f32 %v1220, %v1234
        %v1279 = vadd.f32 %v1221, %v1234
        %v1280 = vadd.f32 %v1222, %v1234
        %v1281 = vadd.f32 %v1223, %v1234
        %v1282 = vadd.f32 %v1224, %v1234
        %v1283 = vadd.f32 %v1225, %v1234
        %v1284 = vadd.f32 %v1226, %v1234
        %v1285 = vadd.f32 %v1227, %v1234
        %v1286 = vadd.f32 %v1228, %v1234
        %v1287 = vadd.f32 %v1229, %v1234
        %v1288 = vadd.f32 %v1230, %v1234
        %v1289 = vadd.f32 %v1231, %v1234
        %v1290 = vld [vmem:[%s2] sm:$0x1]
        %v1292 = vperm.slane %v1290, 0
        %v1294 = vmul.f32 %v1236, %v1292
        %v1295 = vmul.f32 %v1237, %v1292
        %v1296 = vmul.f32 %v1238, %v1292
        %v1297 = vmul.f32 %v1239, %v1292
        %v1298 = vmul.f32 %v1240, %v1292
        %v1299 = vmul.f32 %v1241, %v1292
        %v1300 = vmul.f32 %v1242, %v1292
        %v1301 = vmul.f32 %v1243, %v1292
        %v1302 = vmul.f32 %v1244, %v1292
        %v1303 = vmul.f32 %v1245, %v1292
        %v1304 = vmul.f32 %v1246, %v1292
        %v1305 = vmul.f32 %v1247, %v1292
        %v1306 = vmul.f32 %v1248, %v1292
        %v1307 = vmul.f32 %v1249, %v1292
        %v1308 = vmul.f32 %v1250, %v1292
        %v1309 = vmul.f32 %v1251, %v1292
        %v1310 = vmul.f32 %v1252, %v1292
        %v1311 = vmul.f32 %v1253, %v1292
        %v1312 = vmul.f32 %v1254, %v1292
        %v1313 = vmul.f32 %v1255, %v1292
        %v1314 = vmul.f32 %v1256, %v1292
        %v1315 = vmul.f32 %v1257, %v1292
        %v1316 = vmul.f32 %v1258, %v1292
        %v1317 = vmul.f32 %v1259, %v1292
        %v1318 = vmul.f32 %v1260, %v1292
        %v1319 = vmul.f32 %v1261, %v1292
        %v1320 = vmul.f32 %v1262, %v1292
        %v1321 = vmul.f32 %v1263, %v1292
        %v1322 = vmul.f32 %v1264, %v1292
        %v1323 = vmul.f32 %v1265, %v1292
        %v1324 = vmul.f32 %v1266, %v1292
        %v1325 = vmul.f32 %v1267, %v1292
        %v1326 = vmul.f32 %v1268, %v1292
        %v1327 = vmul.f32 %v1269, %v1292
        %v1328 = vmul.f32 %v1270, %v1292
        %v1329 = vmul.f32 %v1271, %v1292
        %v1330 = vmul.f32 %v1272, %v1292
        %v1331 = vmul.f32 %v1273, %v1292
        %v1332 = vmul.f32 %v1274, %v1292
        %v1333 = vmul.f32 %v1275, %v1292
        %v1334 = vmul.f32 %v1276, %v1292
        %v1335 = vmul.f32 %v1277, %v1292
        %v1336 = vmul.f32 %v1278, %v1292
        %v1337 = vmul.f32 %v1279, %v1292
        %v1338 = vmul.f32 %v1280, %v1292
        %v1339 = vmul.f32 %v1281, %v1292
        %v1340 = vmul.f32 %v1282, %v1292
        %v1341 = vmul.f32 %v1283, %v1292
        %v1342 = vmul.f32 %v1284, %v1292
        %v1343 = vmul.f32 %v1285, %v1292
        %v1344 = vmul.f32 %v1286, %v1292
        %v1345 = vmul.f32 %v1287, %v1292
        %v1346 = vmul.f32 %v1288, %v1292
        %v1347 = vmul.f32 %v1289, %v1292
        %v1348 = vld [vmem:[%s3] sm:$0x1]
        %v1350 = vperm.slane %v1348, 0
        %v1352 = vadd.f32 %v1294, %v1350
        %v1353 = vadd.f32 %v1295, %v1350
        %v1354 = vadd.f32 %v1296, %v1350
        %v1355 = vadd.f32 %v1297, %v1350
        %v1356 = vadd.f32 %v1298, %v1350
        %v1357 = vadd.f32 %v1299, %v1350
        %v1358 = vadd.f32 %v1300, %v1350
        %v1359 = vadd.f32 %v1301, %v1350
        %v1360 = vadd.f32 %v1302, %v1350
        %v1361 = vadd.f32 %v1303, %v1350
        %v1362 = vadd.f32 %v1304, %v1350
        %v1363 = vadd.f32 %v1305, %v1350
        %v1364 = vadd.f32 %v1306, %v1350
        %v1365 = vadd.f32 %v1307, %v1350
        %v1366 = vadd.f32 %v1308, %v1350
        %v1367 = vadd.f32 %v1309, %v1350
        %v1368 = vadd.f32 %v1310, %v1350
        %v1369 = vadd.f32 %v1311, %v1350
        %v1370 = vadd.f32 %v1312, %v1350
        %v1371 = vadd.f32 %v1313, %v1350
        %v1372 = vadd.f32 %v1314, %v1350
        %v1373 = vadd.f32 %v1315, %v1350
        %v1374 = vadd.f32 %v1316, %v1350
        %v1375 = vadd.f32 %v1317, %v1350
        %v1376 = vadd.f32 %v1318, %v1350
        %v1377 = vadd.f32 %v1319, %v1350
        %v1378 = vadd.f32 %v1320, %v1350
        %v1379 = vadd.f32 %v1321, %v1350
        %v1380 = vadd.f32 %v1322, %v1350
        %v1381 = vadd.f32 %v1323, %v1350
        %v1382 = vadd.f32 %v1324, %v1350
        %v1383 = vadd.f32 %v1325, %v1350
        %v1384 = vadd.f32 %v1326, %v1350
        %v1385 = vadd.f32 %v1327, %v1350
        %v1386 = vadd.f32 %v1328, %v1350
        %v1387 = vadd.f32 %v1329, %v1350
        %v1388 = vadd.f32 %v1330, %v1350
        %v1389 = vadd.f32 %v1331, %v1350
        %v1390 = vadd.f32 %v1332, %v1350
        %v1391 = vadd.f32 %v1333, %v1350
        %v1392 = vadd.f32 %v1334, %v1350
        %v1393 = vadd.f32 %v1335, %v1350
        %v1394 = vadd.f32 %v1336, %v1350
        %v1395 = vadd.f32 %v1337, %v1350
        %v1396 = vadd.f32 %v1338, %v1350
        %v1397 = vadd.f32 %v1339, %v1350
        %v1398 = vadd.f32 %v1340, %v1350
        %v1399 = vadd.f32 %v1341, %v1350
        %v1400 = vadd.f32 %v1342, %v1350
        %v1401 = vadd.f32 %v1343, %v1350
        %v1402 = vadd.f32 %v1344, %v1350
        %v1403 = vadd.f32 %v1345, %v1350
        %v1404 = vadd.f32 %v1346, %v1350
        %v1405 = vadd.f32 %v1347, %v1350
        %v1406 = vmax.f32 %v1352, 0.0
        %v1407 = vmax.f32 %v1353, 0.0
        %v1408 = vmax.f32 %v1354, 0.0
        %v1409 = vmax.f32 %v1355, 0.0
        %v1410 = vmax.f32 %v1356, 0.0
        %v1411 = vmax.f32 %v1357, 0.0
        %v1412 = vmax.f32 %v1358, 0.0
        %v1413 = vmax.f32 %v1359, 0.0
        %v1414 = vmax.f32 %v1360, 0.0
        %v1415 = vmax.f32 %v1361, 0.0
        %v1416 = vmax.f32 %v1362, 0.0
        %v1417 = vmax.f32 %v1363, 0.0
        %v1418 = vmax.f32 %v1364, 0.0
        %v1419 = vmax.f32 %v1365, 0.0
        %v1420 = vmax.f32 %v1366, 0.0
        %v1421 = vmax.f32 %v1367, 0.0
        %v1422 = vmax.f32 %v1368, 0.0
        %v1423 = vmax.f32 %v1369, 0.0
        %v1424 = vmax.f32 %v1370, 0.0
        %v1425 = vmax.f32 %v1371, 0.0
        %v1426 = vmax.f32 %v1372, 0.0
        %v1427 = vmax.f32 %v1373, 0.0
        %v1428 = vmax.f32 %v1374, 0.0
        %v1429 = vmax.f32 %v1375, 0.0
        %v1430 = vmax.f32 %v1376, 0.0
        %v1431 = vmax.f32 %v1377, 0.0
        %v1432 = vmax.f32 %v1378, 0.0
        %v1433 = vmax.f32 %v1379, 0.0
        %v1434 = vmax.f32 %v1380, 0.0
        %v1435 = vmax.f32 %v1381, 0.0
        %v1436 = vmax.f32 %v1382, 0.0
        %v1437 = vmax.f32 %v1383, 0.0
        %v1438 = vmax.f32 %v1384, 0.0
        %v1439 = vmax.f32 %v1385, 0.0
        %v1440 = vmax.f32 %v1386, 0.0
        %v1441 = vmax.f32 %v1387, 0.0
        %v1442 = vmax.f32 %v1388, 0.0
        %v1443 = vmax.f32 %v1389, 0.0
        %v1444 = vmax.f32 %v1390, 0.0
        %v1445 = vmax.f32 %v1391, 0.0
        %v1446 = vmax.f32 %v1392, 0.0
        %v1447 = vmax.f32 %v1393, 0.0
        %v1448 = vmax.f32 %v1394, 0.0
        %v1449 = vmax.f32 %v1395, 0.0
        %v1450 = vmax.f32 %v1396, 0.0
        %v1451 = vmax.f32 %v1397, 0.0
        %v1452 = vmax.f32 %v1398, 0.0
        %v1453 = vmax.f32 %v1399, 0.0
        %v1454 = vmax.f32 %v1400, 0.0
        %v1455 = vmax.f32 %v1401, 0.0
        %v1456 = vmax.f32 %v1402, 0.0
        %v1457 = vmax.f32 %v1403, 0.0
        %v1458 = vmax.f32 %v1404, 0.0
        %v1459 = vmax.f32 %v1405, 0.0
        %v1460 = vpack.c.bf16 %v1406, %v1406
        %v1461 = vpack.c.bf16 %v1407, %v1407
        %v1462 = vpack.c.bf16 %v1408, %v1408
        %v1463 = vpack.c.bf16 %v1409, %v1409
        %v1464 = vpack.c.bf16 %v1410, %v1410
        %v1465 = vpack.c.bf16 %v1411, %v1411
        %v1466 = vpack.c.bf16 %v1412, %v1412
        %v1467 = vpack.c.bf16 %v1413, %v1413
        %v1468 = vpack.c.bf16 %v1414, %v1414
        %v1469 = vpack.c.bf16 %v1415, %v1415
        %v1470 = vpack.c.bf16 %v1416, %v1416
        %v1471 = vpack.c.bf16 %v1417, %v1417
        %v1472 = vpack.c.bf16 %v1418, %v1418
        %v1473 = vpack.c.bf16 %v1419, %v1419
        %v1474 = vpack.c.bf16 %v1420, %v1420
        %v1475 = vpack.c.bf16 %v1421, %v1421
        %v1476 = vpack.c.bf16 %v1422, %v1422
        %v1477 = vpack.c.bf16 %v1423, %v1423
        %v1478 = vpack.c.bf16 %v1424, %v1424
        %v1479 = vpack.c.bf16 %v1425, %v1425
        %v1480 = vpack.c.bf16 %v1426, %v1426
        %v1481 = vpack.c.bf16 %v1427, %v1427
        %v1482 = vpack.c.bf16 %v1428, %v1428
        %v1483 = vpack.c.bf16 %v1429, %v1429
        %v1484 = vpack.c.bf16 %v1430, %v1430
        %v1485 = vpack.c.bf16 %v1431, %v1431
        %v1486 = vpack.c.bf16 %v1432, %v1432
        %v1487 = vpack.c.bf16 %v1433, %v1433
        %v1488 = vpack.c.bf16 %v1434, %v1434
        %v1489 = vpack.c.bf16 %v1435, %v1435
        %v1490 = vpack.c.bf16 %v1436, %v1436
        %v1491 = vpack.c.bf16 %v1437, %v1437
        %v1492 = vpack.c.bf16 %v1438, %v1438
        %v1493 = vpack.c.bf16 %v1439, %v1439
        %v1494 = vpack.c.bf16 %v1440, %v1440
        %v1495 = vpack.c.bf16 %v1441, %v1441
        %v1496 = vpack.c.bf16 %v1442, %v1442
        %v1497 = vpack.c.bf16 %v1443, %v1443
        %v1498 = vpack.c.bf16 %v1444, %v1444
        %v1499 = vpack.c.bf16 %v1445, %v1445
        %v1500 = vpack.c.bf16 %v1446, %v1446
        %v1501 = vpack.c.bf16 %v1447, %v1447
        %v1502 = vpack.c.bf16 %v1448, %v1448
        %v1503 = vpack.c.bf16 %v1449, %v1449
        %v1504 = vpack.c.bf16 %v1450, %v1450
        %v1505 = vpack.c.bf16 %v1451, %v1451
        %v1506 = vpack.c.bf16 %v1452, %v1452
        %v1507 = vpack.c.bf16 %v1453, %v1453
        %v1508 = vpack.c.bf16 %v1454, %v1454
        %v1509 = vpack.c.bf16 %v1455, %v1455
        %v1510 = vpack.c.bf16 %v1456, %v1456
        %v1511 = vpack.c.bf16 %v1457, %v1457
        %v1512 = vpack.c.bf16 %v1458, %v1458
        %v1513 = vpack.c.bf16 %v1459, %v1459
        %vm1514 = vsmask.f32 3328
        %vm1515 = vsmask.f32 7440
        %vm1516 = vmor %vm1514, %vm1515
        %v1518 = vshrl.u32 %v1460, 16
        %v1520 = vrot.slane %v1518, 4
        %v1521 = vshll.u32 %v1460, 16
        %v1523 = vrot.slane %v1521, 5
        %v1524 = vor.u32 %v1520, %v1523
        %v1525 = vrot.slane %v1524, 4
        %v1527 = vshll.u32 %v1461, 16
        %v1529 = vrot.slane %v1527, 5
        %v1530 = vsel %vm1516, %v1525, %v1529
        %v1531 = vshrl.u32 %v1461, 16
        %v1533 = vrot.slane %v1531, 4
        %v1534 = vor.u32 %v1533, %v1529
        %v1535 = vrot.slane %v1534, 4
        %v1537 = vshll.u32 %v1462, 16
        %v1539 = vrot.slane %v1537, 5
        %v1540 = vsel %vm1516, %v1535, %v1539
        %v1542 = vshrl.u32 %v1463, 16
        %v1544 = vrot.slane %v1542, 4
        %v1545 = vshll.u32 %v1463, 16
        %v1547 = vrot.slane %v1545, 5
        %v1548 = vor.u32 %v1544, %v1547
        %v1549 = vrot.slane %v1548, 4
        %v1551 = vshll.u32 %v1464, 16
        %v1553 = vrot.slane %v1551, 5
        %v1554 = vsel %vm1516, %v1549, %v1553
        %v1555 = vshrl.u32 %v1464, 16
        %v1557 = vrot.slane %v1555, 4
        %v1558 = vor.u32 %v1557, %v1553
        %v1559 = vrot.slane %v1558, 4
        %v1561 = vshll.u32 %v1465, 16
        %v1563 = vrot.slane %v1561, 5
        %v1564 = vsel %vm1516, %v1559, %v1563
        %v1566 = vshrl.u32 %v1466, 16
        %v1568 = vrot.slane %v1566, 4
        %v1569 = vshll.u32 %v1466, 16
        %v1571 = vrot.slane %v1569, 5
        %v1572 = vor.u32 %v1568, %v1571
        %v1573 = vrot.slane %v1572, 4
        %v1575 = vshll.u32 %v1467, 16
        %v1577 = vrot.slane %v1575, 5
        %v1578 = vsel %vm1516, %v1573, %v1577
        %v1579 = vshrl.u32 %v1467, 16
        %v1581 = vrot.slane %v1579, 4
        %v1582 = vor.u32 %v1581, %v1577
        %v1583 = vrot.slane %v1582, 4
        %v1585 = vshll.u32 %v1468, 16
        %v1587 = vrot.slane %v1585, 5
        %v1588 = vsel %vm1516, %v1583, %v1587
        %v1590 = vshrl.u32 %v1469, 16
        %v1592 = vrot.slane %v1590, 4
        %v1593 = vshll.u32 %v1469, 16
        %v1595 = vrot.slane %v1593, 5
        %v1596 = vor.u32 %v1592, %v1595
        %v1597 = vrot.slane %v1596, 4
        %v1599 = vshll.u32 %v1470, 16
        %v1601 = vrot.slane %v1599, 5
        %v1602 = vsel %vm1516, %v1597, %v1601
        %v1603 = vshrl.u32 %v1470, 16
        %v1605 = vrot.slane %v1603, 4
        %v1606 = vor.u32 %v1605, %v1601
        %v1607 = vrot.slane %v1606, 4
        %v1609 = vshll.u32 %v1471, 16
        %v1611 = vrot.slane %v1609, 5
        %v1612 = vsel %vm1516, %v1607, %v1611
        %v1614 = vshrl.u32 %v1472, 16
        %v1616 = vrot.slane %v1614, 4
        %v1617 = vshll.u32 %v1472, 16
        %v1619 = vrot.slane %v1617, 5
        %v1620 = vor.u32 %v1616, %v1619
        %v1621 = vrot.slane %v1620, 4
        %v1623 = vshll.u32 %v1473, 16
        %v1625 = vrot.slane %v1623, 5
        %v1626 = vsel %vm1516, %v1621, %v1625
        %v1627 = vshrl.u32 %v1473, 16
        %v1629 = vrot.slane %v1627, 4
        %v1630 = vor.u32 %v1629, %v1625
        %v1631 = vrot.slane %v1630, 4
        %v1633 = vshll.u32 %v1474, 16
        %v1635 = vrot.slane %v1633, 5
        %v1636 = vsel %vm1516, %v1631, %v1635
        %v1638 = vshrl.u32 %v1475, 16
        %v1640 = vrot.slane %v1638, 4
        %v1641 = vshll.u32 %v1475, 16
        %v1643 = vrot.slane %v1641, 5
        %v1644 = vor.u32 %v1640, %v1643
        %v1645 = vrot.slane %v1644, 4
        %v1647 = vshll.u32 %v1476, 16
        %v1649 = vrot.slane %v1647, 5
        %v1650 = vsel %vm1516, %v1645, %v1649
        %v1651 = vshrl.u32 %v1476, 16
        %v1653 = vrot.slane %v1651, 4
        %v1654 = vor.u32 %v1653, %v1649
        %v1655 = vrot.slane %v1654, 4
        %v1657 = vshll.u32 %v1477, 16
        %v1659 = vrot.slane %v1657, 5
        %v1660 = vsel %vm1516, %v1655, %v1659
        %v1662 = vshrl.u32 %v1478, 16
        %v1664 = vrot.slane %v1662, 4
        %v1665 = vshll.u32 %v1478, 16
        %v1667 = vrot.slane %v1665, 5
        %v1668 = vor.u32 %v1664, %v1667
        %v1669 = vrot.slane %v1668, 4
        %v1671 = vshll.u32 %v1479, 16
        %v1673 = vrot.slane %v1671, 5
        %v1674 = vsel %vm1516, %v1669, %v1673
        %v1675 = vshrl.u32 %v1479, 16
        %v1677 = vrot.slane %v1675, 4
        %v1678 = vor.u32 %v1677, %v1673
        %v1679 = vrot.slane %v1678, 4
        %v1681 = vshll.u32 %v1480, 16
        %v1683 = vrot.slane %v1681, 5
        %v1684 = vsel %vm1516, %v1679, %v1683
        %v1686 = vshrl.u32 %v1481, 16
        %v1688 = vrot.slane %v1686, 4
        %v1689 = vshll.u32 %v1481, 16
        %v1691 = vrot.slane %v1689, 5
        %v1692 = vor.u32 %v1688, %v1691
        %v1693 = vrot.slane %v1692, 4
        %v1695 = vshll.u32 %v1482, 16
        %v1697 = vrot.slane %v1695, 5
        %v1698 = vsel %vm1516, %v1693, %v1697
        %v1699 = vshrl.u32 %v1482, 16
        %v1701 = vrot.slane %v1699, 4
        %v1702 = vor.u32 %v1701, %v1697
        %v1703 = vrot.slane %v1702, 4
        %v1705 = vshll.u32 %v1483, 16
        %v1707 = vrot.slane %v1705, 5
        %v1708 = vsel %vm1516, %v1703, %v1707
        %v1710 = vshrl.u32 %v1484, 16
        %v1712 = vrot.slane %v1710, 4
        %v1713 = vshll.u32 %v1484, 16
        %v1715 = vrot.slane %v1713, 5
        %v1716 = vor.u32 %v1712, %v1715
        %v1717 = vrot.slane %v1716, 4
        %v1719 = vshll.u32 %v1485, 16
        %v1721 = vrot.slane %v1719, 5
        %v1722 = vsel %vm1516, %v1717, %v1721
        %v1723 = vshrl.u32 %v1485, 16
        %v1725 = vrot.slane %v1723, 4
        %v1726 = vor.u32 %v1725, %v1721
        %v1727 = vrot.slane %v1726, 4
        %v1729 = vshll.u32 %v1486, 16
        %v1731 = vrot.slane %v1729, 5
        %v1732 = vsel %vm1516, %v1727, %v1731
        %v1734 = vshrl.u32 %v1487, 16
        %v1736 = vrot.slane %v1734, 4
        %v1737 = vshll.u32 %v1487, 16
        %v1739 = vrot.slane %v1737, 5
        %v1740 = vor.u32 %v1736, %v1739
        %v1741 = vrot.slane %v1740, 4
        %v1743 = vshll.u32 %v1488, 16
        %v1745 = vrot.slane %v1743, 5
        %v1746 = vsel %vm1516, %v1741, %v1745
        %v1747 = vshrl.u32 %v1488, 16
        %v1749 = vrot.slane %v1747, 4
        %v1750 = vor.u32 %v1749, %v1745
        %v1751 = vrot.slane %v1750, 4
        %v1753 = vshll.u32 %v1489, 16
        %v1755 = vrot.slane %v1753, 5
        %v1756 = vsel %vm1516, %v1751, %v1755
        %v1758 = vshrl.u32 %v1490, 16
        %v1760 = vrot.slane %v1758, 4
        %v1761 = vshll.u32 %v1490, 16
        %v1763 = vrot.slane %v1761, 5
        %v1764 = vor.u32 %v1760, %v1763
        %v1765 = vrot.slane %v1764, 4
        %v1767 = vshll.u32 %v1491, 16
        %v1769 = vrot.slane %v1767, 5
        %v1770 = vsel %vm1516, %v1765, %v1769
        %v1771 = vshrl.u32 %v1491, 16
        %v1773 = vrot.slane %v1771, 4
        %v1774 = vor.u32 %v1773, %v1769
        %v1775 = vrot.slane %v1774, 4
        %v1777 = vshll.u32 %v1492, 16
        %v1779 = vrot.slane %v1777, 5
        %v1780 = vsel %vm1516, %v1775, %v1779
        %v1782 = vshrl.u32 %v1493, 16
        %v1784 = vrot.slane %v1782, 4
        %v1785 = vshll.u32 %v1493, 16
        %v1787 = vrot.slane %v1785, 5
        %v1788 = vor.u32 %v1784, %v1787
        %v1789 = vrot.slane %v1788, 4
        %v1791 = vshll.u32 %v1494, 16
        %v1793 = vrot.slane %v1791, 5
        %v1794 = vsel %vm1516, %v1789, %v1793
        %v1795 = vshrl.u32 %v1494, 16
        %v1797 = vrot.slane %v1795, 4
        %v1798 = vor.u32 %v1797, %v1793
        %v1799 = vrot.slane %v1798, 4
        %v1801 = vshll.u32 %v1495, 16
        %v1803 = vrot.slane %v1801, 5
        %v1804 = vsel %vm1516, %v1799, %v1803
        %v1806 = vshrl.u32 %v1496, 16
        %v1808 = vrot.slane %v1806, 4
        %v1809 = vshll.u32 %v1496, 16
        %v1811 = vrot.slane %v1809, 5
        %v1812 = vor.u32 %v1808, %v1811
        %v1813 = vrot.slane %v1812, 4
        %v1815 = vshll.u32 %v1497, 16
        %v1817 = vrot.slane %v1815, 5
        %v1818 = vsel %vm1516, %v1813, %v1817
        %v1819 = vshrl.u32 %v1497, 16
        %v1821 = vrot.slane %v1819, 4
        %v1822 = vor.u32 %v1821, %v1817
        %v1823 = vrot.slane %v1822, 4
        %v1825 = vshll.u32 %v1498, 16
        %v1827 = vrot.slane %v1825, 5
        %v1828 = vsel %vm1516, %v1823, %v1827
        %v1830 = vshrl.u32 %v1499, 16
        %v1832 = vrot.slane %v1830, 4
        %v1833 = vshll.u32 %v1499, 16
        %v1835 = vrot.slane %v1833, 5
        %v1836 = vor.u32 %v1832, %v1835
        %v1837 = vrot.slane %v1836, 4
        %v1839 = vshll.u32 %v1500, 16
        %v1841 = vrot.slane %v1839, 5
        %v1842 = vsel %vm1516, %v1837, %v1841
        %v1843 = vshrl.u32 %v1500, 16
        %v1845 = vrot.slane %v1843, 4
        %v1846 = vor.u32 %v1845, %v1841
        %v1847 = vrot.slane %v1846, 4
        %v1849 = vshll.u32 %v1501, 16
        %v1851 = vrot.slane %v1849, 5
        %v1852 = vsel %vm1516, %v1847, %v1851
        %v1854 = vshrl.u32 %v1502, 16
        %v1856 = vrot.slane %v1854, 4
        %v1857 = vshll.u32 %v1502, 16
        %v1859 = vrot.slane %v1857, 5
        %v1860 = vor.u32 %v1856, %v1859
        %v1861 = vrot.slane %v1860, 4
        %v1863 = vshll.u32 %v1503, 16
        %v1865 = vrot.slane %v1863, 5
        %v1866 = vsel %vm1516, %v1861, %v1865
        %v1867 = vshrl.u32 %v1503, 16
        %v1869 = vrot.slane %v1867, 4
        %v1870 = vor.u32 %v1869, %v1865
        %v1871 = vrot.slane %v1870, 4
        %v1873 = vshll.u32 %v1504, 16
        %v1875 = vrot.slane %v1873, 5
        %v1876 = vsel %vm1516, %v1871, %v1875
        %v1878 = vshrl.u32 %v1505, 16
        %v1880 = vrot.slane %v1878, 4
        %v1881 = vshll.u32 %v1505, 16
        %v1883 = vrot.slane %v1881, 5
        %v1884 = vor.u32 %v1880, %v1883
        %v1885 = vrot.slane %v1884, 4
        %v1887 = vshll.u32 %v1506, 16
        %v1889 = vrot.slane %v1887, 5
        %v1890 = vsel %vm1516, %v1885, %v1889
        %v1891 = vshrl.u32 %v1506, 16
        %v1893 = vrot.slane %v1891, 4
        %v1894 = vor.u32 %v1893, %v1889
        %v1895 = vrot.slane %v1894, 4
        %v1897 = vshll.u32 %v1507, 16
        %v1899 = vrot.slane %v1897, 5
        %v1900 = vsel %vm1516, %v1895, %v1899
        %vm1949 = vcmask 1042432
        %vm1950 = vcmask 1046532
        %vm1951 = vmor %vm1949, %vm1950
        %v1952 = vrot.slane %v1460, 5
        %v1953 = vrot.slane %v1952, 4
        %v1954 = vrot.slane %v1461, 5
        %v1955 = vsel %vm1951, %v1953, %v1954
        %v1956 = vrot.slane %v1954, 4
        %v1957 = vrot.slane %v1462, 5
        %v1958 = vsel %vm1951, %v1956, %v1957
        %v1959 = vrot.slane %v1463, 5
        %v1960 = vrot.slane %v1959, 4
        %v1961 = vrot.slane %v1464, 5
        %v1962 = vsel %vm1951, %v1960, %v1961
        %v1963 = vrot.slane %v1961, 4
        %v1964 = vrot.slane %v1465, 5
        %v1965 = vsel %vm1951, %v1963, %v1964
        %v1966 = vrot.slane %v1466, 5
        %v1967 = vrot.slane %v1966, 4
        %v1968 = vrot.slane %v1467, 5
        %v1969 = vsel %vm1951, %v1967, %v1968
        %v1970 = vrot.slane %v1968, 4
        %v1971 = vrot.slane %v1468, 5
        %v1972 = vsel %vm1951, %v1970, %v1971
        %v1973 = vrot.slane %v1469, 5
        %v1974 = vrot.slane %v1973, 4
        %v1975 = vrot.slane %v1470, 5
        %v1976 = vsel %vm1951, %v1974, %v1975
        %v1977 = vrot.slane %v1975, 4
        %v1978 = vrot.slane %v1471, 5
        %v1979 = vsel %vm1951, %v1977, %v1978
        %v1980 = vrot.slane %v1472, 5
        %v1981 = vrot.slane %v1980, 4
        %v1982 = vrot.slane %v1473, 5
        %v1983 = vsel %vm1951, %v1981, %v1982
        %v1984 = vrot.slane %v1982, 4
        %v1985 = vrot.slane %v1474, 5
        %v1986 = vsel %vm1951, %v1984, %v1985
        %v1987 = vrot.slane %v1475, 5
        %v1988 = vrot.slane %v1987, 4
        %v1989 = vrot.slane %v1476, 5
        %v1990 = vsel %vm1951, %v1988, %v1989
        %v1991 = vrot.slane %v1989, 4
        %v1992 = vrot.slane %v1477, 5
        %v1993 = vsel %vm1951, %v1991, %v1992
        %v1994 = vrot.slane %v1478, 5
        %v1995 = vrot.slane %v1994, 4
        %v1996 = vrot.slane %v1479, 5
        %v1997 = vsel %vm1951, %v1995, %v1996
        %v1998 = vrot.slane %v1996, 4
        %v1999 = vrot.slane %v1480, 5
        %v2000 = vsel %vm1951, %v1998, %v1999
        %v2001 = vrot.slane %v1481, 5
        %v2002 = vrot.slane %v2001, 4
        %v2003 = vrot.slane %v1482, 5
        %v2004 = vsel %vm1951, %v2002, %v2003
        %v2005 = vrot.slane %v2003, 4
        %v2006 = vrot.slane %v1483, 5
        %v2007 = vsel %vm1951, %v2005, %v2006
        %v2008 = vrot.slane %v1484, 5
        %v2009 = vrot.slane %v2008, 4
        %v2010 = vrot.slane %v1485, 5
        %v2011 = vsel %vm1951, %v2009, %v2010
        %v2012 = vrot.slane %v2010, 4
        %v2013 = vrot.slane %v1486, 5
        %v2014 = vsel %vm1951, %v2012, %v2013
        %v2015 = vrot.slane %v1487, 5
        %v2016 = vrot.slane %v2015, 4
        %v2017 = vrot.slane %v1488, 5
        %v2018 = vsel %vm1951, %v2016, %v2017
        %v2019 = vrot.slane %v2017, 4
        %v2020 = vrot.slane %v1489, 5
        %v2021 = vsel %vm1951, %v2019, %v2020
        %v2022 = vrot.slane %v1490, 5
        %v2023 = vrot.slane %v2022, 4
        %v2024 = vrot.slane %v1491, 5
        %v2025 = vsel %vm1951, %v2023, %v2024
        %v2026 = vrot.slane %v2024, 4
        %v2027 = vrot.slane %v1492, 5
        %v2028 = vsel %vm1951, %v2026, %v2027
        %v2029 = vrot.slane %v1493, 5
        %v2030 = vrot.slane %v2029, 4
        %v2031 = vrot.slane %v1494, 5
        %v2032 = vsel %vm1951, %v2030, %v2031
        %v2033 = vrot.slane %v2031, 4
        %v2034 = vrot.slane %v1495, 5
        %v2035 = vsel %vm1951, %v2033, %v2034
        %v2036 = vrot.slane %v1496, 5
        %v2037 = vrot.slane %v2036, 4
        %v2038 = vrot.slane %v1497, 5
        %v2039 = vsel %vm1951, %v2037, %v2038
        %v2040 = vrot.slane %v2038, 4
        %v2041 = vrot.slane %v1498, 5
        %v2042 = vsel %vm1951, %v2040, %v2041
        %v2043 = vrot.slane %v1499, 5
        %v2044 = vrot.slane %v2043, 4
        %v2045 = vrot.slane %v1500, 5
        %v2046 = vsel %vm1951, %v2044, %v2045
        %v2047 = vrot.slane %v2045, 4
        %v2048 = vrot.slane %v1501, 5
        %v2049 = vsel %vm1951, %v2047, %v2048
        %v2050 = vrot.slane %v1502, 5
        %v2051 = vrot.slane %v2050, 4
        %v2052 = vrot.slane %v1503, 5
        %v2053 = vsel %vm1951, %v2051, %v2052
        %v2054 = vrot.slane %v2052, 4
        %v2055 = vrot.slane %v1504, 5
        %v2056 = vsel %vm1951, %v2054, %v2055
        %v2057 = vrot.slane %v1505, 5
        %v2058 = vrot.slane %v2057, 4
        %v2059 = vrot.slane %v1506, 5
        %v2060 = vsel %vm1951, %v2058, %v2059
        %v2061 = vrot.slane %v2059, 4
        %v2062 = vrot.slane %v1507, 5
        %v2063 = vsel %vm1951, %v2061, %v2062
        %v2065 = vshrl.u32 %v1508, 16
        %v2067 = vrot.slane %v2065, 4
        %v2068 = vshll.u32 %v1508, 16
        %v2070 = vrot.slane %v2068, 5
        %v2071 = vor.u32 %v2067, %v2070
        %v2072 = vrot.slane %v2071, 4
        %v2074 = vshll.u32 %v1509, 16
        %v2076 = vrot.slane %v2074, 5
        %v2077 = vsel %vm1516, %v2072, %v2076
        %v2078 = vshrl.u32 %v1509, 16
        %v2080 = vrot.slane %v2078, 4
        %v2081 = vor.u32 %v2080, %v2076
        %v2082 = vrot.slane %v2081, 4
        %v2084 = vshll.u32 %v1510, 16
        %v2086 = vrot.slane %v2084, 5
        %v2087 = vsel %vm1516, %v2082, %v2086
        %v2091 = vrot.slane %v1508, 5
        %v2092 = vrot.slane %v2091, 4
        %v2093 = vrot.slane %v1509, 5
        %v2094 = vsel %vm1951, %v2092, %v2093
        %v2095 = vrot.slane %v2093, 4
        %v2096 = vrot.slane %v1510, 5
        %v2097 = vsel %vm1951, %v2095, %v2096
        %v2099 = vshrl.u32 %v1511, 16
        %v2101 = vrot.slane %v2099, 4
        %v2102 = vshll.u32 %v1511, 16
        %v2104 = vrot.slane %v2102, 5
        %v2105 = vor.u32 %v2101, %v2104
        %v2106 = vrot.slane %v2105, 4
        %v2108 = vshll.u32 %v1512, 16
        %v2110 = vrot.slane %v2108, 5
        %v2111 = vsel %vm1516, %v2106, %v2110
        %v2112 = vshrl.u32 %v1512, 16
        %v2114 = vrot.slane %v2112, 4
        %v2115 = vor.u32 %v2114, %v2110
        %v2116 = vrot.slane %v2115, 4
        %v2118 = vshll.u32 %v1513, 16
        %v2120 = vrot.slane %v2118, 5
        %v2121 = vsel %vm1516, %v2116, %v2120
        %v2125 = vrot.slane %v1511, 5
        %v2126 = vrot.slane %v2125, 4
        %v2127 = vrot.slane %v1512, 5
        %v2128 = vsel %vm1951, %v2126, %v2127
        %v2129 = vrot.slane %v2127, 4
        %v2130 = vrot.slane %v1513, 5
        %v2131 = vsel %vm1951, %v2129, %v2130
        %v2132 = vunpack.c.l.b16 %v1460
        %v2133 = vunpack.c.l.b16 %v1461
        %v2134 = vunpack.c.l.b16 %v1463
        %v2135 = vunpack.c.l.b16 %v1464
        %v2136 = vunpack.c.l.b16 %v1466
        %v2137 = vunpack.c.l.b16 %v1467
        %v2138 = vunpack.c.l.b16 %v1469
        %v2139 = vunpack.c.l.b16 %v1470
        %v2140 = vunpack.c.l.b16 %v1472
        %v2141 = vunpack.c.l.b16 %v1473
        %v2142 = vunpack.c.l.b16 %v1475
        %v2143 = vunpack.c.l.b16 %v1476
        %v2144 = vunpack.c.l.b16 %v1478
        %v2145 = vunpack.c.l.b16 %v1479
        %v2146 = vunpack.c.l.b16 %v1481
        %v2147 = vunpack.c.l.b16 %v1482
        %v2148 = vunpack.c.l.b16 %v1484
        %v2149 = vunpack.c.l.b16 %v1485
        %v2150 = vunpack.c.l.b16 %v1487
        %v2151 = vunpack.c.l.b16 %v1488
        %v2152 = vunpack.c.l.b16 %v1490
        %v2153 = vunpack.c.l.b16 %v1491
        %v2154 = vunpack.c.l.b16 %v1493
        %v2155 = vunpack.c.l.b16 %v1494
        %v2156 = vunpack.c.l.b16 %v1496
        %v2157 = vunpack.c.l.b16 %v1497
        %v2158 = vunpack.c.l.b16 %v1499
        %v2159 = vunpack.c.l.b16 %v1500
        %v2160 = vunpack.c.l.b16 %v1502
        %v2161 = vunpack.c.l.b16 %v1503
        %v2162 = vunpack.c.l.b16 %v1505
        %v2163 = vunpack.c.l.b16 %v1506
        %v2164 = vpack.c.b16 %v2133, %v2132
        %v2165 = vpack.c.b16 %v2135, %v2134
        %v2166 = vpack.c.b16 %v2137, %v2136
        %v2167 = vpack.c.b16 %v2139, %v2138
        %v2168 = vpack.c.b16 %v2141, %v2140
        %v2169 = vpack.c.b16 %v2143, %v2142
        %v2170 = vpack.c.b16 %v2145, %v2144
        %v2171 = vpack.c.b16 %v2147, %v2146
        %v2172 = vpack.c.b16 %v2149, %v2148
        %v2173 = vpack.c.b16 %v2151, %v2150
        %v2174 = vpack.c.b16 %v2153, %v2152
        %v2175 = vpack.c.b16 %v2155, %v2154
        %v2176 = vpack.c.b16 %v2157, %v2156
        %v2177 = vpack.c.b16 %v2159, %v2158
        %v2178 = vpack.c.b16 %v2161, %v2160
        %v2179 = vpack.c.b16 %v2163, %v2162
        %v2180 = vunpack.c.l.b16 %v1530
        %v2181 = vunpack.c.l.b16 %v1540
        %v2182 = vunpack.c.l.b16 %v1554
        %v2183 = vunpack.c.l.b16 %v1564
        %v2184 = vunpack.c.l.b16 %v1578
        %v2185 = vunpack.c.l.b16 %v1588
        %v2186 = vunpack.c.l.b16 %v1602
        %v2187 = vunpack.c.l.b16 %v1612
        %v2188 = vunpack.c.l.b16 %v1626
        %v2189 = vunpack.c.l.b16 %v1636
        %v2190 = vunpack.c.l.b16 %v1650
        %v2191 = vunpack.c.l.b16 %v1660
        %v2192 = vunpack.c.l.b16 %v1674
        %v2193 = vunpack.c.l.b16 %v1684
        %v2194 = vunpack.c.l.b16 %v1698
        %v2195 = vunpack.c.l.b16 %v1708
        %v2196 = vunpack.c.l.b16 %v1722
        %v2197 = vunpack.c.l.b16 %v1732
        %v2198 = vunpack.c.l.b16 %v1746
        %v2199 = vunpack.c.l.b16 %v1756
        %v2200 = vunpack.c.l.b16 %v1770
        %v2201 = vunpack.c.l.b16 %v1780
        %v2202 = vunpack.c.l.b16 %v1794
        %v2203 = vunpack.c.l.b16 %v1804
        %v2204 = vunpack.c.l.b16 %v1818
        %v2205 = vunpack.c.l.b16 %v1828
        %v2206 = vunpack.c.l.b16 %v1842
        %v2207 = vunpack.c.l.b16 %v1852
        %v2208 = vunpack.c.l.b16 %v1866
        %v2209 = vunpack.c.l.b16 %v1876
        %v2210 = vunpack.c.l.b16 %v1890
        %v2211 = vunpack.c.l.b16 %v1900
        %v2212 = vpack.c.b16 %v2181, %v2180
        %v2213 = vpack.c.b16 %v2183, %v2182
        %v2214 = vpack.c.b16 %v2185, %v2184
        %v2215 = vpack.c.b16 %v2187, %v2186
        %v2216 = vpack.c.b16 %v2189, %v2188
        %v2217 = vpack.c.b16 %v2191, %v2190
        %v2218 = vpack.c.b16 %v2193, %v2192
        %v2219 = vpack.c.b16 %v2195, %v2194
        %v2220 = vpack.c.b16 %v2197, %v2196
        %v2221 = vpack.c.b16 %v2199, %v2198
        %v2222 = vpack.c.b16 %v2201, %v2200
        %v2223 = vpack.c.b16 %v2203, %v2202
        %v2224 = vpack.c.b16 %v2205, %v2204
        %v2225 = vpack.c.b16 %v2207, %v2206
        %v2226 = vpack.c.b16 %v2209, %v2208
        %v2227 = vpack.c.b16 %v2211, %v2210
        %2228 = vrot.lane.b32.xlu0 %v2212, 32
        %v2229 = vpop.permute.xlu0 %2228
        %2230 = vrot.lane.b32.xlu0 %v2213, 32
        %v2231 = vpop.permute.xlu0 %2230
        %2232 = vrot.lane.b32.xlu0 %v2214, 32
        %v2233 = vpop.permute.xlu0 %2232
        %2234 = vrot.lane.b32.xlu0 %v2215, 32
        %v2235 = vpop.permute.xlu0 %2234
        %2236 = vrot.lane.b32.xlu0 %v2216, 32
        %v2237 = vpop.permute.xlu0 %2236
        %2238 = vrot.lane.b32.xlu0 %v2217, 32
        %v2239 = vpop.permute.xlu0 %2238
        %2240 = vrot.lane.b32.xlu0 %v2218, 32
        %v2241 = vpop.permute.xlu0 %2240
        %2242 = vrot.lane.b32.xlu0 %v2219, 32
        %v2243 = vpop.permute.xlu0 %2242
        %2244 = vrot.lane.b32.xlu0 %v2220, 32
        %v2245 = vpop.permute.xlu0 %2244
        %2246 = vrot.lane.b32.xlu0 %v2221, 32
        %v2247 = vpop.permute.xlu0 %2246
        %2248 = vrot.lane.b32.xlu0 %v2222, 32
        %v2249 = vpop.permute.xlu0 %2248
        %2250 = vrot.lane.b32.xlu0 %v2223, 32
        %v2251 = vpop.permute.xlu0 %2250
        %2252 = vrot.lane.b32.xlu0 %v2224, 32
        %v2253 = vpop.permute.xlu0 %2252
        %2254 = vrot.lane.b32.xlu0 %v2225, 32
        %v2255 = vpop.permute.xlu0 %2254
        %2256 = vrot.lane.b32.xlu0 %v2226, 32
        %v2257 = vpop.permute.xlu0 %2256
        %2258 = vrot.lane.b32.xlu0 %v2227, 32
        %v2259 = vpop.permute.xlu0 %2258
        %v2260 = vunpack.c.l.b16 %v1955
        %v2261 = vunpack.c.l.b16 %v1958
        %v2262 = vunpack.c.l.b16 %v1962
        %v2263 = vunpack.c.l.b16 %v1965
        %v2264 = vunpack.c.l.b16 %v1969
        %v2265 = vunpack.c.l.b16 %v1972
        %v2266 = vunpack.c.l.b16 %v1976
        %v2267 = vunpack.c.l.b16 %v1979
        %v2268 = vunpack.c.l.b16 %v1983
        %v2269 = vunpack.c.l.b16 %v1986
        %v2270 = vunpack.c.l.b16 %v1990
        %v2271 = vunpack.c.l.b16 %v1993
        %v2272 = vunpack.c.l.b16 %v1997
        %v2273 = vunpack.c.l.b16 %v2000
        %v2274 = vunpack.c.l.b16 %v2004
        %v2275 = vunpack.c.l.b16 %v2007
        %v2276 = vunpack.c.l.b16 %v2011
        %v2277 = vunpack.c.l.b16 %v2014
        %v2278 = vunpack.c.l.b16 %v2018
        %v2279 = vunpack.c.l.b16 %v2021
        %v2280 = vunpack.c.l.b16 %v2025
        %v2281 = vunpack.c.l.b16 %v2028
        %v2282 = vunpack.c.l.b16 %v2032
        %v2283 = vunpack.c.l.b16 %v2035
        %v2284 = vunpack.c.l.b16 %v2039
        %v2285 = vunpack.c.l.b16 %v2042
        %v2286 = vunpack.c.l.b16 %v2046
        %v2287 = vunpack.c.l.b16 %v2049
        %v2288 = vunpack.c.l.b16 %v2053
        %v2289 = vunpack.c.l.b16 %v2056
        %v2290 = vunpack.c.l.b16 %v2060
        %v2291 = vunpack.c.l.b16 %v2063
        %v2292 = vpack.c.b16 %v2261, %v2260
        %v2293 = vpack.c.b16 %v2263, %v2262
        %v2294 = vpack.c.b16 %v2265, %v2264
        %v2295 = vpack.c.b16 %v2267, %v2266
        %v2296 = vpack.c.b16 %v2269, %v2268
        %v2297 = vpack.c.b16 %v2271, %v2270
        %v2298 = vpack.c.b16 %v2273, %v2272
        %v2299 = vpack.c.b16 %v2275, %v2274
        %v2300 = vpack.c.b16 %v2277, %v2276
        %v2301 = vpack.c.b16 %v2279, %v2278
        %v2302 = vpack.c.b16 %v2281, %v2280
        %v2303 = vpack.c.b16 %v2283, %v2282
        %v2304 = vpack.c.b16 %v2285, %v2284
        %v2305 = vpack.c.b16 %v2287, %v2286
        %v2306 = vpack.c.b16 %v2289, %v2288
        %v2307 = vpack.c.b16 %v2291, %v2290
        %2308 = vrot.lane.b32.xlu0 %v2292, 64
        %v2309 = vpop.permute.xlu0 %2308
        %2310 = vrot.lane.b32.xlu0 %v2293, 64
        %v2311 = vpop.permute.xlu0 %2310
        %2312 = vrot.lane.b32.xlu0 %v2294, 64
        %v2313 = vpop.permute.xlu0 %2312
        %2314 = vrot.lane.b32.xlu0 %v2295, 64
        %v2315 = vpop.permute.xlu0 %2314
        %2316 = vrot.lane.b32.xlu0 %v2296, 64
        %v2317 = vpop.permute.xlu0 %2316
        %2318 = vrot.lane.b32.xlu0 %v2297, 64
        %v2319 = vpop.permute.xlu0 %2318
        %2320 = vrot.lane.b32.xlu0 %v2298, 64
        %v2321 = vpop.permute.xlu0 %2320
        %2322 = vrot.lane.b32.xlu0 %v2299, 64
        %v2323 = vpop.permute.xlu0 %2322
        %2324 = vrot.lane.b32.xlu0 %v2300, 64
        %v2325 = vpop.permute.xlu0 %2324
        %2326 = vrot.lane.b32.xlu0 %v2301, 64
        %v2327 = vpop.permute.xlu0 %2326
        %2328 = vrot.lane.b32.xlu0 %v2302, 64
        %v2329 = vpop.permute.xlu0 %2328
        %2330 = vrot.lane.b32.xlu0 %v2303, 64
        %v2331 = vpop.permute.xlu0 %2330
        %2332 = vrot.lane.b32.xlu0 %v2304, 64
        %v2333 = vpop.permute.xlu0 %2332
        %2334 = vrot.lane.b32.xlu0 %v2305, 64
        %v2335 = vpop.permute.xlu0 %2334
        %2336 = vrot.lane.b32.xlu0 %v2306, 64
        %v2337 = vpop.permute.xlu0 %2336
        %2338 = vrot.lane.b32.xlu0 %v2307, 64
        %v2339 = vpop.permute.xlu0 %2338
        %v2340 = vunpack.c.l.b16 %v1508
        %v2341 = vunpack.c.l.b16 %v1509
        %v2342 = vpack.c.b16 %v2341, %v2340
        %2343 = vrot.lane.b32.xlu0 %v2165, 96
        %v2344 = vpop.permute.xlu0 %2343
        %2345 = vrot.lane.b32.xlu0 %v2166, 96
        %v2346 = vpop.permute.xlu0 %2345
        %2347 = vrot.lane.b32.xlu0 %v2167, 96
        %v2348 = vpop.permute.xlu0 %2347
        %2349 = vrot.lane.b32.xlu0 %v2168, 96
        %v2350 = vpop.permute.xlu0 %2349
        %2351 = vrot.lane.b32.xlu0 %v2169, 96
        %v2352 = vpop.permute.xlu0 %2351
        %2353 = vrot.lane.b32.xlu0 %v2170, 96
        %v2354 = vpop.permute.xlu0 %2353
        %2355 = vrot.lane.b32.xlu0 %v2171, 96
        %v2356 = vpop.permute.xlu0 %2355
        %2357 = vrot.lane.b32.xlu0 %v2172, 96
        %v2358 = vpop.permute.xlu0 %2357
        %2359 = vrot.lane.b32.xlu0 %v2173, 96
        %v2360 = vpop.permute.xlu0 %2359
        %2361 = vrot.lane.b32.xlu0 %v2174, 96
        %v2362 = vpop.permute.xlu0 %2361
        %2363 = vrot.lane.b32.xlu0 %v2175, 96
        %v2364 = vpop.permute.xlu0 %2363
        %2365 = vrot.lane.b32.xlu0 %v2176, 96
        %v2366 = vpop.permute.xlu0 %2365
        %2367 = vrot.lane.b32.xlu0 %v2177, 96
        %v2368 = vpop.permute.xlu0 %2367
        %2369 = vrot.lane.b32.xlu0 %v2178, 96
        %v2370 = vpop.permute.xlu0 %2369
        %2371 = vrot.lane.b32.xlu0 %v2179, 96
        %v2372 = vpop.permute.xlu0 %2371
        %2373 = vrot.lane.b32.xlu0 %v2342, 96
        %v2374 = vpop.permute.xlu0 %2373
        %v2375 = vunpack.c.l.b16 %v2077
        %v2376 = vunpack.c.l.b16 %v2087
        %v2377 = vpack.c.b16 %v2376, %v2375
        %v2378 = vunpack.c.l.b16 %v2094
        %v2379 = vunpack.c.l.b16 %v2097
        %v2380 = vpack.c.b16 %v2379, %v2378
        %2381 = vrot.lane.b32.xlu0 %v2293, 32
        %v2382 = vpop.permute.xlu0 %2381
        %2383 = vrot.lane.b32.xlu0 %v2294, 32
        %v2384 = vpop.permute.xlu0 %2383
        %2385 = vrot.lane.b32.xlu0 %v2295, 32
        %v2386 = vpop.permute.xlu0 %2385
        %2387 = vrot.lane.b32.xlu0 %v2296, 32
        %v2388 = vpop.permute.xlu0 %2387
        %2389 = vrot.lane.b32.xlu0 %v2297, 32
        %v2390 = vpop.permute.xlu0 %2389
        %2391 = vrot.lane.b32.xlu0 %v2298, 32
        %v2392 = vpop.permute.xlu0 %2391
        %2393 = vrot.lane.b32.xlu0 %v2299, 32
        %v2394 = vpop.permute.xlu0 %2393
        %2395 = vrot.lane.b32.xlu0 %v2300, 32
        %v2396 = vpop.permute.xlu0 %2395
        %2397 = vrot.lane.b32.xlu0 %v2301, 32
        %v2398 = vpop.permute.xlu0 %2397
        %2399 = vrot.lane.b32.xlu0 %v2302, 32
        %v2400 = vpop.permute.xlu0 %2399
        %2401 = vrot.lane.b32.xlu0 %v2303, 32
        %v2402 = vpop.permute.xlu0 %2401
        %2403 = vrot.lane.b32.xlu0 %v2304, 32
        %v2404 = vpop.permute.xlu0 %2403
        %2405 = vrot.lane.b32.xlu0 %v2305, 32
        %v2406 = vpop.permute.xlu0 %2405
        %2407 = vrot.lane.b32.xlu0 %v2306, 32
        %v2408 = vpop.permute.xlu0 %2407
        %2409 = vrot.lane.b32.xlu0 %v2307, 32
        %v2410 = vpop.permute.xlu0 %2409
        %2411 = vrot.lane.b32.xlu0 %v2380, 32
        %v2412 = vpop.permute.xlu0 %2411
        %v2413 = vunpack.c.l.b16 %v1511
        %v2414 = vunpack.c.l.b16 %v1512
        %v2415 = vpack.c.b16 %v2414, %v2413
        %2416 = vrot.lane.b32.xlu0 %v2166, 64
        %v2417 = vpop.permute.xlu0 %2416
        %2418 = vrot.lane.b32.xlu0 %v2167, 64
        %v2419 = vpop.permute.xlu0 %2418
        %2420 = vrot.lane.b32.xlu0 %v2168, 64
        %v2421 = vpop.permute.xlu0 %2420
        %2422 = vrot.lane.b32.xlu0 %v2169, 64
        %v2423 = vpop.permute.xlu0 %2422
        %2424 = vrot.lane.b32.xlu0 %v2170, 64
        %v2425 = vpop.permute.xlu0 %2424
        %2426 = vrot.lane.b32.xlu0 %v2171, 64
        %v2427 = vpop.permute.xlu0 %2426
        %2428 = vrot.lane.b32.xlu0 %v2172, 64
        %v2429 = vpop.permute.xlu0 %2428
        %2430 = vrot.lane.b32.xlu0 %v2173, 64
        %v2431 = vpop.permute.xlu0 %2430
        %2432 = vrot.lane.b32.xlu0 %v2174, 64
        %v2433 = vpop.permute.xlu0 %2432
        %2434 = vrot.lane.b32.xlu0 %v2175, 64
        %v2435 = vpop.permute.xlu0 %2434
        %2436 = vrot.lane.b32.xlu0 %v2176, 64
        %v2437 = vpop.permute.xlu0 %2436
        %2438 = vrot.lane.b32.xlu0 %v2177, 64
        %v2439 = vpop.permute.xlu0 %2438
        %2440 = vrot.lane.b32.xlu0 %v2178, 64
        %v2441 = vpop.permute.xlu0 %2440
        %2442 = vrot.lane.b32.xlu0 %v2179, 64
        %v2443 = vpop.permute.xlu0 %2442
        %2444 = vrot.lane.b32.xlu0 %v2342, 64
        %v2445 = vpop.permute.xlu0 %2444
        %2446 = vrot.lane.b32.xlu0 %v2415, 64
        %v2447 = vpop.permute.xlu0 %2446
        %v2448 = vunpack.c.l.b16 %v2111
        %v2449 = vunpack.c.l.b16 %v2121
        %v2450 = vpack.c.b16 %v2449, %v2448
        %2451 = vrot.lane.b32.xlu0 %v2214, 96
        %v2452 = vpop.permute.xlu0 %2451
        %2453 = vrot.lane.b32.xlu0 %v2215, 96
        %v2454 = vpop.permute.xlu0 %2453
        %2455 = vrot.lane.b32.xlu0 %v2216, 96
        %v2456 = vpop.permute.xlu0 %2455
        %2457 = vrot.lane.b32.xlu0 %v2217, 96
        %v2458 = vpop.permute.xlu0 %2457
        %2459 = vrot.lane.b32.xlu0 %v2218, 96
        %v2460 = vpop.permute.xlu0 %2459
        %2461 = vrot.lane.b32.xlu0 %v2219, 96
        %v2462 = vpop.permute.xlu0 %2461
        %2463 = vrot.lane.b32.xlu0 %v2220, 96
        %v2464 = vpop.permute.xlu0 %2463
        %2465 = vrot.lane.b32.xlu0 %v2221, 96
        %v2466 = vpop.permute.xlu0 %2465
        %2467 = vrot.lane.b32.xlu0 %v2222, 96
        %v2468 = vpop.permute.xlu0 %2467
        %2469 = vrot.lane.b32.xlu0 %v2223, 96
        %v2470 = vpop.permute.xlu0 %2469
        %2471 = vrot.lane.b32.xlu0 %v2224, 96
        %v2472 = vpop.permute.xlu0 %2471
        %2473 = vrot.lane.b32.xlu0 %v2225, 96
        %v2474 = vpop.permute.xlu0 %2473
        %2475 = vrot.lane.b32.xlu0 %v2226, 96
        %v2476 = vpop.permute.xlu0 %2475
        %2477 = vrot.lane.b32.xlu0 %v2227, 96
        %v2478 = vpop.permute.xlu0 %2477
        %2479 = vrot.lane.b32.xlu0 %v2377, 96
        %v2480 = vpop.permute.xlu0 %2479
        %2481 = vrot.lane.b32.xlu0 %v2450, 96
        %v2482 = vpop.permute.xlu0 %2481
        %v2483 = vunpack.c.l.b16 %v2128
        %v2484 = vunpack.c.l.b16 %v2131
        %v2485 = vpack.c.b16 %v2484, %v2483
        %v2488 = vsel %vm757, %v2164, %v2229
        %v2491 = vsel %vm757, %v2165, %v2231
        %v2494 = vsel %vm757, %v2166, %v2233
        %v2497 = vsel %vm757, %v2167, %v2235
        %v2500 = vsel %vm757, %v2168, %v2237
        %v2503 = vsel %vm757, %v2169, %v2239
        %v2506 = vsel %vm757, %v2170, %v2241
        %v2509 = vsel %vm757, %v2171, %v2243
        %v2512 = vsel %vm757, %v2172, %v2245
        %v2515 = vsel %vm757, %v2173, %v2247
        %v2518 = vsel %vm757, %v2174, %v2249
        %v2521 = vsel %vm757, %v2175, %v2251
        %v2524 = vsel %vm757, %v2176, %v2253
        %v2527 = vsel %vm757, %v2177, %v2255
        %v2530 = vsel %vm757, %v2178, %v2257
        %v2533 = vsel %vm757, %v2179, %v2259
        %vm2534 = vcmask 523264
        %v2536 = vsel %vm2534, %v2488, %v2309
        %v2538 = vsel %vm2534, %v2491, %v2311
        %v2540 = vsel %vm2534, %v2494, %v2313
        %v2542 = vsel %vm2534, %v2497, %v2315
        %v2544 = vsel %vm2534, %v2500, %v2317
        %v2546 = vsel %vm2534, %v2503, %v2319
        %v2548 = vsel %vm2534, %v2506, %v2321
        %v2550 = vsel %vm2534, %v2509, %v2323
        %v2552 = vsel %vm2534, %v2512, %v2325
        %v2554 = vsel %vm2534, %v2515, %v2327
        %v2556 = vsel %vm2534, %v2518, %v2329
        %v2558 = vsel %vm2534, %v2521, %v2331
        %v2560 = vsel %vm2534, %v2524, %v2333
        %v2562 = vsel %vm2534, %v2527, %v2335
        %v2564 = vsel %vm2534, %v2530, %v2337
        %v2566 = vsel %vm2534, %v2533, %v2339
        %vm2567 = vcmask 785408
        %v2569 = vsel %vm2567, %v2536, %v2344
        %v2572 = vsel %vm2567, %v2538, %v2346
        %v2575 = vsel %vm2567, %v2540, %v2348
        %v2578 = vsel %vm2567, %v2542, %v2350
        %v2581 = vsel %vm2567, %v2544, %v2352
        %v2584 = vsel %vm2567, %v2546, %v2354
        %v2587 = vsel %vm2567, %v2548, %v2356
        %v2590 = vsel %vm2567, %v2550, %v2358
        %v2593 = vsel %vm2567, %v2552, %v2360
        %v2596 = vsel %vm2567, %v2554, %v2362
        %v2599 = vsel %vm2567, %v2556, %v2364
        %v2602 = vsel %vm2567, %v2558, %v2366
        %v2605 = vsel %vm2567, %v2560, %v2368
        %v2608 = vsel %vm2567, %v2562, %v2370
        %v2611 = vsel %vm2567, %v2564, %v2372
        %v2614 = vsel %vm2567, %v2566, %v2374
        %v2618 = vsel %vm757, %v2213, %v2382
        %v2621 = vsel %vm757, %v2214, %v2384
        %v2624 = vsel %vm757, %v2215, %v2386
        %v2627 = vsel %vm757, %v2216, %v2388
        %v2630 = vsel %vm757, %v2217, %v2390
        %v2633 = vsel %vm757, %v2218, %v2392
        %v2636 = vsel %vm757, %v2219, %v2394
        %v2639 = vsel %vm757, %v2220, %v2396
        %v2642 = vsel %vm757, %v2221, %v2398
        %v2645 = vsel %vm757, %v2222, %v2400
        %v2648 = vsel %vm757, %v2223, %v2402
        %v2651 = vsel %vm757, %v2224, %v2404
        %v2654 = vsel %vm757, %v2225, %v2406
        %v2657 = vsel %vm757, %v2226, %v2408
        %v2660 = vsel %vm757, %v2227, %v2410
        %v2663 = vsel %vm757, %v2377, %v2412
        %v2665 = vsel %vm2534, %v2618, %v2417
        %v2667 = vsel %vm2534, %v2621, %v2419
        %v2669 = vsel %vm2534, %v2624, %v2421
        %v2671 = vsel %vm2534, %v2627, %v2423
        %v2673 = vsel %vm2534, %v2630, %v2425
        %v2675 = vsel %vm2534, %v2633, %v2427
        %v2677 = vsel %vm2534, %v2636, %v2429
        %v2679 = vsel %vm2534, %v2639, %v2431
        %v2681 = vsel %vm2534, %v2642, %v2433
        %v2683 = vsel %vm2534, %v2645, %v2435
        %v2685 = vsel %vm2534, %v2648, %v2437
        %v2687 = vsel %vm2534, %v2651, %v2439
        %v2689 = vsel %vm2534, %v2654, %v2441
        %v2691 = vsel %vm2534, %v2657, %v2443
        %v2693 = vsel %vm2534, %v2660, %v2445
        %v2695 = vsel %vm2534, %v2663, %v2447
        %v2697 = vsel %vm2567, %v2665, %v2452
        %v2700 = vsel %vm2567, %v2667, %v2454
        %v2703 = vsel %vm2567, %v2669, %v2456
        %v2706 = vsel %vm2567, %v2671, %v2458
        %v2709 = vsel %vm2567, %v2673, %v2460
        %v2712 = vsel %vm2567, %v2675, %v2462
        %v2715 = vsel %vm2567, %v2677, %v2464
        %v2718 = vsel %vm2567, %v2679, %v2466
        %v2721 = vsel %vm2567, %v2681, %v2468
        %v2724 = vsel %vm2567, %v2683, %v2470
        %v2727 = vsel %vm2567, %v2685, %v2472
        %v2730 = vsel %vm2567, %v2687, %v2474
        %v2733 = vsel %vm2567, %v2689, %v2476
        %v2736 = vsel %vm2567, %v2691, %v2478
        %v2739 = vsel %vm2567, %v2693, %v2480
        %v2742 = vsel %vm2567, %v2695, %v2482
        %v2744 = vld [vmem:[%s4] sm:$0xf]
        %v2745 = vld [vmem:[%s4 + $0x4] sm:$0xf]
        %v2746 = vld [vmem:[%s4 + $0x8] sm:$0xf]
        %v2747 = vld [vmem:[%s4 + $0xc] sm:$0xf]
        %v2748 = vld [vmem:[%s4 + $0x10] sm:$0xf]
        %v2749 = vld [vmem:[%s4 + $0x14] sm:$0xf]
        %v2750 = vld [vmem:[%s4 + $0x18] sm:$0xf]
        %v2751 = vld [vmem:[%s4 + $0x1c] sm:$0xf]
        %v2752 = vld [vmem:[%s4 + $0x20] sm:$0xf]
        %v2753 = vld [vmem:[%s4 + $0x24] sm:$0xf]
        %v2754 = vld [vmem:[%s4 + $0x28] sm:$0xf]
        %v2755 = vld [vmem:[%s4 + $0x2c] sm:$0xf]
        %v2756 = vld [vmem:[%s4 + $0x30] sm:$0xf]
        %v2757 = vld [vmem:[%s4 + $0x34] sm:$0xf]
        %v2758 = vld [vmem:[%s4 + $0x38] sm:$0xf]
        %v2759 = vld [vmem:[%s4 + $0x3c] sm:$0xf]
        %v2760 = vld [vmem:[%s4 + $0x40] sm:$0xf]
        %v2761 = vld [vmem:[%s4 + $0x44] sm:$0xf]
        %v2762 = vld [vmem:[%s4 + $0x48] sm:$0xf]
        %v2763 = vld [vmem:[%s4 + $0x4c] sm:$0xf]
        %v2764 = vld [vmem:[%s4 + $0x50] sm:$0xf]
        %v2765 = vld [vmem:[%s4 + $0x54] sm:$0xf]
        %v2766 = vld [vmem:[%s4 + $0x58] sm:$0xf]
        %v2767 = vld [vmem:[%s4 + $0x5c] sm:$0xf]
        %v2768 = vld [vmem:[%s4 + $0x60] sm:$0xf]
        %v2769 = vld [vmem:[%s4 + $0x64] sm:$0xf]
        %v2770 = vld [vmem:[%s4 + $0x68] sm:$0xf]
        %v2771 = vld [vmem:[%s4 + $0x6c] sm:$0xf]
        %v2772 = vld [vmem:[%s4 + $0x70] sm:$0xf]
        %v2773 = vld [vmem:[%s4 + $0x74] sm:$0xf]
        %v2774 = vld [vmem:[%s4 + $0x78] sm:$0xf]
        %v2775 = vld [vmem:[%s4 + $0x7c] sm:$0xf]
        %v2776 = vld [vmem:[%s4 + $0x80] sm:$0xf]
        %v2777 = vld [vmem:[%s4 + $0x84] sm:$0xf]
        %v2778 = vld [vmem:[%s4 + $0x88] sm:$0xf]
        %v2779 = vld [vmem:[%s4 + $0x8c] sm:$0xf]
        %v2816 = vunpack.c.l.b16 %v2744
        %v2817 = vunpack.c.l.b16 %v2745
        %v2818 = vunpack.c.l.b16 %v2746
        %v2819 = vunpack.c.l.b16 %v2747
        %v2820 = vunpack.c.l.b16 %v2748
        %v2821 = vunpack.c.l.b16 %v2749
        %v2822 = vunpack.c.l.b16 %v2750
        %v2823 = vunpack.c.l.b16 %v2751
        %v2824 = vunpack.c.l.b16 %v2752
        %v2825 = vunpack.c.l.b16 %v2753
        %v2826 = vunpack.c.l.b16 %v2754
        %v2827 = vunpack.c.l.b16 %v2755
        %v2828 = vunpack.c.l.b16 %v2756
        %v2829 = vunpack.c.l.b16 %v2757
        %v2830 = vunpack.c.l.b16 %v2758
        %v2831 = vunpack.c.l.b16 %v2759
        %v2832 = vunpack.c.l.b16 %v2760
        %v2833 = vunpack.c.l.b16 %v2761
        %v2834 = vunpack.c.l.b16 %v2762
        %v2835 = vunpack.c.l.b16 %v2763
        %v2836 = vunpack.c.l.b16 %v2764
        %v2837 = vunpack.c.l.b16 %v2765
        %v2838 = vunpack.c.l.b16 %v2766
        %v2839 = vunpack.c.l.b16 %v2767
        %v2840 = vunpack.c.l.b16 %v2768
        %v2841 = vunpack.c.l.b16 %v2769
        %v2842 = vunpack.c.l.b16 %v2770
        %v2843 = vunpack.c.l.b16 %v2771
        %v2844 = vunpack.c.l.b16 %v2772
        %v2845 = vunpack.c.l.b16 %v2773
        %v2846 = vunpack.c.l.b16 %v2774
        %v2847 = vunpack.c.l.b16 %v2775
        %v2848 = vunpack.c.l.b16 %v2776
        %v2849 = vunpack.c.l.b16 %v2777
        %v2850 = vunpack.c.l.b16 %v2778
        %v2851 = vunpack.c.l.b16 %v2779
        %v2852 = vpack.c.b16 %v2817, %v2816
        %v2853 = vpack.c.b16 %v2819, %v2818
        %v2854 = vpack.c.b16 %v2821, %v2820
        %v2855 = vpack.c.b16 %v2823, %v2822
        %v2856 = vpack.c.b16 %v2825, %v2824
        %v2857 = vpack.c.b16 %v2827, %v2826
        %v2858 = vpack.c.b16 %v2829, %v2828
        %v2859 = vpack.c.b16 %v2831, %v2830
        %v2860 = vpack.c.b16 %v2833, %v2832
        %v2861 = vpack.c.b16 %v2835, %v2834
        %v2862 = vpack.c.b16 %v2837, %v2836
        %v2863 = vpack.c.b16 %v2839, %v2838
        %v2864 = vpack.c.b16 %v2841, %v2840
        %v2865 = vpack.c.b16 %v2843, %v2842
        %v2866 = vpack.c.b16 %v2845, %v2844
        %v2867 = vpack.c.b16 %v2847, %v2846
        %v2868 = vpack.c.b16 %v2849, %v2848
        %v2869 = vpack.c.b16 %v2851, %v2850
        %v2889 = vsel %vm757, %v2294, 0
        %v2892 = vsel %vm757, %v2295, 0
        %v2895 = vsel %vm757, %v2296, 0
        %v2898 = vsel %vm757, %v2297, 0
        %v2901 = vsel %vm757, %v2298, 0
        %v2904 = vsel %vm757, %v2299, 0
        %v2907 = vsel %vm757, %v2300, 0
        %v2910 = vsel %vm757, %v2301, 0
        %v2913 = vsel %vm757, %v2302, 0
        %v2916 = vsel %vm757, %v2303, 0
        %v2919 = vsel %vm757, %v2304, 0
        %v2922 = vsel %vm757, %v2305, 0
        %v2925 = vsel %vm757, %v2306, 0
        %v2928 = vsel %vm757, %v2307, 0
        %v2931 = vsel %vm757, %v2380, 0
        %v2934 = vsel %vm757, %v2485, 0
        %2936 = vmatpush.bf16.msra.mxu0 %v2859
        %2937 = vmatpush.bf16.msra.mxu0 %v2858
        %2938 = vmatpush.bf16.msra.mxu0 %v2857
        %2939 = vmatpush.bf16.msra.mxu0 %v2856
        %2940 = vmatpush.bf16.msra.mxu0 %v2855
        %2941 = vmatpush.bf16.msra.mxu0 %v2854
        %2942 = vmatpush.bf16.msra.mxu0 %v2853
        %2943 = vmatpush.bf16.msra.mxu0 %v2852
        %2944 = vmatmul.bf16.gmra.mxu0 %v2569
        %v2945 = vpop.f32.mrf.mxu0
        %v2946 = vadd.f32 0.0, %v2945
        %v2947 = vpop.f32.mrf.mxu0
        %v2948 = vadd.f32 0.0, %v2947
        %2949 = vmatmul.bf16.gmra.mxu0 %v2572
        %v2950 = vpop.f32.mrf.mxu0
        %v2951 = vadd.f32 0.0, %v2950
        %v2952 = vpop.f32.mrf.mxu0
        %v2953 = vadd.f32 0.0, %v2952
        %2954 = vmatmul.bf16.gmra.mxu0 %v2575
        %v2955 = vpop.f32.mrf.mxu0
        %v2956 = vadd.f32 0.0, %v2955
        %v2957 = vpop.f32.mrf.mxu0
        %v2958 = vadd.f32 0.0, %v2957
        %2959 = vmatmul.bf16.gmra.mxu0 %v2578
        %v2960 = vpop.f32.mrf.mxu0
        %v2961 = vadd.f32 0.0, %v2960
        %v2962 = vpop.f32.mrf.mxu0
        %v2963 = vadd.f32 0.0, %v2962
        %2964 = vmatmul.bf16.gmra.mxu0 %v2581
        %v2965 = vpop.f32.mrf.mxu0
        %v2966 = vadd.f32 0.0, %v2965
        %v2967 = vpop.f32.mrf.mxu0
        %v2968 = vadd.f32 0.0, %v2967
        %2969 = vmatmul.bf16.gmra.mxu0 %v2584
        %v2970 = vpop.f32.mrf.mxu0
        %v2971 = vadd.f32 0.0, %v2970
        %v2972 = vpop.f32.mrf.mxu0
        %v2973 = vadd.f32 0.0, %v2972
        %2974 = vmatmul.bf16.gmra.mxu0 %v2587
        %v2975 = vpop.f32.mrf.mxu0
        %v2976 = vadd.f32 0.0, %v2975
        %v2977 = vpop.f32.mrf.mxu0
        %v2978 = vadd.f32 0.0, %v2977
        %2979 = vmatmul.bf16.gmra.mxu0 %v2590
        %v2980 = vpop.f32.mrf.mxu0
        %v2981 = vadd.f32 0.0, %v2980
        %v2982 = vpop.f32.mrf.mxu0
        %v2983 = vadd.f32 0.0, %v2982
        %2984 = vmatmul.bf16.gmra.mxu0 %v2593
        %v2985 = vpop.f32.mrf.mxu0
        %v2986 = vadd.f32 0.0, %v2985
        %v2987 = vpop.f32.mrf.mxu0
        %v2988 = vadd.f32 0.0, %v2987
        %2989 = vmatmul.bf16.gmra.mxu0 %v2596
        %v2990 = vpop.f32.mrf.mxu0
        %v2991 = vadd.f32 0.0, %v2990
        %v2992 = vpop.f32.mrf.mxu0
        %v2993 = vadd.f32 0.0, %v2992
        %2994 = vmatmul.bf16.gmra.mxu0 %v2599
        %v2995 = vpop.f32.mrf.mxu0
        %v2996 = vadd.f32 0.0, %v2995
        %v2997 = vpop.f32.mrf.mxu0
        %v2998 = vadd.f32 0.0, %v2997
        %2999 = vmatmul.bf16.gmra.mxu0 %v2602
        %v3000 = vpop.f32.mrf.mxu0
        %v3001 = vadd.f32 0.0, %v3000
        %v3002 = vpop.f32.mrf.mxu0
        %v3003 = vadd.f32 0.0, %v3002
        %3004 = vmatmul.bf16.gmra.mxu0 %v2605
        %v3005 = vpop.f32.mrf.mxu0
        %v3006 = vadd.f32 0.0, %v3005
        %v3007 = vpop.f32.mrf.mxu0
        %v3008 = vadd.f32 0.0, %v3007
        %3009 = vmatmul.bf16.gmra.mxu0 %v2608
        %v3010 = vpop.f32.mrf.mxu0
        %v3011 = vadd.f32 0.0, %v3010
        %v3012 = vpop.f32.mrf.mxu0
        %v3013 = vadd.f32 0.0, %v3012
        %3014 = vmatmul.bf16.gmra.mxu0 %v2611
        %v3015 = vpop.f32.mrf.mxu0
        %v3016 = vadd.f32 0.0, %v3015
        %v3017 = vpop.f32.mrf.mxu0
        %v3018 = vadd.f32 0.0, %v3017
        %3019 = vmatmul.bf16.gmra.mxu0 %v2614
        %v3020 = vpop.f32.mrf.mxu0
        %v3021 = vadd.f32 0.0, %v3020
        %v3022 = vpop.f32.mrf.mxu0
        %v3023 = vadd.f32 0.0, %v3022
        %3024 = vdwg.mxu0
        %3025 = vmatpush.bf16.msra.mxu0 %v2867
        %3026 = vmatpush.bf16.msra.mxu0 %v2866
        %3027 = vmatpush.bf16.msra.mxu0 %v2865
        %3028 = vmatpush.bf16.msra.mxu0 %v2864
        %3029 = vmatpush.bf16.msra.mxu0 %v2863
        %3030 = vmatpush.bf16.msra.mxu0 %v2862
        %3031 = vmatpush.bf16.msra.mxu0 %v2861
        %3032 = vmatpush.bf16.msra.mxu0 %v2860
        %3033 = vmatmul.bf16.gmra.mxu0 %v2697
        %v3034 = vpop.f32.mrf.mxu0
        %v3035 = vadd.f32 %v2946, %v3034
        %v3036 = vpop.f32.mrf.mxu0
        %v3037 = vadd.f32 %v2948, %v3036
        %3038 = vmatmul.bf16.gmra.mxu0 %v2700
        %v3039 = vpop.f32.mrf.mxu0
        %v3040 = vadd.f32 %v2951, %v3039
        %v3041 = vpop.f32.mrf.mxu0
        %v3042 = vadd.f32 %v2953, %v3041
        %3043 = vmatmul.bf16.gmra.mxu0 %v2703
        %v3044 = vpop.f32.mrf.mxu0
        %v3045 = vadd.f32 %v2956, %v3044
        %v3046 = vpop.f32.mrf.mxu0
        %v3047 = vadd.f32 %v2958, %v3046
        %3048 = vmatmul.bf16.gmra.mxu0 %v2706
        %v3049 = vpop.f32.mrf.mxu0
        %v3050 = vadd.f32 %v2961, %v3049
        %v3051 = vpop.f32.mrf.mxu0
        %v3052 = vadd.f32 %v2963, %v3051
        %3053 = vmatmul.bf16.gmra.mxu0 %v2709
        %v3054 = vpop.f32.mrf.mxu0
        %v3055 = vadd.f32 %v2966, %v3054
        %v3056 = vpop.f32.mrf.mxu0
        %v3057 = vadd.f32 %v2968, %v3056
        %3058 = vmatmul.bf16.gmra.mxu0 %v2712
        %v3059 = vpop.f32.mrf.mxu0
        %v3060 = vadd.f32 %v2971, %v3059
        %v3061 = vpop.f32.mrf.mxu0
        %v3062 = vadd.f32 %v2973, %v3061
        %3063 = vmatmul.bf16.gmra.mxu0 %v2715
        %v3064 = vpop.f32.mrf.mxu0
        %v3065 = vadd.f32 %v2976, %v3064
        %v3066 = vpop.f32.mrf.mxu0
        %v3067 = vadd.f32 %v2978, %v3066
        %3068 = vmatmul.bf16.gmra.mxu0 %v2718
        %v3069 = vpop.f32.mrf.mxu0
        %v3070 = vadd.f32 %v2981, %v3069
        %v3071 = vpop.f32.mrf.mxu0
        %v3072 = vadd.f32 %v2983, %v3071
        %3073 = vmatmul.bf16.gmra.mxu0 %v2721
        %v3074 = vpop.f32.mrf.mxu0
        %v3075 = vadd.f32 %v2986, %v3074
        %v3076 = vpop.f32.mrf.mxu0
        %v3077 = vadd.f32 %v2988, %v3076
        %3078 = vmatmul.bf16.gmra.mxu0 %v2724
        %v3079 = vpop.f32.mrf.mxu0
        %v3080 = vadd.f32 %v2991, %v3079
        %v3081 = vpop.f32.mrf.mxu0
        %v3082 = vadd.f32 %v2993, %v3081
        %3083 = vmatmul.bf16.gmra.mxu0 %v2727
        %v3084 = vpop.f32.mrf.mxu0
        %v3085 = vadd.f32 %v2996, %v3084
        %v3086 = vpop.f32.mrf.mxu0
        %v3087 = vadd.f32 %v2998, %v3086
        %3088 = vmatmul.bf16.gmra.mxu0 %v2730
        %v3089 = vpop.f32.mrf.mxu0
        %v3090 = vadd.f32 %v3001, %v3089
        %v3091 = vpop.f32.mrf.mxu0
        %v3092 = vadd.f32 %v3003, %v3091
        %3093 = vmatmul.bf16.gmra.mxu0 %v2733
        %v3094 = vpop.f32.mrf.mxu0
        %v3095 = vadd.f32 %v3006, %v3094
        %v3096 = vpop.f32.mrf.mxu0
        %v3097 = vadd.f32 %v3008, %v3096
        %3098 = vmatmul.bf16.gmra.mxu0 %v2736
        %v3099 = vpop.f32.mrf.mxu0
        %v3100 = vadd.f32 %v3011, %v3099
        %v3101 = vpop.f32.mrf.mxu0
        %v3102 = vadd.f32 %v3013, %v3101
        %3103 = vmatmul.bf16.gmra.mxu0 %v2739
        %v3104 = vpop.f32.mrf.mxu0
        %v3105 = vadd.f32 %v3016, %v3104
        %v3106 = vpop.f32.mrf.mxu0
        %v3107 = vadd.f32 %v3018, %v3106
        %3108 = vmatmul.bf16.gmra.mxu0 %v2742
        %v3109 = vpop.f32.mrf.mxu0
        %v3110 = vadd.f32 %v3021, %v3109
        %v3111 = vpop.f32.mrf.mxu0
        %v3112 = vadd.f32 %v3023, %v3111
        %3113 = vdwg.mxu0
        %3114 = vmatpush.bf16.msra.mxu0 0
        %3115 = vmatpush.bf16.msra.mxu0 0
        %3116 = vmatpush.bf16.msra.mxu0 0
        %3117 = vmatpush.bf16.msra.mxu0 0
        %3118 = vmatpush.bf16.msra.mxu0 0
        %3119 = vmatpush.bf16.msra.mxu0 0
        %3120 = vmatpush.bf16.msra.mxu0 %v2869
        %3121 = vmatpush.bf16.msra.mxu0 %v2868
        %3122 = vmatmul.bf16.gmra.mxu0 %v2889
        %v3123 = vpop.f32.mrf.mxu0
        %v3124 = vadd.f32 %v3035, %v3123
        %v3125 = vpop.f32.mrf.mxu0
        %v3126 = vadd.f32 %v3037, %v3125
        %3127 = vmatmul.bf16.gmra.mxu0 %v2892
        %v3128 = vpop.f32.mrf.mxu0
        %v3129 = vadd.f32 %v3040, %v3128
        %v3130 = vpop.f32.mrf.mxu0
        %v3131 = vadd.f32 %v3042, %v3130
        %3132 = vmatmul.bf16.gmra.mxu0 %v2895
        %v3133 = vpop.f32.mrf.mxu0
        %v3134 = vadd.f32 %v3045, %v3133
        %v3135 = vpop.f32.mrf.mxu0
        %v3136 = vadd.f32 %v3047, %v3135
        %3137 = vmatmul.bf16.gmra.mxu0 %v2898
        %v3138 = vpop.f32.mrf.mxu0
        %v3139 = vadd.f32 %v3050, %v3138
        %v3140 = vpop.f32.mrf.mxu0
        %v3141 = vadd.f32 %v3052, %v3140
        %3142 = vmatmul.bf16.gmra.mxu0 %v2901
        %v3143 = vpop.f32.mrf.mxu0
        %v3144 = vadd.f32 %v3055, %v3143
        %v3145 = vpop.f32.mrf.mxu0
        %v3146 = vadd.f32 %v3057, %v3145
        %3147 = vmatmul.bf16.gmra.mxu0 %v2904
        %v3148 = vpop.f32.mrf.mxu0
        %v3149 = vadd.f32 %v3060, %v3148
        %v3150 = vpop.f32.mrf.mxu0
        %v3151 = vadd.f32 %v3062, %v3150
        %3152 = vmatmul.bf16.gmra.mxu0 %v2907
        %v3153 = vpop.f32.mrf.mxu0
        %v3154 = vadd.f32 %v3065, %v3153
        %v3155 = vpop.f32.mrf.mxu0
        %v3156 = vadd.f32 %v3067, %v3155
        %3157 = vmatmul.bf16.gmra.mxu0 %v2910
        %v3158 = vpop.f32.mrf.mxu0
        %v3159 = vadd.f32 %v3070, %v3158
        %v3160 = vpop.f32.mrf.mxu0
        %v3161 = vadd.f32 %v3072, %v3160
        %3162 = vmatmul.bf16.gmra.mxu0 %v2913
        %v3163 = vpop.f32.mrf.mxu0
        %v3164 = vadd.f32 %v3075, %v3163
        %v3165 = vpop.f32.mrf.mxu0
        %v3166 = vadd.f32 %v3077, %v3165
        %3167 = vmatmul.bf16.gmra.mxu0 %v2916
        %v3168 = vpop.f32.mrf.mxu0
        %v3169 = vadd.f32 %v3080, %v3168
        %v3170 = vpop.f32.mrf.mxu0
        %v3171 = vadd.f32 %v3082, %v3170
        %3172 = vmatmul.bf16.gmra.mxu0 %v2919
        %v3173 = vpop.f32.mrf.mxu0
        %v3174 = vadd.f32 %v3085, %v3173
        %v3175 = vpop.f32.mrf.mxu0
        %v3176 = vadd.f32 %v3087, %v3175
        %3177 = vmatmul.bf16.gmra.mxu0 %v2922
        %v3178 = vpop.f32.mrf.mxu0
        %v3179 = vadd.f32 %v3090, %v3178
        %v3180 = vpop.f32.mrf.mxu0
        %v3181 = vadd.f32 %v3092, %v3180
        %3182 = vmatmul.bf16.gmra.mxu0 %v2925
        %v3183 = vpop.f32.mrf.mxu0
        %v3184 = vadd.f32 %v3095, %v3183
        %v3185 = vpop.f32.mrf.mxu0
        %v3186 = vadd.f32 %v3097, %v3185
        %3187 = vmatmul.bf16.gmra.mxu0 %v2928
        %v3188 = vpop.f32.mrf.mxu0
        %v3189 = vadd.f32 %v3100, %v3188
        %v3190 = vpop.f32.mrf.mxu0
        %v3191 = vadd.f32 %v3102, %v3190
        %3192 = vmatmul.bf16.gmra.mxu0 %v2931
        %v3193 = vpop.f32.mrf.mxu0
        %v3194 = vadd.f32 %v3105, %v3193
        %v3195 = vpop.f32.mrf.mxu0
        %v3196 = vadd.f32 %v3107, %v3195
        %3197 = vmatmul.bf16.gmra.mxu0 %v2934
        %v3198 = vpop.f32.mrf.mxu0
        %v3199 = vadd.f32 %v3110, %v3198
        %v3200 = vpop.f32.mrf.mxu0
        %v3201 = vadd.f32 %v3112, %v3200
        %3202 = vdwg.mxu0
        %v3203 = vsel %vm757, %v3124, 0.0
        %v3204 = vsel %vm757, %v3126, 0.0
        %v3205 = vadd.f32 %v3203, %v3204
        %v3206 = vsel %vm757, %v3129, 0.0
        %v3207 = vadd.f32 %v3205, %v3206
        %v3208 = vsel %vm757, %v3131, 0.0
        %v3209 = vadd.f32 %v3207, %v3208
        %v3210 = vsel %vm757, %v3134, 0.0
        %v3211 = vadd.f32 %v3209, %v3210
        %v3212 = vsel %vm757, %v3136, 0.0
        %v3213 = vadd.f32 %v3211, %v3212
        %v3214 = vsel %vm757, %v3139, 0.0
        %v3215 = vadd.f32 %v3213, %v3214
        %v3216 = vsel %vm757, %v3141, 0.0
        %v3217 = vadd.f32 %v3215, %v3216
        %v3218 = vsel %vm757, %v3144, 0.0
        %v3219 = vadd.f32 %v3217, %v3218
        %v3220 = vsel %vm757, %v3146, 0.0
        %v3221 = vadd.f32 %v3219, %v3220
        %v3222 = vsel %vm757, %v3149, 0.0
        %v3223 = vadd.f32 %v3221, %v3222
        %v3224 = vsel %vm757, %v3151, 0.0
        %v3225 = vadd.f32 %v3223, %v3224
        %v3226 = vsel %vm757, %v3154, 0.0
        %v3227 = vadd.f32 %v3225, %v3226
        %v3228 = vsel %vm757, %v3156, 0.0
        %v3229 = vadd.f32 %v3227, %v3228
        %v3230 = vsel %vm757, %v3159, 0.0
        %v3231 = vadd.f32 %v3229, %v3230
        %v3232 = vsel %vm757, %v3161, 0.0
        %v3233 = vadd.f32 %v3231, %v3232
        %v3234 = vsel %vm757, %v3164, 0.0
        %v3235 = vadd.f32 %v3233, %v3234
        %v3236 = vsel %vm757, %v3166, 0.0
        %v3237 = vadd.f32 %v3235, %v3236
        %v3238 = vsel %vm757, %v3169, 0.0
        %v3239 = vadd.f32 %v3237, %v3238
        %v3240 = vsel %vm757, %v3171, 0.0
        %v3241 = vadd.f32 %v3239, %v3240
        %v3242 = vsel %vm757, %v3174, 0.0
        %v3243 = vadd.f32 %v3241, %v3242
        %v3244 = vsel %vm757, %v3176, 0.0
        %v3245 = vadd.f32 %v3243, %v3244
        %v3246 = vsel %vm757, %v3179, 0.0
        %v3247 = vadd.f32 %v3245, %v3246
        %v3248 = vsel %vm757, %v3181, 0.0
        %v3249 = vadd.f32 %v3247, %v3248
        %v3250 = vsel %vm757, %v3184, 0.0
        %v3251 = vadd.f32 %v3249, %v3250
        %v3252 = vsel %vm757, %v3186, 0.0
        %v3253 = vadd.f32 %v3251, %v3252
        %v3254 = vsel %vm757, %v3189, 0.0
        %v3255 = vadd.f32 %v3253, %v3254
        %v3256 = vsel %vm757, %v3191, 0.0
        %v3257 = vadd.f32 %v3255, %v3256
        %v3258 = vsel %vm757, %v3194, 0.0
        %v3259 = vadd.f32 %v3257, %v3258
        %v3260 = vsel %vm757, %v3196, 0.0
        %v3261 = vadd.f32 %v3259, %v3260
        %v3262 = vsel %vm757, %v3199, 0.0
        %v3263 = vadd.f32 %v3261, %v3262
        %v3264 = vsel %vm757, %v3201, 0.0
        %v3265 = vadd.f32 %v3263, %v3264
        %v3266 = vrot.slane %v3265, 4
        %v3267 = vadd.f32 %v3265, %v3266
        %v3268 = vrot.slane %v3267, 2
        %v3269 = vadd.f32 %v3267, %v3268
        %v3270 = vrot.slane %v3269, 1
        %v3271 = vadd.f32 %v3269, %v3270
        %v3272 = vmul.f32 %v3271, %v833
        %v3273 = vsub.f32 %v3124, %v3272
        %v3274 = vsub.f32 %v3126, %v3272
        %v3275 = vsub.f32 %v3129, %v3272
        %v3276 = vsub.f32 %v3131, %v3272
        %v3277 = vsub.f32 %v3134, %v3272
        %v3278 = vsub.f32 %v3136, %v3272
        %v3279 = vsub.f32 %v3139, %v3272
        %v3280 = vsub.f32 %v3141, %v3272
        %v3281 = vsub.f32 %v3144, %v3272
        %v3282 = vsub.f32 %v3146, %v3272
        %v3283 = vsub.f32 %v3149, %v3272
        %v3284 = vsub.f32 %v3151, %v3272
        %v3285 = vsub.f32 %v3154, %v3272
        %v3286 = vsub.f32 %v3156, %v3272
        %v3287 = vsub.f32 %v3159, %v3272
        %v3288 = vsub.f32 %v3161, %v3272
        %v3289 = vsub.f32 %v3164, %v3272
        %v3290 = vsub.f32 %v3166, %v3272
        %v3291 = vsub.f32 %v3169, %v3272
        %v3292 = vsub.f32 %v3171, %v3272
        %v3293 = vsub.f32 %v3174, %v3272
        %v3294 = vsub.f32 %v3176, %v3272
        %v3295 = vsub.f32 %v3179, %v3272
        %v3296 = vsub.f32 %v3181, %v3272
        %v3297 = vsub.f32 %v3184, %v3272
        %v3298 = vsub.f32 %v3186, %v3272
        %v3299 = vsub.f32 %v3189, %v3272
        %v3300 = vsub.f32 %v3191, %v3272
        %v3301 = vsub.f32 %v3194, %v3272
        %v3302 = vsub.f32 %v3196, %v3272
        %v3303 = vsub.f32 %v3199, %v3272
        %v3304 = vsub.f32 %v3201, %v3272
        %v3305 = vmul.f32 %v3273, %v3273
        %v3306 = vmul.f32 %v3274, %v3274
        %v3307 = vmul.f32 %v3275, %v3275
        %v3308 = vmul.f32 %v3276, %v3276
        %v3309 = vmul.f32 %v3277, %v3277
        %v3310 = vmul.f32 %v3278, %v3278
        %v3311 = vmul.f32 %v3279, %v3279
        %v3312 = vmul.f32 %v3280, %v3280
        %v3313 = vmul.f32 %v3281, %v3281
        %v3314 = vmul.f32 %v3282, %v3282
        %v3315 = vmul.f32 %v3283, %v3283
        %v3316 = vmul.f32 %v3284, %v3284
        %v3317 = vmul.f32 %v3285, %v3285
        %v3318 = vmul.f32 %v3286, %v3286
        %v3319 = vmul.f32 %v3287, %v3287
        %v3320 = vmul.f32 %v3288, %v3288
        %v3321 = vmul.f32 %v3289, %v3289
        %v3322 = vmul.f32 %v3290, %v3290
        %v3323 = vmul.f32 %v3291, %v3291
        %v3324 = vmul.f32 %v3292, %v3292
        %v3325 = vmul.f32 %v3293, %v3293
        %v3326 = vmul.f32 %v3294, %v3294
        %v3327 = vmul.f32 %v3295, %v3295
        %v3328 = vmul.f32 %v3296, %v3296
        %v3329 = vmul.f32 %v3297, %v3297
        %v3330 = vmul.f32 %v3298, %v3298
        %v3331 = vmul.f32 %v3299, %v3299
        %v3332 = vmul.f32 %v3300, %v3300
        %v3333 = vmul.f32 %v3301, %v3301
        %v3334 = vmul.f32 %v3302, %v3302
        %v3335 = vmul.f32 %v3303, %v3303
        %v3336 = vmul.f32 %v3304, %v3304
        %v3337 = vsel %vm757, %v3305, 0.0
        %v3338 = vsel %vm757, %v3306, 0.0
        %v3339 = vadd.f32 %v3337, %v3338
        %v3340 = vsel %vm757, %v3307, 0.0
        %v3341 = vadd.f32 %v3339, %v3340
        %v3342 = vsel %vm757, %v3308, 0.0
        %v3343 = vadd.f32 %v3341, %v3342
        %v3344 = vsel %vm757, %v3309, 0.0
        %v3345 = vadd.f32 %v3343, %v3344
        %v3346 = vsel %vm757, %v3310, 0.0
        %v3347 = vadd.f32 %v3345, %v3346
        %v3348 = vsel %vm757, %v3311, 0.0
        %v3349 = vadd.f32 %v3347, %v3348
        %v3350 = vsel %vm757, %v3312, 0.0
        %v3351 = vadd.f32 %v3349, %v3350
        %v3352 = vsel %vm757, %v3313, 0.0
        %v3353 = vadd.f32 %v3351, %v3352
        %v3354 = vsel %vm757, %v3314, 0.0
        %v3355 = vadd.f32 %v3353, %v3354
        %v3356 = vsel %vm757, %v3315, 0.0
        %v3357 = vadd.f32 %v3355, %v3356
        %v3358 = vsel %vm757, %v3316, 0.0
        %v3359 = vadd.f32 %v3357, %v3358
        %v3360 = vsel %vm757, %v3317, 0.0
        %v3361 = vadd.f32 %v3359, %v3360
        %v3362 = vsel %vm757, %v3318, 0.0
        %v3363 = vadd.f32 %v3361, %v3362
        %v3364 = vsel %vm757, %v3319, 0.0
        %v3365 = vadd.f32 %v3363, %v3364
        %v3366 = vsel %vm757, %v3320, 0.0
        %v3367 = vadd.f32 %v3365, %v3366
        %v3368 = vsel %vm757, %v3321, 0.0
        %v3369 = vadd.f32 %v3367, %v3368
        %v3370 = vsel %vm757, %v3322, 0.0
        %v3371 = vadd.f32 %v3369, %v3370
        %v3372 = vsel %vm757, %v3323, 0.0
        %v3373 = vadd.f32 %v3371, %v3372
        %v3374 = vsel %vm757, %v3324, 0.0
        %v3375 = vadd.f32 %v3373, %v3374
        %v3376 = vsel %vm757, %v3325, 0.0
        %v3377 = vadd.f32 %v3375, %v3376
        %v3378 = vsel %vm757, %v3326, 0.0
        %v3379 = vadd.f32 %v3377, %v3378
        %v3380 = vsel %vm757, %v3327, 0.0
        %v3381 = vadd.f32 %v3379, %v3380
        %v3382 = vsel %vm757, %v3328, 0.0
        %v3383 = vadd.f32 %v3381, %v3382
        %v3384 = vsel %vm757, %v3329, 0.0
        %v3385 = vadd.f32 %v3383, %v3384
        %v3386 = vsel %vm757, %v3330, 0.0
        %v3387 = vadd.f32 %v3385, %v3386
        %v3388 = vsel %vm757, %v3331, 0.0
        %v3389 = vadd.f32 %v3387, %v3388
        %v3390 = vsel %vm757, %v3332, 0.0
        %v3391 = vadd.f32 %v3389, %v3390
        %v3392 = vsel %vm757, %v3333, 0.0
        %v3393 = vadd.f32 %v3391, %v3392
        %v3394 = vsel %vm757, %v3334, 0.0
        %v3395 = vadd.f32 %v3393, %v3394
        %v3396 = vsel %vm757, %v3335, 0.0
        %v3397 = vadd.f32 %v3395, %v3396
        %v3398 = vsel %vm757, %v3336, 0.0
        %v3399 = vadd.f32 %v3397, %v3398
        %v3400 = vrot.slane %v3399, 4
        %v3401 = vadd.f32 %v3399, %v3400
        %v3402 = vrot.slane %v3401, 2
        %v3403 = vadd.f32 %v3401, %v3402
        %v3404 = vrot.slane %v3403, 1
        %v3405 = vadd.f32 %v3403, %v3404
        %v3406 = vmul.f32 %v3405, %v833
        %v3407 = vadd.f32 %v3406, 1e-05
        %v3408 = vrsqrt.pop %v3407
        %v3409 = vmul.f32 %v3408, %v3407
        %v3410 = vmul.f32 %v3409, %v3408
        %v3411 = vmul.f32 0.5, %v3410
        %v3412 = vsub.f32 1.5, %v3411
        %v3413 = vmul.f32 %v3408, %v3412
        %vm3414 = vweird.f32 %v3407
        %vm3415 = vweird.f32 %v3408
        %vm3416 = vmor %vm3414, %vm3415
        %v3417 = vsel %vm3416, %v3408, %v3413
        %v3418 = vmul.f32 %v3273, %v3417
        %v3419 = vmul.f32 %v3274, %v3417
        %v3420 = vmul.f32 %v3275, %v3417
        %v3421 = vmul.f32 %v3276, %v3417
        %v3422 = vmul.f32 %v3277, %v3417
        %v3423 = vmul.f32 %v3278, %v3417
        %v3424 = vmul.f32 %v3279, %v3417
        %v3425 = vmul.f32 %v3280, %v3417
        %v3426 = vmul.f32 %v3281, %v3417
        %v3427 = vmul.f32 %v3282, %v3417
        %v3428 = vmul.f32 %v3283, %v3417
        %v3429 = vmul.f32 %v3284, %v3417
        %v3430 = vmul.f32 %v3285, %v3417
        %v3431 = vmul.f32 %v3286, %v3417
        %v3432 = vmul.f32 %v3287, %v3417
        %v3433 = vmul.f32 %v3288, %v3417
        %v3434 = vmul.f32 %v3289, %v3417
        %v3435 = vmul.f32 %v3290, %v3417
        %v3436 = vmul.f32 %v3291, %v3417
        %v3437 = vmul.f32 %v3292, %v3417
        %v3438 = vmul.f32 %v3293, %v3417
        %v3439 = vmul.f32 %v3294, %v3417
        %v3440 = vmul.f32 %v3295, %v3417
        %v3441 = vmul.f32 %v3296, %v3417
        %v3442 = vmul.f32 %v3297, %v3417
        %v3443 = vmul.f32 %v3298, %v3417
        %v3444 = vmul.f32 %v3299, %v3417
        %v3445 = vmul.f32 %v3300, %v3417
        %v3446 = vmul.f32 %v3301, %v3417
        %v3447 = vmul.f32 %v3302, %v3417
        %v3448 = vmul.f32 %v3303, %v3417
        %v3449 = vmul.f32 %v3304, %v3417
        %v3450 = vld [vmem:[%s481] sm:$0x1]
        %v3452 = vperm.slane %v3450, 0
        %v3454 = vadd.f32 %v3418, %v3452
        %v3455 = vadd.f32 %v3419, %v3452
        %v3456 = vadd.f32 %v3420, %v3452
        %v3457 = vadd.f32 %v3421, %v3452
        %v3458 = vadd.f32 %v3422, %v3452
        %v3459 = vadd.f32 %v3423, %v3452
        %v3460 = vadd.f32 %v3424, %v3452
        %v3461 = vadd.f32 %v3425, %v3452
        %v3462 = vadd.f32 %v3426, %v3452
        %v3463 = vadd.f32 %v3427, %v3452
        %v3464 = vadd.f32 %v3428, %v3452
        %v3465 = vadd.f32 %v3429, %v3452
        %v3466 = vadd.f32 %v3430, %v3452
        %v3467 = vadd.f32 %v3431, %v3452
        %v3468 = vadd.f32 %v3432, %v3452
        %v3469 = vadd.f32 %v3433, %v3452
        %v3470 = vadd.f32 %v3434, %v3452
        %v3471 = vadd.f32 %v3435, %v3452
        %v3472 = vadd.f32 %v3436, %v3452
        %v3473 = vadd.f32 %v3437, %v3452
        %v3474 = vadd.f32 %v3438, %v3452
        %v3475 = vadd.f32 %v3439, %v3452
        %v3476 = vadd.f32 %v3440, %v3452
        %v3477 = vadd.f32 %v3441, %v3452
        %v3478 = vadd.f32 %v3442, %v3452
        %v3479 = vadd.f32 %v3443, %v3452
        %v3480 = vadd.f32 %v3444, %v3452
        %v3481 = vadd.f32 %v3445, %v3452
        %v3482 = vadd.f32 %v3446, %v3452
        %v3483 = vadd.f32 %v3447, %v3452
        %v3484 = vadd.f32 %v3448, %v3452
        %v3485 = vadd.f32 %v3449, %v3452
        %v3486 = vld [vmem:[%s6] sm:$0x1]
        %v3488 = vperm.slane %v3486, 0
        %v3490 = vmul.f32 %v3454, %v3488
        %v3491 = vmul.f32 %v3455, %v3488
        %v3492 = vmul.f32 %v3456, %v3488
        %v3493 = vmul.f32 %v3457, %v3488
        %v3494 = vmul.f32 %v3458, %v3488
        %v3495 = vmul.f32 %v3459, %v3488
        %v3496 = vmul.f32 %v3460, %v3488
        %v3497 = vmul.f32 %v3461, %v3488
        %v3498 = vmul.f32 %v3462, %v3488
        %v3499 = vmul.f32 %v3463, %v3488
        %v3500 = vmul.f32 %v3464, %v3488
        %v3501 = vmul.f32 %v3465, %v3488
        %v3502 = vmul.f32 %v3466, %v3488
        %v3503 = vmul.f32 %v3467, %v3488
        %v3504 = vmul.f32 %v3468, %v3488
        %v3505 = vmul.f32 %v3469, %v3488
        %v3506 = vmul.f32 %v3470, %v3488
        %v3507 = vmul.f32 %v3471, %v3488
        %v3508 = vmul.f32 %v3472, %v3488
        %v3509 = vmul.f32 %v3473, %v3488
        %v3510 = vmul.f32 %v3474, %v3488
        %v3511 = vmul.f32 %v3475, %v3488
        %v3512 = vmul.f32 %v3476, %v3488
        %v3513 = vmul.f32 %v3477, %v3488
        %v3514 = vmul.f32 %v3478, %v3488
        %v3515 = vmul.f32 %v3479, %v3488
        %v3516 = vmul.f32 %v3480, %v3488
        %v3517 = vmul.f32 %v3481, %v3488
        %v3518 = vmul.f32 %v3482, %v3488
        %v3519 = vmul.f32 %v3483, %v3488
        %v3520 = vmul.f32 %v3484, %v3488
        %v3521 = vmul.f32 %v3485, %v3488
        %v3522 = vld [vmem:[%s7] sm:$0x1]
        %v3524 = vperm.slane %v3522, 0
        %v3526 = vadd.f32 %v3490, %v3524
        %v3527 = vadd.f32 %v3491, %v3524
        %v3528 = vadd.f32 %v3492, %v3524
        %v3529 = vadd.f32 %v3493, %v3524
        %v3530 = vadd.f32 %v3494, %v3524
        %v3531 = vadd.f32 %v3495, %v3524
        %v3532 = vadd.f32 %v3496, %v3524
        %v3533 = vadd.f32 %v3497, %v3524
        %v3534 = vadd.f32 %v3498, %v3524
        %v3535 = vadd.f32 %v3499, %v3524
        %v3536 = vadd.f32 %v3500, %v3524
        %v3537 = vadd.f32 %v3501, %v3524
        %v3538 = vadd.f32 %v3502, %v3524
        %v3539 = vadd.f32 %v3503, %v3524
        %v3540 = vadd.f32 %v3504, %v3524
        %v3541 = vadd.f32 %v3505, %v3524
        %v3542 = vadd.f32 %v3506, %v3524
        %v3543 = vadd.f32 %v3507, %v3524
        %v3544 = vadd.f32 %v3508, %v3524
        %v3545 = vadd.f32 %v3509, %v3524
        %v3546 = vadd.f32 %v3510, %v3524
        %v3547 = vadd.f32 %v3511, %v3524
        %v3548 = vadd.f32 %v3512, %v3524
        %v3549 = vadd.f32 %v3513, %v3524
        %v3550 = vadd.f32 %v3514, %v3524
        %v3551 = vadd.f32 %v3515, %v3524
        %v3552 = vadd.f32 %v3516, %v3524
        %v3553 = vadd.f32 %v3517, %v3524
        %v3554 = vadd.f32 %v3518, %v3524
        %v3555 = vadd.f32 %v3519, %v3524
        %v3556 = vadd.f32 %v3520, %v3524
        %v3557 = vadd.f32 %v3521, %v3524
        %v3558 = vmax.f32 %v3526, 0.0
        %v3559 = vmax.f32 %v3527, 0.0
        %v3560 = vmax.f32 %v3528, 0.0
        %v3561 = vmax.f32 %v3529, 0.0
        %v3562 = vmax.f32 %v3530, 0.0
        %v3563 = vmax.f32 %v3531, 0.0
        %v3564 = vmax.f32 %v3532, 0.0
        %v3565 = vmax.f32 %v3533, 0.0
        %v3566 = vmax.f32 %v3534, 0.0
        %v3567 = vmax.f32 %v3535, 0.0
        %v3568 = vmax.f32 %v3536, 0.0
        %v3569 = vmax.f32 %v3537, 0.0
        %v3570 = vmax.f32 %v3538, 0.0
        %v3571 = vmax.f32 %v3539, 0.0
        %v3572 = vmax.f32 %v3540, 0.0
        %v3573 = vmax.f32 %v3541, 0.0
        %v3574 = vmax.f32 %v3542, 0.0
        %v3575 = vmax.f32 %v3543, 0.0
        %v3576 = vmax.f32 %v3544, 0.0
        %v3577 = vmax.f32 %v3545, 0.0
        %v3578 = vmax.f32 %v3546, 0.0
        %v3579 = vmax.f32 %v3547, 0.0
        %v3580 = vmax.f32 %v3548, 0.0
        %v3581 = vmax.f32 %v3549, 0.0
        %v3582 = vmax.f32 %v3550, 0.0
        %v3583 = vmax.f32 %v3551, 0.0
        %v3584 = vmax.f32 %v3552, 0.0
        %v3585 = vmax.f32 %v3553, 0.0
        %v3586 = vmax.f32 %v3554, 0.0
        %v3587 = vmax.f32 %v3555, 0.0
        %v3588 = vmax.f32 %v3556, 0.0
        %v3589 = vmax.f32 %v3557, 0.0
        %v3590 = vld [vmem:[%s11] sm:$0xff]
        %v3591 = vld [vmem:[%s11 + $0x8] sm:$0xff]
        %v3592 = vld [vmem:[%s11 + $0x10] sm:$0xff]
        %v3593 = vld [vmem:[%s11 + $0x18] sm:$0xff]
        %v3594 = vld [vmem:[%s11 + $0x20] sm:$0xff]
        %v3595 = vld [vmem:[%s11 + $0x28] sm:$0xff]
        %v3596 = vld [vmem:[%s11 + $0x30] sm:$0xff]
        %v3597 = vld [vmem:[%s11 + $0x38] sm:$0xff]
        %v3598 = vpack.c.bf16 %v3559, %v3558
        %v3599 = vpack.c.bf16 %v3561, %v3560
        %v3600 = vpack.c.bf16 %v3563, %v3562
        %v3601 = vpack.c.bf16 %v3565, %v3564
        %v3602 = vpack.c.bf16 %v3567, %v3566
        %v3603 = vpack.c.bf16 %v3569, %v3568
        %v3604 = vpack.c.bf16 %v3571, %v3570
        %v3605 = vpack.c.bf16 %v3573, %v3572
        %v3606 = vpack.c.bf16 %v3575, %v3574
        %v3607 = vpack.c.bf16 %v3577, %v3576
        %v3608 = vpack.c.bf16 %v3579, %v3578
        %v3609 = vpack.c.bf16 %v3581, %v3580
        %v3610 = vpack.c.bf16 %v3583, %v3582
        %v3611 = vpack.c.bf16 %v3585, %v3584
        %v3612 = vpack.c.bf16 %v3587, %v3586
        %v3613 = vpack.c.bf16 %v3589, %v3588
        %v3622 = vunpack.c.l.b16 %v3590
        %v3623 = vunpack.c.h.b16 %v3590
        %v3624 = vunpack.c.l.b16 %v3591
        %v3625 = vunpack.c.h.b16 %v3591
        %v3626 = vunpack.c.l.b16 %v3592
        %v3627 = vunpack.c.h.b16 %v3592
        %v3628 = vunpack.c.l.b16 %v3593
        %v3629 = vunpack.c.h.b16 %v3593
        %v3630 = vunpack.c.l.b16 %v3594
        %v3631 = vunpack.c.h.b16 %v3594
        %v3632 = vunpack.c.l.b16 %v3595
        %v3633 = vunpack.c.h.b16 %v3595
        %v3634 = vunpack.c.l.b16 %v3596
        %v3635 = vunpack.c.h.b16 %v3596
        %v3636 = vunpack.c.l.b16 %v3597
        %v3637 = vunpack.c.h.b16 %v3597
        %v3638 = vpack.c.b16 %v3624, %v3622
        %v3639 = vpack.c.b16 %v3625, %v3623
        %v3640 = vpack.c.b16 %v3628, %v3626
        %v3641 = vpack.c.b16 %v3629, %v3627
        %v3642 = vpack.c.b16 %v3632, %v3630
        %v3643 = vpack.c.b16 %v3633, %v3631
        %v3644 = vpack.c.b16 %v3636, %v3634
        %v3645 = vpack.c.b16 %v3637, %v3635
        %3654 = vmatpush.bf16.msra.mxu0 %v3605
        %3655 = vmatpush.bf16.msra.mxu0 %v3604
        %3656 = vmatpush.bf16.msra.mxu0 %v3603
        %3657 = vmatpush.bf16.msra.mxu0 %v3602
        %3658 = vmatpush.bf16.msra.mxu0 %v3601
        %3659 = vmatpush.bf16.msra.mxu0 %v3600
        %3660 = vmatpush.bf16.msra.mxu0 %v3599
        %3661 = vmatpush.bf16.msra.mxu0 %v3598
        %3662 = vmatmul.bf16.gmra.mxu0 %v3638
        %v3663 = vpop.f32.mrf.mxu0
        %v3664 = vadd.f32 0.0, %v3663
        %v3665 = vpop.f32.mrf.mxu0
        %v3666 = vadd.f32 0.0, %v3665
        %3667 = vmatmul.bf16.gmra.mxu0 %v3640
        %v3668 = vpop.f32.mrf.mxu0
        %v3669 = vadd.f32 0.0, %v3668
        %v3670 = vpop.f32.mrf.mxu0
        %v3671 = vadd.f32 0.0, %v3670
        %3672 = vmatmul.bf16.gmra.mxu0 %v3642
        %v3673 = vpop.f32.mrf.mxu0
        %v3674 = vadd.f32 0.0, %v3673
        %v3675 = vpop.f32.mrf.mxu0
        %v3676 = vadd.f32 0.0, %v3675
        %3677 = vmatmul.bf16.gmra.mxu0 %v3644
        %v3678 = vpop.f32.mrf.mxu0
        %v3679 = vadd.f32 0.0, %v3678
        %v3680 = vpop.f32.mrf.mxu0
        %v3681 = vadd.f32 0.0, %v3680
        %3682 = vdwg.mxu0
        %3683 = vmatpush.bf16.msra.mxu0 %v3613
        %3684 = vmatpush.bf16.msra.mxu0 %v3612
        %3685 = vmatpush.bf16.msra.mxu0 %v3611
        %3686 = vmatpush.bf16.msra.mxu0 %v3610
        %3687 = vmatpush.bf16.msra.mxu0 %v3609
        %3688 = vmatpush.bf16.msra.mxu0 %v3608
        %3689 = vmatpush.bf16.msra.mxu0 %v3607
        %3690 = vmatpush.bf16.msra.mxu0 %v3606
        %3691 = vmatmul.bf16.gmra.mxu0 %v3639
        %v3692 = vpop.f32.mrf.mxu0
        %v3693 = vadd.f32 %v3664, %v3692
        %v3694 = vpop.f32.mrf.mxu0
        %v3695 = vadd.f32 %v3666, %v3694
        %3696 = vmatmul.bf16.gmra.mxu0 %v3641
        %v3697 = vpop.f32.mrf.mxu0
        %v3698 = vadd.f32 %v3669, %v3697
        %v3699 = vpop.f32.mrf.mxu0
        %v3700 = vadd.f32 %v3671, %v3699
        %3701 = vmatmul.bf16.gmra.mxu0 %v3643
        %v3702 = vpop.f32.mrf.mxu0
        %v3703 = vadd.f32 %v3674, %v3702
        %v3704 = vpop.f32.mrf.mxu0
        %v3705 = vadd.f32 %v3676, %v3704
        %3706 = vmatmul.bf16.gmra.mxu0 %v3645
        %v3707 = vpop.f32.mrf.mxu0
        %v3708 = vadd.f32 %v3679, %v3707
        %v3709 = vpop.f32.mrf.mxu0
        %v3710 = vadd.f32 %v3681, %v3709
        %3711 = vdwg.mxu0
        %v3712 = vpack.c.bf16 %v3695, %v3693
        %v3713 = vpack.c.bf16 %v3700, %v3698
        %v3714 = vpack.c.bf16 %v3705, %v3703
        %v3715 = vpack.c.bf16 %v3710, %v3708
        %v3716 = vld [vmem:[%s8] sm:$0xf]
        %v3717 = vld [vmem:[%s8 + $0x4] sm:$0xf]
        %v3718 = vld [vmem:[%s8 + $0x8] sm:$0xf]
        %v3719 = vld [vmem:[%s8 + $0xc] sm:$0xf]
        %v3720 = vld [vmem:[%s9] sm:$0x1]
        %v3722 = vperm.slane %v3720, 0
        %v3728 = vunpack.c.l.b16 %v3716
        %v3729 = vunpack.c.l.b16 %v3717
        %v3730 = vunpack.c.l.b16 %v3718
        %v3731 = vunpack.c.l.b16 %v3719
        %v3732 = vpack.c.b16 %v3729, %v3728
        %v3733 = vpack.c.b16 %v3731, %v3730
        %v3737 = vsel %vm757, %v3712, 0
        %v3740 = vsel %vm757, %v3713, 0
        %v3743 = vsel %vm757, %v3714, 0
        %v3746 = vsel %vm757, %v3715, 0
        %3748 = vmatpush.bf16.msra.mxu0 0
        %3749 = vmatpush.bf16.msra.mxu0 0
        %3750 = vmatpush.bf16.msra.mxu0 0
        %3751 = vmatpush.bf16.msra.mxu0 0
        %3752 = vmatpush.bf16.msra.mxu0 0
        %3753 = vmatpush.bf16.msra.mxu0 0
        %3754 = vmatpush.bf16.msra.mxu0 %v3733
        %3755 = vmatpush.bf16.msra.mxu0 %v3732
        %3756 = vmatmul.bf16.gmra.mxu0 %v3737
        %v3757 = vpop.f32.mrf.mxu0
        %v3758 = vadd.f32 %v3722, %v3757
        %v3759 = vpop.f32.mrf.mxu0
        %v3760 = vadd.f32 %v3722, %v3759
        %3761 = vmatmul.bf16.gmra.mxu0 %v3740
        %v3762 = vpop.f32.mrf.mxu0
        %v3763 = vadd.f32 %v3722, %v3762
        %v3764 = vpop.f32.mrf.mxu0
        %v3765 = vadd.f32 %v3722, %v3764
        %3766 = vmatmul.bf16.gmra.mxu0 %v3743
        %v3767 = vpop.f32.mrf.mxu0
        %v3768 = vadd.f32 %v3722, %v3767
        %v3769 = vpop.f32.mrf.mxu0
        %v3770 = vadd.f32 %v3722, %v3769
        %3771 = vmatmul.bf16.gmra.mxu0 %v3746
        %v3772 = vpop.f32.mrf.mxu0
        %v3773 = vadd.f32 %v3722, %v3772
        %v3774 = vpop.f32.mrf.mxu0
        %v3775 = vadd.f32 %v3722, %v3774
        %3776 = vdwg.mxu0
        %v3777 = vld [vmem:[%s486] sm:$0xff]
        %v3778 = vld [vmem:[%s486 + $0x8] sm:$0xf]
        %v3779 = vld [vmem:[%s486 + $0xc] sm:$0xff]
        %v3780 = vld [vmem:[%s486 + $0x14] sm:$0xf]
        %v3781 = vld [vmem:[%s486 + $0x18] sm:$0xff]
        %v3782 = vld [vmem:[%s486 + $0x20] sm:$0xf]
        %v3783 = vld [vmem:[%s486 + $0x24] sm:$0xff]
        %v3784 = vld [vmem:[%s486 + $0x2c] sm:$0xf]
        %v3785 = vld [vmem:[%s486 + $0x30] sm:$0xff]
        %v3786 = vld [vmem:[%s486 + $0x38] sm:$0xf]
        %v3787 = vld [vmem:[%s486 + $0x3c] sm:$0xff]
        %v3788 = vld [vmem:[%s486 + $0x44] sm:$0xf]
        %v3789 = vld [vmem:[%s486 + $0x48] sm:$0xff]
        %v3790 = vld [vmem:[%s486 + $0x50] sm:$0xf]
        %v3791 = vld [vmem:[%s486 + $0x54] sm:$0xff]
        %v3792 = vld [vmem:[%s486 + $0x5c] sm:$0xf]
        %v3793 = vld [vmem:[%s10] sm:$0xf]
        %v3794 = vld [vmem:[%s10 + $0x4] sm:$0xf]
        %v3795 = vld [vmem:[%s10 + $0x8] sm:$0xf]
        %v3796 = vld [vmem:[%s10 + $0xc] sm:$0xf]
        %v3797 = vld [vmem:[%s10 + $0x10] sm:$0xf]
        %v3798 = vld [vmem:[%s10 + $0x14] sm:$0xf]
        %v3799 = vld [vmem:[%s10 + $0x18] sm:$0xf]
        %v3800 = vld [vmem:[%s10 + $0x1c] sm:$0xf]
        %v3801 = vld [vmem:[%s10 + $0x20] sm:$0xf]
        %v3802 = vld [vmem:[%s10 + $0x24] sm:$0xf]
        %v3803 = vld [vmem:[%s10 + $0x28] sm:$0xf]
        %v3804 = vld [vmem:[%s10 + $0x2c] sm:$0xf]
        %v3805 = vld [vmem:[%s10 + $0x30] sm:$0xf]
        %v3806 = vld [vmem:[%s10 + $0x34] sm:$0xf]
        %v3807 = vld [vmem:[%s10 + $0x38] sm:$0xf]
        %v3808 = vld [vmem:[%s10 + $0x3c] sm:$0xf]
        %v3809 = vld [vmem:[%s10 + $0x40] sm:$0xf]
        %v3810 = vld [vmem:[%s10 + $0x44] sm:$0xf]
        %v3811 = vld [vmem:[%s10 + $0x48] sm:$0xf]
        %v3812 = vld [vmem:[%s10 + $0x4c] sm:$0xf]
        %v3813 = vld [vmem:[%s10 + $0x50] sm:$0xf]
        %v3814 = vld [vmem:[%s10 + $0x54] sm:$0xf]
        %v3815 = vld [vmem:[%s10 + $0x58] sm:$0xf]
        %v3816 = vld [vmem:[%s10 + $0x5c] sm:$0xf]
        %v3817 = vld [vmem:[%s10 + $0x60] sm:$0xf]
        %v3818 = vld [vmem:[%s10 + $0x64] sm:$0xf]
        %v3819 = vld [vmem:[%s10 + $0x68] sm:$0xf]
        %v3820 = vld [vmem:[%s10 + $0x6c] sm:$0xf]
        %v3821 = vld [vmem:[%s10 + $0x70] sm:$0xf]
        %v3822 = vld [vmem:[%s10 + $0x74] sm:$0xf]
        %v3823 = vld [vmem:[%s10 + $0x78] sm:$0xf]
        %v3824 = vld [vmem:[%s10 + $0x7c] sm:$0xf]
        %v3825 = vld [vmem:[%s10 + $0x80] sm:$0xf]
        %v3826 = vld [vmem:[%s10 + $0x84] sm:$0xf]
        %v3827 = vld [vmem:[%s10 + $0x88] sm:$0xf]
        %v3828 = vld [vmem:[%s10 + $0x8c] sm:$0xf]
        %v3845 = vunpack.c.l.b16 %v3777
        %v3846 = vunpack.c.h.b16 %v3777
        %v3847 = vunpack.c.l.b16 %v3778
        %v3848 = vunpack.c.l.b16 %v3779
        %v3849 = vunpack.c.h.b16 %v3779
        %v3850 = vunpack.c.l.b16 %v3780
        %v3851 = vunpack.c.l.b16 %v3781
        %v3852 = vunpack.c.h.b16 %v3781
        %v3853 = vunpack.c.l.b16 %v3782
        %v3854 = vunpack.c.l.b16 %v3783
        %v3855 = vunpack.c.h.b16 %v3783
        %v3856 = vunpack.c.l.b16 %v3784
        %v3857 = vunpack.c.l.b16 %v3785
        %v3858 = vunpack.c.h.b16 %v3785
        %v3859 = vunpack.c.l.b16 %v3786
        %v3860 = vunpack.c.l.b16 %v3787
        %v3861 = vunpack.c.h.b16 %v3787
        %v3862 = vunpack.c.l.b16 %v3788
        %v3863 = vunpack.c.l.b16 %v3789
        %v3864 = vunpack.c.h.b16 %v3789
        %v3865 = vunpack.c.l.b16 %v3790
        %v3866 = vunpack.c.l.b16 %v3791
        %v3867 = vunpack.c.h.b16 %v3791
        %v3868 = vunpack.c.l.b16 %v3792
        %v3869 = vpack.c.b16 %v3848, %v3845
        %v3870 = vpack.c.b16 %v3849, %v3846
        %v3871 = vpack.c.b16 %v3850, %v3847
        %v3872 = vpack.c.b16 %v3854, %v3851
        %v3873 = vpack.c.b16 %v3855, %v3852
        %v3874 = vpack.c.b16 %v3856, %v3853
        %v3875 = vpack.c.b16 %v3860, %v3857
        %v3876 = vpack.c.b16 %v3861, %v3858
        %v3877 = vpack.c.b16 %v3862, %v3859
        %v3878 = vpack.c.b16 %v3866, %v3863
        %v3879 = vpack.c.b16 %v3867, %v3864
        %v3880 = vpack.c.b16 %v3868, %v3865
        %v3925 = vunpack.c.l.b16 %v3793
        %v3926 = vunpack.c.l.b16 %v3794
        %v3927 = vunpack.c.l.b16 %v3795
        %v3928 = vunpack.c.l.b16 %v3796
        %v3929 = vunpack.c.l.b16 %v3797
        %v3930 = vunpack.c.l.b16 %v3798
        %v3931 = vunpack.c.l.b16 %v3799
        %v3932 = vunpack.c.l.b16 %v3800
        %v3933 = vunpack.c.l.b16 %v3801
        %v3934 = vunpack.c.l.b16 %v3802
        %v3935 = vunpack.c.l.b16 %v3803
        %v3936 = vunpack.c.l.b16 %v3804
        %v3937 = vunpack.c.l.b16 %v3805
        %v3938 = vunpack.c.l.b16 %v3806
        %v3939 = vunpack.c.l.b16 %v3807
        %v3940 = vunpack.c.l.b16 %v3808
        %v3941 = vunpack.c.l.b16 %v3809
        %v3942 = vunpack.c.l.b16 %v3810
        %v3943 = vunpack.c.l.b16 %v3811
        %v3944 = vunpack.c.l.b16 %v3812
        %v3945 = vunpack.c.l.b16 %v3813
        %v3946 = vunpack.c.l.b16 %v3814
        %v3947 = vunpack.c.l.b16 %v3815
        %v3948 = vunpack.c.l.b16 %v3816
        %v3949 = vunpack.c.l.b16 %v3817
        %v3950 = vunpack.c.l.b16 %v3818
        %v3951 = vunpack.c.l.b16 %v3819
        %v3952 = vunpack.c.l.b16 %v3820
        %v3953 = vunpack.c.l.b16 %v3821
        %v3954 = vunpack.c.l.b16 %v3822
        %v3955 = vunpack.c.l.b16 %v3823
        %v3956 = vunpack.c.l.b16 %v3824
        %v3957 = vunpack.c.l.b16 %v3825
        %v3958 = vunpack.c.l.b16 %v3826
        %v3959 = vunpack.c.l.b16 %v3827
        %v3960 = vunpack.c.l.b16 %v3828
        %v3961 = vpack.c.b16 %v3926, %v3925
        %v3962 = vpack.c.b16 %v3928, %v3927
        %v3963 = vpack.c.b16 %v3930, %v3929
        %v3964 = vpack.c.b16 %v3932, %v3931
        %v3965 = vpack.c.b16 %v3934, %v3933
        %v3966 = vpack.c.b16 %v3936, %v3935
        %v3967 = vpack.c.b16 %v3938, %v3937
        %v3968 = vpack.c.b16 %v3940, %v3939
        %v3969 = vpack.c.b16 %v3942, %v3941
        %v3970 = vpack.c.b16 %v3944, %v3943
        %v3971 = vpack.c.b16 %v3946, %v3945
        %v3972 = vpack.c.b16 %v3948, %v3947
        %v3973 = vpack.c.b16 %v3950, %v3949
        %v3974 = vpack.c.b16 %v3952, %v3951
        %v3975 = vpack.c.b16 %v3954, %v3953
        %v3976 = vpack.c.b16 %v3956, %v3955
        %v3977 = vpack.c.b16 %v3958, %v3957
        %v3978 = vpack.c.b16 %v3960, %v3959
        %v3998 = vsel %vm757, %v3871, 0
        %v4001 = vsel %vm757, %v3874, 0
        %v4004 = vsel %vm757, %v3877, 0
        %v4007 = vsel %vm757, %v3880, 0
        %4009 = vmatpush.bf16.msra.mxu0 %v3968
        %4010 = vmatpush.bf16.msra.mxu0 %v3967
        %4011 = vmatpush.bf16.msra.mxu0 %v3966
        %4012 = vmatpush.bf16.msra.mxu0 %v3965
        %4013 = vmatpush.bf16.msra.mxu0 %v3964
        %4014 = vmatpush.bf16.msra.mxu0 %v3963
        %4015 = vmatpush.bf16.msra.mxu0 %v3962
        %4016 = vmatpush.bf16.msra.mxu0 %v3961
        %4017 = vmatmul.bf16.gmra.mxu0 %v3869
        %v4018 = vpop.f32.mrf.mxu0
        %v4019 = vadd.f32 0.0, %v4018
        %v4020 = vpop.f32.mrf.mxu0
        %v4021 = vadd.f32 0.0, %v4020
        %4022 = vmatmul.bf16.gmra.mxu0 %v3872
        %v4023 = vpop.f32.mrf.mxu0
        %v4024 = vadd.f32 0.0, %v4023
        %v4025 = vpop.f32.mrf.mxu0
        %v4026 = vadd.f32 0.0, %v4025
        %4027 = vmatmul.bf16.gmra.mxu0 %v3875
        %v4028 = vpop.f32.mrf.mxu0
        %v4029 = vadd.f32 0.0, %v4028
        %v4030 = vpop.f32.mrf.mxu0
        %v4031 = vadd.f32 0.0, %v4030
        %4032 = vmatmul.bf16.gmra.mxu0 %v3878
        %v4033 = vpop.f32.mrf.mxu0
        %v4034 = vadd.f32 0.0, %v4033
        %v4035 = vpop.f32.mrf.mxu0
        %v4036 = vadd.f32 0.0, %v4035
        %4037 = vdwg.mxu0
        %4038 = vmatpush.bf16.msra.mxu0 %v3976
        %4039 = vmatpush.bf16.msra.mxu0 %v3975
        %4040 = vmatpush.bf16.msra.mxu0 %v3974
        %4041 = vmatpush.bf16.msra.mxu0 %v3973
        %4042 = vmatpush.bf16.msra.mxu0 %v3972
        %4043 = vmatpush.bf16.msra.mxu0 %v3971
        %4044 = vmatpush.bf16.msra.mxu0 %v3970
        %4045 = vmatpush.bf16.msra.mxu0 %v3969
        %4046 = vmatmul.bf16.gmra.mxu0 %v3870
        %v4047 = vpop.f32.mrf.mxu0
        %v4048 = vadd.f32 %v4019, %v4047
        %v4049 = vpop.f32.mrf.mxu0
        %v4050 = vadd.f32 %v4021, %v4049
        %4051 = vmatmul.bf16.gmra.mxu0 %v3873
        %v4052 = vpop.f32.mrf.mxu0
        %v4053 = vadd.f32 %v4024, %v4052
        %v4054 = vpop.f32.mrf.mxu0
        %v4055 = vadd.f32 %v4026, %v4054
        %4056 = vmatmul.bf16.gmra.mxu0 %v3876
        %v4057 = vpop.f32.mrf.mxu0
        %v4058 = vadd.f32 %v4029, %v4057
        %v4059 = vpop.f32.mrf.mxu0
        %v4060 = vadd.f32 %v4031, %v4059
        %4061 = vmatmul.bf16.gmra.mxu0 %v3879
        %v4062 = vpop.f32.mrf.mxu0
        %v4063 = vadd.f32 %v4034, %v4062
        %v4064 = vpop.f32.mrf.mxu0
        %v4065 = vadd.f32 %v4036, %v4064
        %4066 = vdwg.mxu0
        %4067 = vmatpush.bf16.msra.mxu0 0
        %4068 = vmatpush.bf16.msra.mxu0 0
        %4069 = vmatpush.bf16.msra.mxu0 0
        %4070 = vmatpush.bf16.msra.mxu0 0
        %4071 = vmatpush.bf16.msra.mxu0 0
        %4072 = vmatpush.bf16.msra.mxu0 0
        %4073 = vmatpush.bf16.msra.mxu0 %v3978
        %4074 = vmatpush.bf16.msra.mxu0 %v3977
        %4075 = vmatmul.bf16.gmra.mxu0 %v3998
        %v4076 = vpop.f32.mrf.mxu0
        %v4077 = vadd.f32 %v4048, %v4076
        %v4078 = vpop.f32.mrf.mxu0
        %v4079 = vadd.f32 %v4050, %v4078
        %4080 = vmatmul.bf16.gmra.mxu0 %v4001
        %v4081 = vpop.f32.mrf.mxu0
        %v4082 = vadd.f32 %v4053, %v4081
        %v4083 = vpop.f32.mrf.mxu0
        %v4084 = vadd.f32 %v4055, %v4083
        %4085 = vmatmul.bf16.gmra.mxu0 %v4004
        %v4086 = vpop.f32.mrf.mxu0
        %v4087 = vadd.f32 %v4058, %v4086
        %v4088 = vpop.f32.mrf.mxu0
        %v4089 = vadd.f32 %v4060, %v4088
        %4090 = vmatmul.bf16.gmra.mxu0 %v4007
        %v4091 = vpop.f32.mrf.mxu0
        %v4092 = vadd.f32 %v4063, %v4091
        %v4093 = vpop.f32.mrf.mxu0
        %v4094 = vadd.f32 %v4065, %v4093
        %4095 = vdwg.mxu0
        %v4096 = vadd.f32 %v3758, %v4077
        %v4097 = vadd.f32 %v3760, %v4079
        %v4098 = vadd.f32 %v3763, %v4082
        %v4099 = vadd.f32 %v3765, %v4084
        %v4100 = vadd.f32 %v3768, %v4087
        %v4101 = vadd.f32 %v3770, %v4089
        %v4102 = vadd.f32 %v3773, %v4092
        %v4103 = vadd.f32 %v3775, %v4094
        %4104 = vst [vmem:[%s470] sm:$0xff] %v4096
        %4105 = vst [vmem:[%s470 + $0x8] sm:$0xff] %v4097
        %4106 = vst [vmem:[%s470 + $0x10] sm:$0xff] %v4098
        %4107 = vst [vmem:[%s470 + $0x18] sm:$0xff] %v4099
        %4108 = vst [vmem:[%s470 + $0x20] sm:$0xff] %v4100
        %4109 = vst [vmem:[%s470 + $0x28] sm:$0xff] %v4101
        %4110 = vst [vmem:[%s470 + $0x30] sm:$0xff] %v4102
        %4111 = vst [vmem:[%s470 + $0x38] sm:$0xff] %v4103
        %s4112 = sand.u32 %s328, 1
        %s4113 = scalar_lea.sflag [#allocation3], %s4112
        %s4114 = sand.u32 %s328, 1
        %s4115 = smul.addr %s4114, 64
        %s4116 = scalar_lea.vmem [#allocation2], %s4115
        // Predicated region
        $region73: #{tpu_custom_call.1} parent=71 // pred_check
          %p4117 = pneg %p338
        $region74: #{tpu_custom_call.1} parent=71 // pred_check_branch
          %4119 = sbr.rel (%p4117) target = $region76
        $region75: #{tpu_custom_call.1} parent=71 // pred_region
          %4121 = vsyncadd %s4113, 0
          %s4122 = smul.addr %s27, 8
          %s4123 = smul.addr %s4122, 8
          %s4124 = scalar_lea.hbm %s13, %s4123
          %s4125 = sshll.u32 %s4116, 4
          %s4126 = int_to_ptr.vmem [resolvable:$true] %s4125
          %s4127 = sshll.u32 %s4124, 4
          %s4128 = int_to_ptr.hbm [resolvable:$true] %s4127
          %4133 = dma.vmem_to_hbm [thread:$0]  %s4126, 1024, %s4128, %s4113, 128, 128, 8
        $region76: #{tpu_custom_call.1} parent=71 // pred_fallthru
          _
      $region72: #{tpu_custom_call.1} parent=5 // pred_fallthru
        _
      %p4134 = scmp.le.s32.totalorder 2, %s22
      // Predicated region
      $region77: #{tpu_custom_call.1} parent=5 // pred_check
        %p4135 = pneg %p4134
      $region78: #{tpu_custom_call.1} parent=5 // pred_check_branch
        %4137 = sbr.rel (%p4135) target = $region80
      $region79: #{tpu_custom_call.1} parent=5 // pred_region
        %s4138 = ssub.s32 %s22, 2
        // Predicated region
        $region81: #{tpu_custom_call.1} parent=79 // pred_check
          %p4139 = pneg %p344
        $region82: #{tpu_custom_call.1} parent=79 // pred_check_branch
          %4141 = sbr.rel (%p4139) target = $region84
        $region83: #{tpu_custom_call.1} parent=79 // pred_region
          %s4142 = sand.u32 %s329, 1
          %s4143 = scalar_lea.sflag [#allocation3], %s4142
          %s4144 = sand.u32 %s329, 1
          %s4145 = smul.addr %s4144, 64
          %s4146 = scalar_lea.vmem [#allocation2], %s4145
          %4148 = dma.done %s4143, 1024
        $region84: #{tpu_custom_call.1} parent=79 // pred_fallthru
          _
      $region80: #{tpu_custom_call.1} parent=5 // pred_fallthru
        _
    $region6: #{tpu_custom_call.1} parent=1 // loop_footer
      %s26 = sadd.s32 1, %s22
    $region7: #{tpu_custom_call.1} parent=1 // loop_footer_branch
      %21 = sbr.rel target = $region3
    $region8: #{tpu_custom_call.1} parent=1 // loop_exit
      _
    %4149 = vsyncpa [#allocation3], 1
    %s4150 = scalar_lea.sflag [#allocation3], 1
    %4151 = vsyncpa %s4150, 1

</llo_original>
